<compile_context>
chip_gen: v6e
topology: v6e:2x2x1
jax: 0.10.0
libtpu: 0.0.40
codegen_flags: <defaults>
</compile_context>

<pallas_src>
import jax
import jax.numpy as jnp
from jax.experimental import pallas as pl
from jax.experimental.pallas import tpu as pltpu

N_HIDDEN = 8
HID = 10
B_INIT = -0.2


def net_kernel(x_ref, w0_ref, wh_ref, bh_ref, wp_ref, bp_ref, out_ref, res_ref):
    """One batch tile of the MLP forward, batch on the 128-lane axis.

    x_ref  : (1, TILE) f32                  input (transposed, lane-dense)
    w0_ref : (HID, 1) f32                   first-layer weight (out, in)   [whole array, VMEM]
    wh_ref : (N_HIDDEN-1, HID, HID) f32     remaining hidden weights       [whole array, VMEM]
    bh_ref : (N_HIDDEN, HID, 1) f32         hidden biases                  [whole array, VMEM]
    wp_ref : (HID, 1) f32                   predict weight (in, out=1)     [whole array, VMEM]
    bp_ref : (1, 1) f32                     predict bias                   [SMEM scalar]
    out_ref: (1, TILE) f32                  prediction (transposed)
    res_ref: (2, N_HIDDEN, HID, TILE)       res[0]=pre-activations, res[1]=tanh activations,
                                            stored in bf16 (single merged writeback stream)
    """
    x = x_ref[...]                                     # (1, TILE)

    # Layer 0: input width 1 -> VPU broadcast multiply-add, no MXU round trip.
    pre = w0_ref[...] * x + bh_ref[0]                  # (HID,1)*(1,TILE)+(HID,1) -> (HID,TILE)
    res_ref[0, 0] = pre.astype(res_ref.dtype)
    h = jnp.tanh(pre)                                  # compute stays f32
    res_ref[1, 0] = h.astype(res_ref.dtype)

    # Hidden layers 1..N_HIDDEN-1: (HID,HID) @ (HID,TILE) on the MXU (lane-dense N).
    for i in range(1, N_HIDDEN):
        pre = (jnp.dot(wh_ref[i - 1], h, preferred_element_type=jnp.float32)
               + bh_ref[i])
        res_ref[0, i] = pre.astype(res_ref.dtype)
        h = jnp.tanh(pre)
        res_ref[1, i] = h.astype(res_ref.dtype)

    # Predict layer: output width 1 -> elementwise multiply + sublane reduce, no MXU.
    out_ref[...] = jnp.sum(wp_ref[...] * h, axis=0, keepdims=True) + bp_ref[0, 0]


def _dimension_semantics_candidates():
    """Prefer a genuine cross-TensorCore split (v7x megacore); fall back to 'parallel'."""
    cands = []
    core_parallel = getattr(pltpu, "CORE_PARALLEL", None)
    if core_parallel is not None:
        cands.append((core_parallel,))
    cands.append(("parallel",))
    return cands


def net_forward(x, params, *, tile=1024, store_dtype=jnp.bfloat16):
    """Run the MLP forward as a single pallas_call, batch dim on the lane axis."""
    w0, wh, bh, wp, bp = params
    n = x.shape[0]
    assert tile % 128 == 0, "tile must be a multiple of 128 (lane dimension)"
    n_pad = pl.cdiv(n, tile) * tile
    grid = (n_pad // tile,)

    # (n, 1) -> lane-dense (1, n_pad); the zero-padded tail columns produce
    # tanh(bias-only) garbage that is sliced off below before returning.
    x_t = jnp.pad(x.T, ((0, 0), (0, n_pad - n)))

    # Constants: whole-array VMEM residency (no per-step blocking / double-buffering).
    vmem_spec = pl.BlockSpec(memory_space=pltpu.MemorySpace.VMEM)
    smem_spec = pl.BlockSpec(memory_space=pltpu.MemorySpace.SMEM)

    last_err = None
    for dim_sem in _dimension_semantics_candidates():
        try:
            call = pl.pallas_call(
                net_kernel,
                out_shape=(
                    jax.ShapeDtypeStruct((1, n_pad), jnp.float32),
                    jax.ShapeDtypeStruct((2, N_HIDDEN, HID, n_pad), store_dtype),
                ),
                grid_spec=pltpu.PrefetchScalarGridSpec(
                    num_scalar_prefetch=0,
                    grid=grid,
                    in_specs=[
                        pl.BlockSpec((1, tile), lambda i: (0, i)),   # x (lane-dense tile)
                        vmem_spec,                                   # w0
                        vmem_spec,                                   # wh
                        vmem_spec,                                   # bh
                        vmem_spec,                                   # wp
                        smem_spec,                                   # bp scalar
                    ],
                    out_specs=[
                        pl.BlockSpec((1, tile), lambda i: (0, i)),                      # out
                        pl.BlockSpec((2, N_HIDDEN, HID, tile), lambda i: (0, 0, 0, i)),  # merged pres/acts
                    ],
                ),
                compiler_params=pltpu.CompilerParams(
                    dimension_semantics=dim_sem),
            )
            out_t, res = call(x_t, w0, wh, bh, wp, bp)
            out_t, res = jax.block_until_ready((out_t, res))
            break
        except Exception as e:  # fall back to plain "parallel" if CORE_PARALLEL unsupported
            last_err = e
    else:
        raise last_err

    # Layout conversion back to PyTorch's (batch, features) convention happens in XLA
    # outside the kernel, keeping the kernel's stores / output DMA lane-dense. The
    # monitoring tensors are up-cast back to f32 here (carrying bf16 precision).
    out = out_t[:, :n].T                                         # (n, 1), full f32
    pres = res[0]                                                # (N_HIDDEN, HID, n_pad) bf16
    acts = res[1]
    layer_input = [x] + [acts[i, :, :n].T.astype(jnp.float32) for i in range(N_HIDDEN)]
    pre_activation = [x] + [pres[i, :, :n].T.astype(jnp.float32) for i in range(N_HIDDEN)]
    return out, layer_input, pre_activation


def init_params(key):
    """Deterministic init matching the module: weights ~ N(0, 0.1), bias = -0.2.

    Weights are stored (out, in) so the transposed kernel computes pre = W @ h;
    the predict weight is stored (in, 1) for the elementwise-reduce epilogue.
    """
    k0, k1, k2 = jax.random.split(key, 3)
    w0 = 0.1 * jax.random.normal(k0, (HID, 1), dtype=jnp.float32)
    wh = 0.1 * jax.random.normal(k1, (N_HIDDEN - 1, HID, HID), dtype=jnp.float32)
    bh = jnp.full((N_HIDDEN, HID, 1), B_INIT, dtype=jnp.float32)
    wp = 0.1 * jax.random.normal(k2, (HID, 1), dtype=jnp.float32)
    bp = jnp.full((1, 1), B_INIT, dtype=jnp.float32)
    return w0, wh, bh, wp, bp


def net_forward_ref(x, params):
    """Plain-JAX reference of the same forward (batch-major), for correctness."""
    w0, wh, bh, wp, bp = params
    pre_activation = [x]
    layer_input = [x]
    h = x                                              # (n, 1)
    for i in range(N_HIDDEN):
        w = w0 if i == 0 else wh[i - 1]                # (HID, in)
        pre = h @ w.T + bh[i].T                        # (n, HID)
        pre_activation.append(pre)
        h = jnp.tanh(pre)
        layer_input.append(h)
    out = h @ wp + bp                                  # (n, 1)
    return out, layer_input, pre_activation


if __name__ == "__main__":
    key = jax.random.PRNGKey(0)

    # Match the original script's data: 2000 samples of linspace(-7, 10) as (N, 1).
    N = 2000
    x = jnp.linspace(-7.0, 10.0, N, dtype=jnp.float32).reshape(N, 1)
    params = init_params(key)

    out, layer_input, pre_activation = net_forward(x, params, tile=1024)
    out = jax.block_until_ready(out)

    # Sanity check against the plain-JAX reference.
    ref_out, ref_li, ref_pa = net_forward_ref(x, params)
    assert out.shape == (N, 1)
    # Prediction is computed fully in f32 inside the kernel -> tight tolerance.
    assert jnp.allclose(out, ref_out, atol=1e-5, rtol=1e-5)
    # The residual lists are stored in bf16 (HBM-writeback-bound kernel) -> relaxed tol.
    for a, b in zip(layer_input, ref_li):
        assert a.shape == b.shape
        assert jnp.allclose(a, b, atol=5e-2, rtol=2e-2)
    for a, b in zip(pre_activation, ref_pa):
        assert a.shape == b.shape
        assert jnp.allclose(a, b, atol=5e-2, rtol=2e-2)

    # TODO(synk): BatchNorm1d branches (do_bn=True) not implemented; module default is do_bn=False.
    print("KERNEL_OK")
</pallas_src>

<mosaic_0001>
module attributes {stable_mosaic.version = 11 : i64} {
  func.func @net_kernel(%arg0: i32, %arg1: memref<1x1024xf32, #tpu.memory_space<vmem>>, %arg2: memref<10x1xf32, #tpu.memory_space<vmem>>, %arg3: memref<7x10x10xf32, #tpu.memory_space<vmem>>, %arg4: memref<8x10x1xf32, #tpu.memory_space<vmem>>, %arg5: memref<10x1xf32, #tpu.memory_space<vmem>>, %arg6: memref<1x1xf32, #tpu.memory_space<smem>>, %arg7: memref<1x1024xf32, #tpu.memory_space<vmem>>, %arg8: memref<2x8x10x1024xbf16, #tpu.memory_space<vmem>>) attributes {dimension_semantics = [#tpu.dimension_semantics<core_parallel>], iteration_bounds = array<i64: 2>, scalar_prefetch = 0 : i64, scratch_operands = 0 : i64, tpu.core_type = #tpu.core_type<tc>, window_params = [{transform_indices = @transform_0, window_bounds = array<i64: 1, 1024>}, {pipeline_mode = #tpu.pipeline_mode<synchronous>, transform_indices = @transform_1, window_bounds = array<i64: 10, 1>}, {pipeline_mode = #tpu.pipeline_mode<synchronous>, transform_indices = @transform_2, window_bounds = array<i64: 7, 10, 10>}, {pipeline_mode = #tpu.pipeline_mode<synchronous>, transform_indices = @transform_3, window_bounds = array<i64: 8, 10, 1>}, {pipeline_mode = #tpu.pipeline_mode<synchronous>, transform_indices = @transform_4, window_bounds = array<i64: 10, 1>}, {transform_indices = @transform_5, window_bounds = array<i64: 1, 1>}, {transform_indices = @transform_6, window_bounds = array<i64: 1, 1024>}, {transform_indices = @transform_7, window_bounds = array<i64: 2, 8, 10, 1024>}]} {
    %c0 = arith.constant 0 : index
    %c0_0 = arith.constant 0 : index
    %0 = vector.load %arg1[%c0, %c0_0] : memref<1x1024xf32, #tpu.memory_space<vmem>>, vector<1x1024xf32>
    %c0_1 = arith.constant 0 : index
    %c0_2 = arith.constant 0 : index
    %1 = vector.load %arg2[%c0_1, %c0_2] : memref<10x1xf32, #tpu.memory_space<vmem>>, vector<10x1xf32>
    %2 = vector.broadcast %1 : vector<10x1xf32> to vector<10x1024xf32>
    %3 = vector.broadcast %0 : vector<1x1024xf32> to vector<10x1024xf32>
    %4 = arith.mulf %2, %3 : vector<10x1024xf32>
    %c0_3 = arith.constant 0 : index
    %c0_4 = arith.constant 0 : index
    %c0_5 = arith.constant 0 : index
    %5 = vector.load %arg4[%c0_3, %c0_4, %c0_5] : memref<8x10x1xf32, #tpu.memory_space<vmem>>, vector<1x10x1xf32>
    %6 = vector.shape_cast %5 : vector<1x10x1xf32> to vector<10x1xf32>
    %7 = vector.broadcast %6 : vector<10x1xf32> to vector<10x1024xf32>
    %8 = arith.addf %4, %7 : vector<10x1024xf32>
    %9 = arith.truncf %8 : vector<10x1024xf32> to vector<10x1024xbf16>
    %c0_6 = arith.constant 0 : index
    %c0_7 = arith.constant 0 : index
    %c0_8 = arith.constant 0 : index
    %c0_9 = arith.constant 0 : index
    %10 = vector.load %arg8[%c0_6, %c0_7, %c0_8, %c0_9] : memref<2x8x10x1024xbf16, #tpu.memory_space<vmem>>, vector<1x1x10x1024xbf16>
    %11 = vector.shape_cast %10 : vector<1x1x10x1024xbf16> to vector<10x1024xbf16>
    %12 = vector.shape_cast %9 : vector<10x1024xbf16> to vector<1x1x10x1024xbf16>
    tpu.vector_store %arg8[%c0_6, %c0_7, %c0_8, %c0_9], %12 {strides = array<i32>} : memref<2x8x10x1024xbf16, #tpu.memory_space<vmem>>, vector<1x1x10x1024xbf16>,
    %13 = math.tanh %8 : vector<10x1024xf32>
    %14 = arith.truncf %13 : vector<10x1024xf32> to vector<10x1024xbf16>
    %c1 = arith.constant 1 : index
    %c0_10 = arith.constant 0 : index
    %c0_11 = arith.constant 0 : index
    %c0_12 = arith.constant 0 : index
    %15 = vector.load %arg8[%c1, %c0_10, %c0_11, %c0_12] : memref<2x8x10x1024xbf16, #tpu.memory_space<vmem>>, vector<1x1x10x1024xbf16>
    %16 = vector.shape_cast %15 : vector<1x1x10x1024xbf16> to vector<10x1024xbf16>
    %17 = vector.shape_cast %14 : vector<10x1024xbf16> to vector<1x1x10x1024xbf16>
    tpu.vector_store %arg8[%c1, %c0_10, %c0_11, %c0_12], %17 {strides = array<i32>} : memref<2x8x10x1024xbf16, #tpu.memory_space<vmem>>, vector<1x1x10x1024xbf16>,
    %c0_13 = arith.constant 0 : index
    %c0_14 = arith.constant 0 : index
    %c0_15 = arith.constant 0 : index
    %18 = vector.load %arg3[%c0_13, %c0_14, %c0_15] : memref<7x10x10xf32, #tpu.memory_space<vmem>>, vector<1x10x10xf32>
    %19 = vector.shape_cast %18 : vector<1x10x10xf32> to vector<10x10xf32>
    %cst = arith.constant dense<0.000000e+00> : vector<10x1024xf32>
    %20 = tpu.matmul %19, %13, %cst {dimension_numbers = #tpu.dot_dimension_numbers<[1], [0], [0], [1], [0, 0, 1, 1], [], []>} : vector<10x10xf32>, vector<10x1024xf32>, vector<10x1024xf32> -> vector<10x1024xf32>
    %c1_16 = arith.constant 1 : index
    %c0_17 = arith.constant 0 : index
    %c0_18 = arith.constant 0 : index
    %21 = vector.load %arg4[%c1_16, %c0_17, %c0_18] : memref<8x10x1xf32, #tpu.memory_space<vmem>>, vector<1x10x1xf32>
    %22 = vector.shape_cast %21 : vector<1x10x1xf32> to vector<10x1xf32>
    %23 = vector.broadcast %22 : vector<10x1xf32> to vector<10x1024xf32>
    %24 = arith.addf %20, %23 : vector<10x1024xf32>
    %25 = arith.truncf %24 : vector<10x1024xf32> to vector<10x1024xbf16>
    %c0_19 = arith.constant 0 : index
    %c1_20 = arith.constant 1 : index
    %c0_21 = arith.constant 0 : index
    %c0_22 = arith.constant 0 : index
    %26 = vector.load %arg8[%c0_19, %c1_20, %c0_21, %c0_22] : memref<2x8x10x1024xbf16, #tpu.memory_space<vmem>>, vector<1x1x10x1024xbf16>
    %27 = vector.shape_cast %26 : vector<1x1x10x1024xbf16> to vector<10x1024xbf16>
    %28 = vector.shape_cast %25 : vector<10x1024xbf16> to vector<1x1x10x1024xbf16>
    tpu.vector_store %arg8[%c0_19, %c1_20, %c0_21, %c0_22], %28 {strides = array<i32>} : memref<2x8x10x1024xbf16, #tpu.memory_space<vmem>>, vector<1x1x10x1024xbf16>,
    %29 = math.tanh %24 : vector<10x1024xf32>
    %30 = arith.truncf %29 : vector<10x1024xf32> to vector<10x1024xbf16>
    %c1_23 = arith.constant 1 : index
    %c1_24 = arith.constant 1 : index
    %c0_25 = arith.constant 0 : index
    %c0_26 = arith.constant 0 : index
    %31 = vector.load %arg8[%c1_23, %c1_24, %c0_25, %c0_26] : memref<2x8x10x1024xbf16, #tpu.memory_space<vmem>>, vector<1x1x10x1024xbf16>
    %32 = vector.shape_cast %31 : vector<1x1x10x1024xbf16> to vector<10x1024xbf16>
    %33 = vector.shape_cast %30 : vector<10x1024xbf16> to vector<1x1x10x1024xbf16>
    tpu.vector_store %arg8[%c1_23, %c1_24, %c0_25, %c0_26], %33 {strides = array<i32>} : memref<2x8x10x1024xbf16, #tpu.memory_space<vmem>>, vector<1x1x10x1024xbf16>,
    %c1_27 = arith.constant 1 : index
    %c0_28 = arith.constant 0 : index
    %c0_29 = arith.constant 0 : index
    %34 = vector.load %arg3[%c1_27, %c0_28, %c0_29] : memref<7x10x10xf32, #tpu.memory_space<vmem>>, vector<1x10x10xf32>
    %35 = vector.shape_cast %34 : vector<1x10x10xf32> to vector<10x10xf32>
    %cst_30 = arith.constant dense<0.000000e+00> : vector<10x1024xf32>
    %36 = tpu.matmul %35, %29, %cst_30 {dimension_numbers = #tpu.dot_dimension_numbers<[1], [0], [0], [1], [0, 0, 1, 1], [], []>} : vector<10x10xf32>, vector<10x1024xf32>, vector<10x1024xf32> -> vector<10x1024xf32>
    %c2 = arith.constant 2 : index
    %c0_31 = arith.constant 0 : index
    %c0_32 = arith.constant 0 : index
    %37 = vector.load %arg4[%c2, %c0_31, %c0_32] : memref<8x10x1xf32, #tpu.memory_space<vmem>>, vector<1x10x1xf32>
    %38 = vector.shape_cast %37 : vector<1x10x1xf32> to vector<10x1xf32>
    %39 = vector.broadcast %38 : vector<10x1xf32> to vector<10x1024xf32>
    %40 = arith.addf %36, %39 : vector<10x1024xf32>
    %41 = arith.truncf %40 : vector<10x1024xf32> to vector<10x1024xbf16>
    %c0_33 = arith.constant 0 : index
    %c2_34 = arith.constant 2 : index
    %c0_35 = arith.constant 0 : index
    %c0_36 = arith.constant 0 : index
    %42 = vector.load %arg8[%c0_33, %c2_34, %c0_35, %c0_36] : memref<2x8x10x1024xbf16, #tpu.memory_space<vmem>>, vector<1x1x10x1024xbf16>
    %43 = vector.shape_cast %42 : vector<1x1x10x1024xbf16> to vector<10x1024xbf16>
    %44 = vector.shape_cast %41 : vector<10x1024xbf16> to vector<1x1x10x1024xbf16>
    tpu.vector_store %arg8[%c0_33, %c2_34, %c0_35, %c0_36], %44 {strides = array<i32>} : memref<2x8x10x1024xbf16, #tpu.memory_space<vmem>>, vector<1x1x10x1024xbf16>,
    %45 = math.tanh %40 : vector<10x1024xf32>
    %46 = arith.truncf %45 : vector<10x1024xf32> to vector<10x1024xbf16>
    %c1_37 = arith.constant 1 : index
    %c2_38 = arith.constant 2 : index
    %c0_39 = arith.constant 0 : index
    %c0_40 = arith.constant 0 : index
    %47 = vector.load %arg8[%c1_37, %c2_38, %c0_39, %c0_40] : memref<2x8x10x1024xbf16, #tpu.memory_space<vmem>>, vector<1x1x10x1024xbf16>
    %48 = vector.shape_cast %47 : vector<1x1x10x1024xbf16> to vector<10x1024xbf16>
    %49 = vector.shape_cast %46 : vector<10x1024xbf16> to vector<1x1x10x1024xbf16>
    tpu.vector_store %arg8[%c1_37, %c2_38, %c0_39, %c0_40], %49 {strides = array<i32>} : memref<2x8x10x1024xbf16, #tpu.memory_space<vmem>>, vector<1x1x10x1024xbf16>,
    %c2_41 = arith.constant 2 : index
    %c0_42 = arith.constant 0 : index
    %c0_43 = arith.constant 0 : index
    %50 = vector.load %arg3[%c2_41, %c0_42, %c0_43] : memref<7x10x10xf32, #tpu.memory_space<vmem>>, vector<1x10x10xf32>
    %51 = vector.shape_cast %50 : vector<1x10x10xf32> to vector<10x10xf32>
    %cst_44 = arith.constant dense<0.000000e+00> : vector<10x1024xf32>
    %52 = tpu.matmul %51, %45, %cst_44 {dimension_numbers = #tpu.dot_dimension_numbers<[1], [0], [0], [1], [0, 0, 1, 1], [], []>} : vector<10x10xf32>, vector<10x1024xf32>, vector<10x1024xf32> -> vector<10x1024xf32>
    %c3 = arith.constant 3 : index
    %c0_45 = arith.constant 0 : index
    %c0_46 = arith.constant 0 : index
    %53 = vector.load %arg4[%c3, %c0_45, %c0_46] : memref<8x10x1xf32, #tpu.memory_space<vmem>>, vector<1x10x1xf32>
    %54 = vector.shape_cast %53 : vector<1x10x1xf32> to vector<10x1xf32>
    %55 = vector.broadcast %54 : vector<10x1xf32> to vector<10x1024xf32>
    %56 = arith.addf %52, %55 : vector<10x1024xf32>
    %57 = arith.truncf %56 : vector<10x1024xf32> to vector<10x1024xbf16>
    %c0_47 = arith.constant 0 : index
    %c3_48 = arith.constant 3 : index
    %c0_49 = arith.constant 0 : index
    %c0_50 = arith.constant 0 : index
    %58 = vector.load %arg8[%c0_47, %c3_48, %c0_49, %c0_50] : memref<2x8x10x1024xbf16, #tpu.memory_space<vmem>>, vector<1x1x10x1024xbf16>
    %59 = vector.shape_cast %58 : vector<1x1x10x1024xbf16> to vector<10x1024xbf16>
    %60 = vector.shape_cast %57 : vector<10x1024xbf16> to vector<1x1x10x1024xbf16>
    tpu.vector_store %arg8[%c0_47, %c3_48, %c0_49, %c0_50], %60 {strides = array<i32>} : memref<2x8x10x1024xbf16, #tpu.memory_space<vmem>>, vector<1x1x10x1024xbf16>,
    %61 = math.tanh %56 : vector<10x1024xf32>
    %62 = arith.truncf %61 : vector<10x1024xf32> to vector<10x1024xbf16>
    %c1_51 = arith.constant 1 : index
    %c3_52 = arith.constant 3 : index
    %c0_53 = arith.constant 0 : index
    %c0_54 = arith.constant 0 : index
    %63 = vector.load %arg8[%c1_51, %c3_52, %c0_53, %c0_54] : memref<2x8x10x1024xbf16, #tpu.memory_space<vmem>>, vector<1x1x10x1024xbf16>
    %64 = vector.shape_cast %63 : vector<1x1x10x1024xbf16> to vector<10x1024xbf16>
    %65 = vector.shape_cast %62 : vector<10x1024xbf16> to vector<1x1x10x1024xbf16>
    tpu.vector_store %arg8[%c1_51, %c3_52, %c0_53, %c0_54], %65 {strides = array<i32>} : memref<2x8x10x1024xbf16, #tpu.memory_space<vmem>>, vector<1x1x10x1024xbf16>,
    %c3_55 = arith.constant 3 : index
    %c0_56 = arith.constant 0 : index
    %c0_57 = arith.constant 0 : index
    %66 = vector.load %arg3[%c3_55, %c0_56, %c0_57] : memref<7x10x10xf32, #tpu.memory_space<vmem>>, vector<1x10x10xf32>
    %67 = vector.shape_cast %66 : vector<1x10x10xf32> to vector<10x10xf32>
    %cst_58 = arith.constant dense<0.000000e+00> : vector<10x1024xf32>
    %68 = tpu.matmul %67, %61, %cst_58 {dimension_numbers = #tpu.dot_dimension_numbers<[1], [0], [0], [1], [0, 0, 1, 1], [], []>} : vector<10x10xf32>, vector<10x1024xf32>, vector<10x1024xf32> -> vector<10x1024xf32>
    %c4 = arith.constant 4 : index
    %c0_59 = arith.constant 0 : index
    %c0_60 = arith.constant 0 : index
    %69 = vector.load %arg4[%c4, %c0_59, %c0_60] : memref<8x10x1xf32, #tpu.memory_space<vmem>>, vector<1x10x1xf32>
    %70 = vector.shape_cast %69 : vector<1x10x1xf32> to vector<10x1xf32>
    %71 = vector.broadcast %70 : vector<10x1xf32> to vector<10x1024xf32>
    %72 = arith.addf %68, %71 : vector<10x1024xf32>
    %73 = arith.truncf %72 : vector<10x1024xf32> to vector<10x1024xbf16>
    %c0_61 = arith.constant 0 : index
    %c4_62 = arith.constant 4 : index
    %c0_63 = arith.constant 0 : index
    %c0_64 = arith.constant 0 : index
    %74 = vector.load %arg8[%c0_61, %c4_62, %c0_63, %c0_64] : memref<2x8x10x1024xbf16, #tpu.memory_space<vmem>>, vector<1x1x10x1024xbf16>
    %75 = vector.shape_cast %74 : vector<1x1x10x1024xbf16> to vector<10x1024xbf16>
    %76 = vector.shape_cast %73 : vector<10x1024xbf16> to vector<1x1x10x1024xbf16>
    tpu.vector_store %arg8[%c0_61, %c4_62, %c0_63, %c0_64], %76 {strides = array<i32>} : memref<2x8x10x1024xbf16, #tpu.memory_space<vmem>>, vector<1x1x10x1024xbf16>,
    %77 = math.tanh %72 : vector<10x1024xf32>
    %78 = arith.truncf %77 : vector<10x1024xf32> to vector<10x1024xbf16>
    %c1_65 = arith.constant 1 : index
    %c4_66 = arith.constant 4 : index
    %c0_67 = arith.constant 0 : index
    %c0_68 = arith.constant 0 : index
    %79 = vector.load %arg8[%c1_65, %c4_66, %c0_67, %c0_68] : memref<2x8x10x1024xbf16, #tpu.memory_space<vmem>>, vector<1x1x10x1024xbf16>
    %80 = vector.shape_cast %79 : vector<1x1x10x1024xbf16> to vector<10x1024xbf16>
    %81 = vector.shape_cast %78 : vector<10x1024xbf16> to vector<1x1x10x1024xbf16>
    tpu.vector_store %arg8[%c1_65, %c4_66, %c0_67, %c0_68], %81 {strides = array<i32>} : memref<2x8x10x1024xbf16, #tpu.memory_space<vmem>>, vector<1x1x10x1024xbf16>,
    %c4_69 = arith.constant 4 : index
    %c0_70 = arith.constant 0 : index
    %c0_71 = arith.constant 0 : index
    %82 = vector.load %arg3[%c4_69, %c0_70, %c0_71] : memref<7x10x10xf32, #tpu.memory_space<vmem>>, vector<1x10x10xf32>
    %83 = vector.shape_cast %82 : vector<1x10x10xf32> to vector<10x10xf32>
    %cst_72 = arith.constant dense<0.000000e+00> : vector<10x1024xf32>
    %84 = tpu.matmul %83, %77, %cst_72 {dimension_numbers = #tpu.dot_dimension_numbers<[1], [0], [0], [1], [0, 0, 1, 1], [], []>} : vector<10x10xf32>, vector<10x1024xf32>, vector<10x1024xf32> -> vector<10x1024xf32>
    %c5 = arith.constant 5 : index
    %c0_73 = arith.constant 0 : index
    %c0_74 = arith.constant 0 : index
    %85 = vector.load %arg4[%c5, %c0_73, %c0_74] : memref<8x10x1xf32, #tpu.memory_space<vmem>>, vector<1x10x1xf32>
    %86 = vector.shape_cast %85 : vector<1x10x1xf32> to vector<10x1xf32>
    %87 = vector.broadcast %86 : vector<10x1xf32> to vector<10x1024xf32>
    %88 = arith.addf %84, %87 : vector<10x1024xf32>
    %89 = arith.truncf %88 : vector<10x1024xf32> to vector<10x1024xbf16>
    %c0_75 = arith.constant 0 : index
    %c5_76 = arith.constant 5 : index
    %c0_77 = arith.constant 0 : index
    %c0_78 = arith.constant 0 : index
    %90 = vector.load %arg8[%c0_75, %c5_76, %c0_77, %c0_78] : memref<2x8x10x1024xbf16, #tpu.memory_space<vmem>>, vector<1x1x10x1024xbf16>
    %91 = vector.shape_cast %90 : vector<1x1x10x1024xbf16> to vector<10x1024xbf16>
    %92 = vector.shape_cast %89 : vector<10x1024xbf16> to vector<1x1x10x1024xbf16>
    tpu.vector_store %arg8[%c0_75, %c5_76, %c0_77, %c0_78], %92 {strides = array<i32>} : memref<2x8x10x1024xbf16, #tpu.memory_space<vmem>>, vector<1x1x10x1024xbf16>,
    %93 = math.tanh %88 : vector<10x1024xf32>
    %94 = arith.truncf %93 : vector<10x1024xf32> to vector<10x1024xbf16>
    %c1_79 = arith.constant 1 : index
    %c5_80 = arith.constant 5 : index
    %c0_81 = arith.constant 0 : index
    %c0_82 = arith.constant 0 : index
    %95 = vector.load %arg8[%c1_79, %c5_80, %c0_81, %c0_82] : memref<2x8x10x1024xbf16, #tpu.memory_space<vmem>>, vector<1x1x10x1024xbf16>
    %96 = vector.shape_cast %95 : vector<1x1x10x1024xbf16> to vector<10x1024xbf16>
    %97 = vector.shape_cast %94 : vector<10x1024xbf16> to vector<1x1x10x1024xbf16>
    tpu.vector_store %arg8[%c1_79, %c5_80, %c0_81, %c0_82], %97 {strides = array<i32>} : memref<2x8x10x1024xbf16, #tpu.memory_space<vmem>>, vector<1x1x10x1024xbf16>,
    %c5_83 = arith.constant 5 : index
    %c0_84 = arith.constant 0 : index
    %c0_85 = arith.constant 0 : index
    %98 = vector.load %arg3[%c5_83, %c0_84, %c0_85] : memref<7x10x10xf32, #tpu.memory_space<vmem>>, vector<1x10x10xf32>
    %99 = vector.shape_cast %98 : vector<1x10x10xf32> to vector<10x10xf32>
    %cst_86 = arith.constant dense<0.000000e+00> : vector<10x1024xf32>
    %100 = tpu.matmul %99, %93, %cst_86 {dimension_numbers = #tpu.dot_dimension_numbers<[1], [0], [0], [1], [0, 0, 1, 1], [], []>} : vector<10x10xf32>, vector<10x1024xf32>, vector<10x1024xf32> -> vector<10x1024xf32>
    %c6 = arith.constant 6 : index
    %c0_87 = arith.constant 0 : index
    %c0_88 = arith.constant 0 : index
    %101 = vector.load %arg4[%c6, %c0_87, %c0_88] : memref<8x10x1xf32, #tpu.memory_space<vmem>>, vector<1x10x1xf32>
    %102 = vector.shape_cast %101 : vector<1x10x1xf32> to vector<10x1xf32>
    %103 = vector.broadcast %102 : vector<10x1xf32> to vector<10x1024xf32>
    %104 = arith.addf %100, %103 : vector<10x1024xf32>
    %105 = arith.truncf %104 : vector<10x1024xf32> to vector<10x1024xbf16>
    %c0_89 = arith.constant 0 : index
    %c6_90 = arith.constant 6 : index
    %c0_91 = arith.constant 0 : index
    %c0_92 = arith.constant 0 : index
    %106 = vector.load %arg8[%c0_89, %c6_90, %c0_91, %c0_92] : memref<2x8x10x1024xbf16, #tpu.memory_space<vmem>>, vector<1x1x10x1024xbf16>
    %107 = vector.shape_cast %106 : vector<1x1x10x1024xbf16> to vector<10x1024xbf16>
    %108 = vector.shape_cast %105 : vector<10x1024xbf16> to vector<1x1x10x1024xbf16>
    tpu.vector_store %arg8[%c0_89, %c6_90, %c0_91, %c0_92], %108 {strides = array<i32>} : memref<2x8x10x1024xbf16, #tpu.memory_space<vmem>>, vector<1x1x10x1024xbf16>,
    %109 = math.tanh %104 : vector<10x1024xf32>
    %110 = arith.truncf %109 : vector<10x1024xf32> to vector<10x1024xbf16>
    %c1_93 = arith.constant 1 : index
    %c6_94 = arith.constant 6 : index
    %c0_95 = arith.constant 0 : index
    %c0_96 = arith.constant 0 : index
    %111 = vector.load %arg8[%c1_93, %c6_94, %c0_95, %c0_96] : memref<2x8x10x1024xbf16, #tpu.memory_space<vmem>>, vector<1x1x10x1024xbf16>
    %112 = vector.shape_cast %111 : vector<1x1x10x1024xbf16> to vector<10x1024xbf16>
    %113 = vector.shape_cast %110 : vector<10x1024xbf16> to vector<1x1x10x1024xbf16>
    tpu.vector_store %arg8[%c1_93, %c6_94, %c0_95, %c0_96], %113 {strides = array<i32>} : memref<2x8x10x1024xbf16, #tpu.memory_space<vmem>>, vector<1x1x10x1024xbf16>,
    %c6_97 = arith.constant 6 : index
    %c0_98 = arith.constant 0 : index
    %c0_99 = arith.constant 0 : index
    %114 = vector.load %arg3[%c6_97, %c0_98, %c0_99] : memref<7x10x10xf32, #tpu.memory_space<vmem>>, vector<1x10x10xf32>
    %115 = vector.shape_cast %114 : vector<1x10x10xf32> to vector<10x10xf32>
    %cst_100 = arith.constant dense<0.000000e+00> : vector<10x1024xf32>
    %116 = tpu.matmul %115, %109, %cst_100 {dimension_numbers = #tpu.dot_dimension_numbers<[1], [0], [0], [1], [0, 0, 1, 1], [], []>} : vector<10x10xf32>, vector<10x1024xf32>, vector<10x1024xf32> -> vector<10x1024xf32>
    %c7 = arith.constant 7 : index
    %c0_101 = arith.constant 0 : index
    %c0_102 = arith.constant 0 : index
    %117 = vector.load %arg4[%c7, %c0_101, %c0_102] : memref<8x10x1xf32, #tpu.memory_space<vmem>>, vector<1x10x1xf32>
    %118 = vector.shape_cast %117 : vector<1x10x1xf32> to vector<10x1xf32>
    %119 = vector.broadcast %118 : vector<10x1xf32> to vector<10x1024xf32>
    %120 = arith.addf %116, %119 : vector<10x1024xf32>
    %121 = arith.truncf %120 : vector<10x1024xf32> to vector<10x1024xbf16>
    %c0_103 = arith.constant 0 : index
    %c7_104 = arith.constant 7 : index
    %c0_105 = arith.constant 0 : index
    %c0_106 = arith.constant 0 : index
    %122 = vector.load %arg8[%c0_103, %c7_104, %c0_105, %c0_106] : memref<2x8x10x1024xbf16, #tpu.memory_space<vmem>>, vector<1x1x10x1024xbf16>
    %123 = vector.shape_cast %122 : vector<1x1x10x1024xbf16> to vector<10x1024xbf16>
    %124 = vector.shape_cast %121 : vector<10x1024xbf16> to vector<1x1x10x1024xbf16>
    tpu.vector_store %arg8[%c0_103, %c7_104, %c0_105, %c0_106], %124 {strides = array<i32>} : memref<2x8x10x1024xbf16, #tpu.memory_space<vmem>>, vector<1x1x10x1024xbf16>,
    %125 = math.tanh %120 : vector<10x1024xf32>
    %126 = arith.truncf %125 : vector<10x1024xf32> to vector<10x1024xbf16>
    %c1_107 = arith.constant 1 : index
    %c7_108 = arith.constant 7 : index
    %c0_109 = arith.constant 0 : index
    %c0_110 = arith.constant 0 : index
    %127 = vector.load %arg8[%c1_107, %c7_108, %c0_109, %c0_110] : memref<2x8x10x1024xbf16, #tpu.memory_space<vmem>>, vector<1x1x10x1024xbf16>
    %128 = vector.shape_cast %127 : vector<1x1x10x1024xbf16> to vector<10x1024xbf16>
    %129 = vector.shape_cast %126 : vector<10x1024xbf16> to vector<1x1x10x1024xbf16>
    tpu.vector_store %arg8[%c1_107, %c7_108, %c0_109, %c0_110], %129 {strides = array<i32>} : memref<2x8x10x1024xbf16, #tpu.memory_space<vmem>>, vector<1x1x10x1024xbf16>,
    %c0_111 = arith.constant 0 : index
    %c0_112 = arith.constant 0 : index
    %130 = vector.load %arg5[%c0_111, %c0_112] : memref<10x1xf32, #tpu.memory_space<vmem>>, vector<10x1xf32>
    %131 = vector.broadcast %130 : vector<10x1xf32> to vector<10x1024xf32>
    %132 = arith.mulf %131, %125 : vector<10x1024xf32>
    %cst_113 = arith.constant dense<0.000000e+00> : vector<1024xf32>
    %133 = vector.multi_reduction <add>, %132, %cst_113 [0] : vector<10x1024xf32> to vector<1024xf32>
    %134 = vector.shape_cast %133 : vector<1024xf32> to vector<1x1024xf32>
    %c0_114 = arith.constant 0 : index
    %c0_115 = arith.constant 0 : index
    %135 = memref.load %arg6[%c0_114, %c0_115] : memref<1x1xf32, #tpu.memory_space<smem>>
    %136 = vector.broadcast %135 : f32 to vector<1x1024xf32>
    %137 = arith.addf %134, %136 : vector<1x1024xf32>
    %c0_116 = arith.constant 0 : index
    %c0_117 = arith.constant 0 : index
    %138 = vector.load %arg7[%c0_116, %c0_117] : memref<1x1024xf32, #tpu.memory_space<vmem>>, vector<1x1024xf32>
    tpu.vector_store %arg7[%c0_116, %c0_117], %137 {strides = array<i32>} : memref<1x1024xf32, #tpu.memory_space<vmem>>, vector<1x1024xf32>,
    return
  }
  func.func @transform_0(%arg0: i32) -> (i32, i32) {
    %c0_i32 = arith.constant 0 : i32
    %c0_i32_0 = arith.constant 0 : i32
    return %c0_i32, %arg0 : i32, i32
  }
  func.func @transform_1(%arg0: i32) -> (i32, i32) {
    %c0_i32 = arith.constant 0 : i32
    %c0_i32_0 = arith.constant 0 : i32
    %c0_i32_1 = arith.constant 0 : i32
    return %c0_i32, %c0_i32_0 : i32, i32
  }
  func.func @transform_2(%arg0: i32) -> (i32, i32, i32) {
    %c0_i32 = arith.constant 0 : i32
    %c0_i32_0 = arith.constant 0 : i32
    %c0_i32_1 = arith.constant 0 : i32
    %c0_i32_2 = arith.constant 0 : i32
    return %c0_i32, %c0_i32_0, %c0_i32_1 : i32, i32, i32
  }
  func.func @transform_3(%arg0: i32) -> (i32, i32, i32) {
    %c0_i32 = arith.constant 0 : i32
    %c0_i32_0 = arith.constant 0 : i32
    %c0_i32_1 = arith.constant 0 : i32
    %c0_i32_2 = arith.constant 0 : i32
    return %c0_i32, %c0_i32_0, %c0_i32_1 : i32, i32, i32
  }
  func.func @transform_4(%arg0: i32) -> (i32, i32) {
    %c0_i32 = arith.constant 0 : i32
    %c0_i32_0 = arith.constant 0 : i32
    %c0_i32_1 = arith.constant 0 : i32
    return %c0_i32, %c0_i32_0 : i32, i32
  }
  func.func @transform_5(%arg0: i32) -> (i32, i32) {
    %c0_i32 = arith.constant 0 : i32
    %c0_i32_0 = arith.constant 0 : i32
    %c0_i32_1 = arith.constant 0 : i32
    return %c0_i32, %c0_i32_0 : i32, i32
  }
  func.func @transform_6(%arg0: i32) -> (i32, i32) {
    %c0_i32 = arith.constant 0 : i32
    %c0_i32_0 = arith.constant 0 : i32
    return %c0_i32, %arg0 : i32, i32
  }
  func.func @transform_7(%arg0: i32) -> (i32, i32, i32, i32) {
    %c0_i32 = arith.constant 0 : i32
    %c0_i32_0 = arith.constant 0 : i32
    %c0_i32_1 = arith.constant 0 : i32
    %c0_i32_2 = arith.constant 0 : i32
    return %c0_i32, %c0_i32_0, %c0_i32_1, %arg0 : i32, i32, i32, i32
  }
}

module attributes {stable_mosaic.version = 11 : i64} {
  func.func @net_kernel(%arg0: i32, %arg1: memref<1x1024xf32, #tpu.memory_space<vmem>>, %arg2: memref<10x1xf32, #tpu.memory_space<vmem>>, %arg3: memref<7x10x10xf32, #tpu.memory_space<vmem>>, %arg4: memref<8x10x1xf32, #tpu.memory_space<vmem>>, %arg5: memref<10x1xf32, #tpu.memory_space<vmem>>, %arg6: memref<1x1xf32, #tpu.memory_space<smem>>, %arg7: memref<1x1024xf32, #tpu.memory_space<vmem>>, %arg8: memref<2x8x10x1024xbf16, #tpu.memory_space<vmem>>) attributes {dimension_semantics = [#tpu.dimension_semantics<parallel>], iteration_bounds = array<i64: 2>, scalar_prefetch = 0 : i64, scratch_operands = 0 : i64, tpu.core_type = #tpu.core_type<tc>, window_params = [{transform_indices = @transform_0, window_bounds = array<i64: 1, 1024>}, {pipeline_mode = #tpu.pipeline_mode<synchronous>, transform_indices = @transform_1, window_bounds = array<i64: 10, 1>}, {pipeline_mode = #tpu.pipeline_mode<synchronous>, transform_indices = @transform_2, window_bounds = array<i64: 7, 10, 10>}, {pipeline_mode = #tpu.pipeline_mode<synchronous>, transform_indices = @transform_3, window_bounds = array<i64: 8, 10, 1>}, {pipeline_mode = #tpu.pipeline_mode<synchronous>, transform_indices = @transform_4, window_bounds = array<i64: 10, 1>}, {transform_indices = @transform_5, window_bounds = array<i64: 1, 1>}, {transform_indices = @transform_6, window_bounds = array<i64: 1, 1024>}, {transform_indices = @transform_7, window_bounds = array<i64: 2, 8, 10, 1024>}]} {
    %c0 = arith.constant 0 : index
    %c0_0 = arith.constant 0 : index
    %0 = vector.load %arg1[%c0, %c0_0] : memref<1x1024xf32, #tpu.memory_space<vmem>>, vector<1x1024xf32>
    %c0_1 = arith.constant 0 : index
    %c0_2 = arith.constant 0 : index
    %1 = vector.load %arg2[%c0_1, %c0_2] : memref<10x1xf32, #tpu.memory_space<vmem>>, vector<10x1xf32>
    %2 = vector.broadcast %1 : vector<10x1xf32> to vector<10x1024xf32>
    %3 = vector.broadcast %0 : vector<1x1024xf32> to vector<10x1024xf32>
    %4 = arith.mulf %2, %3 : vector<10x1024xf32>
    %c0_3 = arith.constant 0 : index
    %c0_4 = arith.constant 0 : index
    %c0_5 = arith.constant 0 : index
    %5 = vector.load %arg4[%c0_3, %c0_4, %c0_5] : memref<8x10x1xf32, #tpu.memory_space<vmem>>, vector<1x10x1xf32>
    %6 = vector.shape_cast %5 : vector<1x10x1xf32> to vector<10x1xf32>
    %7 = vector.broadcast %6 : vector<10x1xf32> to vector<10x1024xf32>
    %8 = arith.addf %4, %7 : vector<10x1024xf32>
    %9 = arith.truncf %8 : vector<10x1024xf32> to vector<10x1024xbf16>
    %c0_6 = arith.constant 0 : index
    %c0_7 = arith.constant 0 : index
    %c0_8 = arith.constant 0 : index
    %c0_9 = arith.constant 0 : index
    %10 = vector.load %arg8[%c0_6, %c0_7, %c0_8, %c0_9] : memref<2x8x10x1024xbf16, #tpu.memory_space<vmem>>, vector<1x1x10x1024xbf16>
    %11 = vector.shape_cast %10 : vector<1x1x10x1024xbf16> to vector<10x1024xbf16>
    %12 = vector.shape_cast %9 : vector<10x1024xbf16> to vector<1x1x10x1024xbf16>
    tpu.vector_store %arg8[%c0_6, %c0_7, %c0_8, %c0_9], %12 {strides = array<i32>} : memref<2x8x10x1024xbf16, #tpu.memory_space<vmem>>, vector<1x1x10x1024xbf16>,
    %13 = math.tanh %8 : vector<10x1024xf32>
    %14 = arith.truncf %13 : vector<10x1024xf32> to vector<10x1024xbf16>
    %c1 = arith.constant 1 : index
    %c0_10 = arith.constant 0 : index
    %c0_11 = arith.constant 0 : index
    %c0_12 = arith.constant 0 : index
    %15 = vector.load %arg8[%c1, %c0_10, %c0_11, %c0_12] : memref<2x8x10x1024xbf16, #tpu.memory_space<vmem>>, vector<1x1x10x1024xbf16>
    %16 = vector.shape_cast %15 : vector<1x1x10x1024xbf16> to vector<10x1024xbf16>
    %17 = vector.shape_cast %14 : vector<10x1024xbf16> to vector<1x1x10x1024xbf16>
    tpu.vector_store %arg8[%c1, %c0_10, %c0_11, %c0_12], %17 {strides = array<i32>} : memref<2x8x10x1024xbf16, #tpu.memory_space<vmem>>, vector<1x1x10x1024xbf16>,
    %c0_13 = arith.constant 0 : index
    %c0_14 = arith.constant 0 : index
    %c0_15 = arith.constant 0 : index
    %18 = vector.load %arg3[%c0_13, %c0_14, %c0_15] : memref<7x10x10xf32, #tpu.memory_space<vmem>>, vector<1x10x10xf32>
    %19 = vector.shape_cast %18 : vector<1x10x10xf32> to vector<10x10xf32>
    %cst = arith.constant dense<0.000000e+00> : vector<10x1024xf32>
    %20 = tpu.matmul %19, %13, %cst {dimension_numbers = #tpu.dot_dimension_numbers<[1], [0], [0], [1], [0, 0, 1, 1], [], []>} : vector<10x10xf32>, vector<10x1024xf32>, vector<10x1024xf32> -> vector<10x1024xf32>
    %c1_16 = arith.constant 1 : index
    %c0_17 = arith.constant 0 : index
    %c0_18 = arith.constant 0 : index
    %21 = vector.load %arg4[%c1_16, %c0_17, %c0_18] : memref<8x10x1xf32, #tpu.memory_space<vmem>>, vector<1x10x1xf32>
    %22 = vector.shape_cast %21 : vector<1x10x1xf32> to vector<10x1xf32>
    %23 = vector.broadcast %22 : vector<10x1xf32> to vector<10x1024xf32>
    %24 = arith.addf %20, %23 : vector<10x1024xf32>
    %25 = arith.truncf %24 : vector<10x1024xf32> to vector<10x1024xbf16>
    %c0_19 = arith.constant 0 : index
    %c1_20 = arith.constant 1 : index
    %c0_21 = arith.constant 0 : index
    %c0_22 = arith.constant 0 : index
    %26 = vector.load %arg8[%c0_19, %c1_20, %c0_21, %c0_22] : memref<2x8x10x1024xbf16, #tpu.memory_space<vmem>>, vector<1x1x10x1024xbf16>
    %27 = vector.shape_cast %26 : vector<1x1x10x1024xbf16> to vector<10x1024xbf16>
    %28 = vector.shape_cast %25 : vector<10x1024xbf16> to vector<1x1x10x1024xbf16>
    tpu.vector_store %arg8[%c0_19, %c1_20, %c0_21, %c0_22], %28 {strides = array<i32>} : memref<2x8x10x1024xbf16, #tpu.memory_space<vmem>>, vector<1x1x10x1024xbf16>,
    %29 = math.tanh %24 : vector<10x1024xf32>
    %30 = arith.truncf %29 : vector<10x1024xf32> to vector<10x1024xbf16>
    %c1_23 = arith.constant 1 : index
    %c1_24 = arith.constant 1 : index
    %c0_25 = arith.constant 0 : index
    %c0_26 = arith.constant 0 : index
    %31 = vector.load %arg8[%c1_23, %c1_24, %c0_25, %c0_26] : memref<2x8x10x1024xbf16, #tpu.memory_space<vmem>>, vector<1x1x10x1024xbf16>
    %32 = vector.shape_cast %31 : vector<1x1x10x1024xbf16> to vector<10x1024xbf16>
    %33 = vector.shape_cast %30 : vector<10x1024xbf16> to vector<1x1x10x1024xbf16>
    tpu.vector_store %arg8[%c1_23, %c1_24, %c0_25, %c0_26], %33 {strides = array<i32>} : memref<2x8x10x1024xbf16, #tpu.memory_space<vmem>>, vector<1x1x10x1024xbf16>,
    %c1_27 = arith.constant 1 : index
    %c0_28 = arith.constant 0 : index
    %c0_29 = arith.constant 0 : index
    %34 = vector.load %arg3[%c1_27, %c0_28, %c0_29] : memref<7x10x10xf32, #tpu.memory_space<vmem>>, vector<1x10x10xf32>
    %35 = vector.shape_cast %34 : vector<1x10x10xf32> to vector<10x10xf32>
    %cst_30 = arith.constant dense<0.000000e+00> : vector<10x1024xf32>
    %36 = tpu.matmul %35, %29, %cst_30 {dimension_numbers = #tpu.dot_dimension_numbers<[1], [0], [0], [1], [0, 0, 1, 1], [], []>} : vector<10x10xf32>, vector<10x1024xf32>, vector<10x1024xf32> -> vector<10x1024xf32>
    %c2 = arith.constant 2 : index
    %c0_31 = arith.constant 0 : index
    %c0_32 = arith.constant 0 : index
    %37 = vector.load %arg4[%c2, %c0_31, %c0_32] : memref<8x10x1xf32, #tpu.memory_space<vmem>>, vector<1x10x1xf32>
    %38 = vector.shape_cast %37 : vector<1x10x1xf32> to vector<10x1xf32>
    %39 = vector.broadcast %38 : vector<10x1xf32> to vector<10x1024xf32>
    %40 = arith.addf %36, %39 : vector<10x1024xf32>
    %41 = arith.truncf %40 : vector<10x1024xf32> to vector<10x1024xbf16>
    %c0_33 = arith.constant 0 : index
    %c2_34 = arith.constant 2 : index
    %c0_35 = arith.constant 0 : index
    %c0_36 = arith.constant 0 : index
    %42 = vector.load %arg8[%c0_33, %c2_34, %c0_35, %c0_36] : memref<2x8x10x1024xbf16, #tpu.memory_space<vmem>>, vector<1x1x10x1024xbf16>
    %43 = vector.shape_cast %42 : vector<1x1x10x1024xbf16> to vector<10x1024xbf16>
    %44 = vector.shape_cast %41 : vector<10x1024xbf16> to vector<1x1x10x1024xbf16>
    tpu.vector_store %arg8[%c0_33, %c2_34, %c0_35, %c0_36], %44 {strides = array<i32>} : memref<2x8x10x1024xbf16, #tpu.memory_space<vmem>>, vector<1x1x10x1024xbf16>,
    %45 = math.tanh %40 : vector<10x1024xf32>
    %46 = arith.truncf %45 : vector<10x1024xf32> to vector<10x1024xbf16>
    %c1_37 = arith.constant 1 : index
    %c2_38 = arith.constant 2 : index
    %c0_39 = arith.constant 0 : index
    %c0_40 = arith.constant 0 : index
    %47 = vector.load %arg8[%c1_37, %c2_38, %c0_39, %c0_40] : memref<2x8x10x1024xbf16, #tpu.memory_space<vmem>>, vector<1x1x10x1024xbf16>
    %48 = vector.shape_cast %47 : vector<1x1x10x1024xbf16> to vector<10x1024xbf16>
    %49 = vector.shape_cast %46 : vector<10x1024xbf16> to vector<1x1x10x1024xbf16>
    tpu.vector_store %arg8[%c1_37, %c2_38, %c0_39, %c0_40], %49 {strides = array<i32>} : memref<2x8x10x1024xbf16, #tpu.memory_space<vmem>>, vector<1x1x10x1024xbf16>,
    %c2_41 = arith.constant 2 : index
    %c0_42 = arith.constant 0 : index
    %c0_43 = arith.constant 0 : index
    %50 = vector.load %arg3[%c2_41, %c0_42, %c0_43] : memref<7x10x10xf32, #tpu.memory_space<vmem>>, vector<1x10x10xf32>
    %51 = vector.shape_cast %50 : vector<1x10x10xf32> to vector<10x10xf32>
    %cst_44 = arith.constant dense<0.000000e+00> : vector<10x1024xf32>
    %52 = tpu.matmul %51, %45, %cst_44 {dimension_numbers = #tpu.dot_dimension_numbers<[1], [0], [0], [1], [0, 0, 1, 1], [], []>} : vector<10x10xf32>, vector<10x1024xf32>, vector<10x1024xf32> -> vector<10x1024xf32>
    %c3 = arith.constant 3 : index
    %c0_45 = arith.constant 0 : index
    %c0_46 = arith.constant 0 : index
    %53 = vector.load %arg4[%c3, %c0_45, %c0_46] : memref<8x10x1xf32, #tpu.memory_space<vmem>>, vector<1x10x1xf32>
    %54 = vector.shape_cast %53 : vector<1x10x1xf32> to vector<10x1xf32>
    %55 = vector.broadcast %54 : vector<10x1xf32> to vector<10x1024xf32>
    %56 = arith.addf %52, %55 : vector<10x1024xf32>
    %57 = arith.truncf %56 : vector<10x1024xf32> to vector<10x1024xbf16>
    %c0_47 = arith.constant 0 : index
    %c3_48 = arith.constant 3 : index
    %c0_49 = arith.constant 0 : index
    %c0_50 = arith.constant 0 : index
    %58 = vector.load %arg8[%c0_47, %c3_48, %c0_49, %c0_50] : memref<2x8x10x1024xbf16, #tpu.memory_space<vmem>>, vector<1x1x10x1024xbf16>
    %59 = vector.shape_cast %58 : vector<1x1x10x1024xbf16> to vector<10x1024xbf16>
    %60 = vector.shape_cast %57 : vector<10x1024xbf16> to vector<1x1x10x1024xbf16>
    tpu.vector_store %arg8[%c0_47, %c3_48, %c0_49, %c0_50], %60 {strides = array<i32>} : memref<2x8x10x1024xbf16, #tpu.memory_space<vmem>>, vector<1x1x10x1024xbf16>,
    %61 = math.tanh %56 : vector<10x1024xf32>
    %62 = arith.truncf %61 : vector<10x1024xf32> to vector<10x1024xbf16>
    %c1_51 = arith.constant 1 : index
    %c3_52 = arith.constant 3 : index
    %c0_53 = arith.constant 0 : index
    %c0_54 = arith.constant 0 : index
    %63 = vector.load %arg8[%c1_51, %c3_52, %c0_53, %c0_54] : memref<2x8x10x1024xbf16, #tpu.memory_space<vmem>>, vector<1x1x10x1024xbf16>
    %64 = vector.shape_cast %63 : vector<1x1x10x1024xbf16> to vector<10x1024xbf16>
    %65 = vector.shape_cast %62 : vector<10x1024xbf16> to vector<1x1x10x1024xbf16>
    tpu.vector_store %arg8[%c1_51, %c3_52, %c0_53, %c0_54], %65 {strides = array<i32>} : memref<2x8x10x1024xbf16, #tpu.memory_space<vmem>>, vector<1x1x10x1024xbf16>,
    %c3_55 = arith.constant 3 : index
    %c0_56 = arith.constant 0 : index
    %c0_57 = arith.constant 0 : index
    %66 = vector.load %arg3[%c3_55, %c0_56, %c0_57] : memref<7x10x10xf32, #tpu.memory_space<vmem>>, vector<1x10x10xf32>
    %67 = vector.shape_cast %66 : vector<1x10x10xf32> to vector<10x10xf32>
    %cst_58 = arith.constant dense<0.000000e+00> : vector<10x1024xf32>
    %68 = tpu.matmul %67, %61, %cst_58 {dimension_numbers = #tpu.dot_dimension_numbers<[1], [0], [0], [1], [0, 0, 1, 1], [], []>} : vector<10x10xf32>, vector<10x1024xf32>, vector<10x1024xf32> -> vector<10x1024xf32>
    %c4 = arith.constant 4 : index
    %c0_59 = arith.constant 0 : index
    %c0_60 = arith.constant 0 : index
    %69 = vector.load %arg4[%c4, %c0_59, %c0_60] : memref<8x10x1xf32, #tpu.memory_space<vmem>>, vector<1x10x1xf32>
    %70 = vector.shape_cast %69 : vector<1x10x1xf32> to vector<10x1xf32>
    %71 = vector.broadcast %70 : vector<10x1xf32> to vector<10x1024xf32>
    %72 = arith.addf %68, %71 : vector<10x1024xf32>
    %73 = arith.truncf %72 : vector<10x1024xf32> to vector<10x1024xbf16>
    %c0_61 = arith.constant 0 : index
    %c4_62 = arith.constant 4 : index
    %c0_63 = arith.constant 0 : index
    %c0_64 = arith.constant 0 : index
    %74 = vector.load %arg8[%c0_61, %c4_62, %c0_63, %c0_64] : memref<2x8x10x1024xbf16, #tpu.memory_space<vmem>>, vector<1x1x10x1024xbf16>
    %75 = vector.shape_cast %74 : vector<1x1x10x1024xbf16> to vector<10x1024xbf16>
    %76 = vector.shape_cast %73 : vector<10x1024xbf16> to vector<1x1x10x1024xbf16>
    tpu.vector_store %arg8[%c0_61, %c4_62, %c0_63, %c0_64], %76 {strides = array<i32>} : memref<2x8x10x1024xbf16, #tpu.memory_space<vmem>>, vector<1x1x10x1024xbf16>,
    %77 = math.tanh %72 : vector<10x1024xf32>
    %78 = arith.truncf %77 : vector<10x1024xf32> to vector<10x1024xbf16>
    %c1_65 = arith.constant 1 : index
    %c4_66 = arith.constant 4 : index
    %c0_67 = arith.constant 0 : index
    %c0_68 = arith.constant 0 : index
    %79 = vector.load %arg8[%c1_65, %c4_66, %c0_67, %c0_68] : memref<2x8x10x1024xbf16, #tpu.memory_space<vmem>>, vector<1x1x10x1024xbf16>
    %80 = vector.shape_cast %79 : vector<1x1x10x1024xbf16> to vector<10x1024xbf16>
    %81 = vector.shape_cast %78 : vector<10x1024xbf16> to vector<1x1x10x1024xbf16>
    tpu.vector_store %arg8[%c1_65, %c4_66, %c0_67, %c0_68], %81 {strides = array<i32>} : memref<2x8x10x1024xbf16, #tpu.memory_space<vmem>>, vector<1x1x10x1024xbf16>,
    %c4_69 = arith.constant 4 : index
    %c0_70 = arith.constant 0 : index
    %c0_71 = arith.constant 0 : index
    %82 = vector.load %arg3[%c4_69, %c0_70, %c0_71] : memref<7x10x10xf32, #tpu.memory_space<vmem>>, vector<1x10x10xf32>
    %83 = vector.shape_cast %82 : vector<1x10x10xf32> to vector<10x10xf32>
    %cst_72 = arith.constant dense<0.000000e+00> : vector<10x1024xf32>
    %84 = tpu.matmul %83, %77, %cst_72 {dimension_numbers = #tpu.dot_dimension_numbers<[1], [0], [0], [1], [0, 0, 1, 1], [], []>} : vector<10x10xf32>, vector<10x1024xf32>, vector<10x1024xf32> -> vector<10x1024xf32>
    %c5 = arith.constant 5 : index
    %c0_73 = arith.constant 0 : index
    %c0_74 = arith.constant 0 : index
    %85 = vector.load %arg4[%c5, %c0_73, %c0_74] : memref<8x10x1xf32, #tpu.memory_space<vmem>>, vector<1x10x1xf32>
    %86 = vector.shape_cast %85 : vector<1x10x1xf32> to vector<10x1xf32>
    %87 = vector.broadcast %86 : vector<10x1xf32> to vector<10x1024xf32>
    %88 = arith.addf %84, %87 : vector<10x1024xf32>
    %89 = arith.truncf %88 : vector<10x1024xf32> to vector<10x1024xbf16>
    %c0_75 = arith.constant 0 : index
    %c5_76 = arith.constant 5 : index
    %c0_77 = arith.constant 0 : index
    %c0_78 = arith.constant 0 : index
    %90 = vector.load %arg8[%c0_75, %c5_76, %c0_77, %c0_78] : memref<2x8x10x1024xbf16, #tpu.memory_space<vmem>>, vector<1x1x10x1024xbf16>
    %91 = vector.shape_cast %90 : vector<1x1x10x1024xbf16> to vector<10x1024xbf16>
    %92 = vector.shape_cast %89 : vector<10x1024xbf16> to vector<1x1x10x1024xbf16>
    tpu.vector_store %arg8[%c0_75, %c5_76, %c0_77, %c0_78], %92 {strides = array<i32>} : memref<2x8x10x1024xbf16, #tpu.memory_space<vmem>>, vector<1x1x10x1024xbf16>,
    %93 = math.tanh %88 : vector<10x1024xf32>
    %94 = arith.truncf %93 : vector<10x1024xf32> to vector<10x1024xbf16>
    %c1_79 = arith.constant 1 : index
    %c5_80 = arith.constant 5 : index
    %c0_81 = arith.constant 0 : index
    %c0_82 = arith.constant 0 : index
    %95 = vector.load %arg8[%c1_79, %c5_80, %c0_81, %c0_82] : memref<2x8x10x1024xbf16, #tpu.memory_space<vmem>>, vector<1x1x10x1024xbf16>
    %96 = vector.shape_cast %95 : vector<1x1x10x1024xbf16> to vector<10x1024xbf16>
    %97 = vector.shape_cast %94 : vector<10x1024xbf16> to vector<1x1x10x1024xbf16>
    tpu.vector_store %arg8[%c1_79, %c5_80, %c0_81, %c0_82], %97 {strides = array<i32>} : memref<2x8x10x1024xbf16, #tpu.memory_space<vmem>>, vector<1x1x10x1024xbf16>,
    %c5_83 = arith.constant 5 : index
    %c0_84 = arith.constant 0 : index
    %c0_85 = arith.constant 0 : index
    %98 = vector.load %arg3[%c5_83, %c0_84, %c0_85] : memref<7x10x10xf32, #tpu.memory_space<vmem>>, vector<1x10x10xf32>
    %99 = vector.shape_cast %98 : vector<1x10x10xf32> to vector<10x10xf32>
    %cst_86 = arith.constant dense<0.000000e+00> : vector<10x1024xf32>
    %100 = tpu.matmul %99, %93, %cst_86 {dimension_numbers = #tpu.dot_dimension_numbers<[1], [0], [0], [1], [0, 0, 1, 1], [], []>} : vector<10x10xf32>, vector<10x1024xf32>, vector<10x1024xf32> -> vector<10x1024xf32>
    %c6 = arith.constant 6 : index
    %c0_87 = arith.constant 0 : index
    %c0_88 = arith.constant 0 : index
    %101 = vector.load %arg4[%c6, %c0_87, %c0_88] : memref<8x10x1xf32, #tpu.memory_space<vmem>>, vector<1x10x1xf32>
    %102 = vector.shape_cast %101 : vector<1x10x1xf32> to vector<10x1xf32>
    %103 = vector.broadcast %102 : vector<10x1xf32> to vector<10x1024xf32>
    %104 = arith.addf %100, %103 : vector<10x1024xf32>
    %105 = arith.truncf %104 : vector<10x1024xf32> to vector<10x1024xbf16>
    %c0_89 = arith.constant 0 : index
    %c6_90 = arith.constant 6 : index
    %c0_91 = arith.constant 0 : index
    %c0_92 = arith.constant 0 : index
    %106 = vector.load %arg8[%c0_89, %c6_90, %c0_91, %c0_92] : memref<2x8x10x1024xbf16, #tpu.memory_space<vmem>>, vector<1x1x10x1024xbf16>
    %107 = vector.shape_cast %106 : vector<1x1x10x1024xbf16> to vector<10x1024xbf16>
    %108 = vector.shape_cast %105 : vector<10x1024xbf16> to vector<1x1x10x1024xbf16>
    tpu.vector_store %arg8[%c0_89, %c6_90, %c0_91, %c0_92], %108 {strides = array<i32>} : memref<2x8x10x1024xbf16, #tpu.memory_space<vmem>>, vector<1x1x10x1024xbf16>,
    %109 = math.tanh %104 : vector<10x1024xf32>
    %110 = arith.truncf %109 : vector<10x1024xf32> to vector<10x1024xbf16>
    %c1_93 = arith.constant 1 : index
    %c6_94 = arith.constant 6 : index
    %c0_95 = arith.constant 0 : index
    %c0_96 = arith.constant 0 : index
    %111 = vector.load %arg8[%c1_93, %c6_94, %c0_95, %c0_96] : memref<2x8x10x1024xbf16, #tpu.memory_space<vmem>>, vector<1x1x10x1024xbf16>
    %112 = vector.shape_cast %111 : vector<1x1x10x1024xbf16> to vector<10x1024xbf16>
    %113 = vector.shape_cast %110 : vector<10x1024xbf16> to vector<1x1x10x1024xbf16>
    tpu.vector_store %arg8[%c1_93, %c6_94, %c0_95, %c0_96], %113 {strides = array<i32>} : memref<2x8x10x1024xbf16, #tpu.memory_space<vmem>>, vector<1x1x10x1024xbf16>,
    %c6_97 = arith.constant 6 : index
    %c0_98 = arith.constant 0 : index
    %c0_99 = arith.constant 0 : index
    %114 = vector.load %arg3[%c6_97, %c0_98, %c0_99] : memref<7x10x10xf32, #tpu.memory_space<vmem>>, vector<1x10x10xf32>
    %115 = vector.shape_cast %114 : vector<1x10x10xf32> to vector<10x10xf32>
    %cst_100 = arith.constant dense<0.000000e+00> : vector<10x1024xf32>
    %116 = tpu.matmul %115, %109, %cst_100 {dimension_numbers = #tpu.dot_dimension_numbers<[1], [0], [0], [1], [0, 0, 1, 1], [], []>} : vector<10x10xf32>, vector<10x1024xf32>, vector<10x1024xf32> -> vector<10x1024xf32>
    %c7 = arith.constant 7 : index
    %c0_101 = arith.constant 0 : index
    %c0_102 = arith.constant 0 : index
    %117 = vector.load %arg4[%c7, %c0_101, %c0_102] : memref<8x10x1xf32, #tpu.memory_space<vmem>>, vector<1x10x1xf32>
    %118 = vector.shape_cast %117 : vector<1x10x1xf32> to vector<10x1xf32>
    %119 = vector.broadcast %118 : vector<10x1xf32> to vector<10x1024xf32>
    %120 = arith.addf %116, %119 : vector<10x1024xf32>
    %121 = arith.truncf %120 : vector<10x1024xf32> to vector<10x1024xbf16>
    %c0_103 = arith.constant 0 : index
    %c7_104 = arith.constant 7 : index
    %c0_105 = arith.constant 0 : index
    %c0_106 = arith.constant 0 : index
    %122 = vector.load %arg8[%c0_103, %c7_104, %c0_105, %c0_106] : memref<2x8x10x1024xbf16, #tpu.memory_space<vmem>>, vector<1x1x10x1024xbf16>
    %123 = vector.shape_cast %122 : vector<1x1x10x1024xbf16> to vector<10x1024xbf16>
    %124 = vector.shape_cast %121 : vector<10x1024xbf16> to vector<1x1x10x1024xbf16>
    tpu.vector_store %arg8[%c0_103, %c7_104, %c0_105, %c0_106], %124 {strides = array<i32>} : memref<2x8x10x1024xbf16, #tpu.memory_space<vmem>>, vector<1x1x10x1024xbf16>,
    %125 = math.tanh %120 : vector<10x1024xf32>
    %126 = arith.truncf %125 : vector<10x1024xf32> to vector<10x1024xbf16>
    %c1_107 = arith.constant 1 : index
    %c7_108 = arith.constant 7 : index
    %c0_109 = arith.constant 0 : index
    %c0_110 = arith.constant 0 : index
    %127 = vector.load %arg8[%c1_107, %c7_108, %c0_109, %c0_110] : memref<2x8x10x1024xbf16, #tpu.memory_space<vmem>>, vector<1x1x10x1024xbf16>
    %128 = vector.shape_cast %127 : vector<1x1x10x1024xbf16> to vector<10x1024xbf16>
    %129 = vector.shape_cast %126 : vector<10x1024xbf16> to vector<1x1x10x1024xbf16>
    tpu.vector_store %arg8[%c1_107, %c7_108, %c0_109, %c0_110], %129 {strides = array<i32>} : memref<2x8x10x1024xbf16, #tpu.memory_space<vmem>>, vector<1x1x10x1024xbf16>,
    %c0_111 = arith.constant 0 : index
    %c0_112 = arith.constant 0 : index
    %130 = vector.load %arg5[%c0_111, %c0_112] : memref<10x1xf32, #tpu.memory_space<vmem>>, vector<10x1xf32>
    %131 = vector.broadcast %130 : vector<10x1xf32> to vector<10x1024xf32>
    %132 = arith.mulf %131, %125 : vector<10x1024xf32>
    %cst_113 = arith.constant dense<0.000000e+00> : vector<1024xf32>
    %133 = vector.multi_reduction <add>, %132, %cst_113 [0] : vector<10x1024xf32> to vector<1024xf32>
    %134 = vector.shape_cast %133 : vector<1024xf32> to vector<1x1024xf32>
    %c0_114 = arith.constant 0 : index
    %c0_115 = arith.constant 0 : index
    %135 = memref.load %arg6[%c0_114, %c0_115] : memref<1x1xf32, #tpu.memory_space<smem>>
    %136 = vector.broadcast %135 : f32 to vector<1x1024xf32>
    %137 = arith.addf %134, %136 : vector<1x1024xf32>
    %c0_116 = arith.constant 0 : index
    %c0_117 = arith.constant 0 : index
    %138 = vector.load %arg7[%c0_116, %c0_117] : memref<1x1024xf32, #tpu.memory_space<vmem>>, vector<1x1024xf32>
    tpu.vector_store %arg7[%c0_116, %c0_117], %137 {strides = array<i32>} : memref<1x1024xf32, #tpu.memory_space<vmem>>, vector<1x1024xf32>,
    return
  }
  func.func @transform_0(%arg0: i32) -> (i32, i32) {
    %c0_i32 = arith.constant 0 : i32
    %c0_i32_0 = arith.constant 0 : i32
    return %c0_i32, %arg0 : i32, i32
  }
  func.func @transform_1(%arg0: i32) -> (i32, i32) {
    %c0_i32 = arith.constant 0 : i32
    %c0_i32_0 = arith.constant 0 : i32
    %c0_i32_1 = arith.constant 0 : i32
    return %c0_i32, %c0_i32_0 : i32, i32
  }
  func.func @transform_2(%arg0: i32) -> (i32, i32, i32) {
    %c0_i32 = arith.constant 0 : i32
    %c0_i32_0 = arith.constant 0 : i32
    %c0_i32_1 = arith.constant 0 : i32
    %c0_i32_2 = arith.constant 0 : i32
    return %c0_i32, %c0_i32_0, %c0_i32_1 : i32, i32, i32
  }
  func.func @transform_3(%arg0: i32) -> (i32, i32, i32) {
    %c0_i32 = arith.constant 0 : i32
    %c0_i32_0 = arith.constant 0 : i32
    %c0_i32_1 = arith.constant 0 : i32
    %c0_i32_2 = arith.constant 0 : i32
    return %c0_i32, %c0_i32_0, %c0_i32_1 : i32, i32, i32
  }
  func.func @transform_4(%arg0: i32) -> (i32, i32) {
    %c0_i32 = arith.constant 0 : i32
    %c0_i32_0 = arith.constant 0 : i32
    %c0_i32_1 = arith.constant 0 : i32
    return %c0_i32, %c0_i32_0 : i32, i32
  }
  func.func @transform_5(%arg0: i32) -> (i32, i32) {
    %c0_i32 = arith.constant 0 : i32
    %c0_i32_0 = arith.constant 0 : i32
    %c0_i32_1 = arith.constant 0 : i32
    return %c0_i32, %c0_i32_0 : i32, i32
  }
  func.func @transform_6(%arg0: i32) -> (i32, i32) {
    %c0_i32 = arith.constant 0 : i32
    %c0_i32_0 = arith.constant 0 : i32
    return %c0_i32, %arg0 : i32, i32
  }
  func.func @transform_7(%arg0: i32) -> (i32, i32, i32, i32) {
    %c0_i32 = arith.constant 0 : i32
    %c0_i32_0 = arith.constant 0 : i32
    %c0_i32_1 = arith.constant 0 : i32
    %c0_i32_2 = arith.constant 0 : i32
    return %c0_i32, %c0_i32_0, %c0_i32_1, %arg0 : i32, i32, i32, i32
  }
}

</mosaic_0001>

<llo_original>
// kernel: tpu_custom_call.1
$region0: #{tpu_custom_call.1}
  #allocation0 [shape = 'u32[]', space=smem, size = 0x4, offset = 0x4, fixed_abs, tag = 'smem constant byte address 0x4 - core index']
  #allocation1 [shape = 'u32[144,128]{1,0:T(1,128)}', space=vmem, size = 0x12000, scoped, tag = 'internal scratch']
  #allocation2 [shape = 'f32[1,1]{1,0:T(1,128)S(6)}', space=smem, size = 0x200, scoped, tag = 'scoped memory for tpu_custom_call.1']
  %s0 = inlined_call_operand.vmem [shape: f32[1,2048], index: 0, kind: input, shape index: {}]
  %s1 = inlined_call_operand.vmem [shape: f32[10,1], index: 1, kind: input, shape index: {}]
  %s2 = inlined_call_operand.vmem [shape: f32[7,10,10], index: 2, kind: input, shape index: {}]
  %s3 = inlined_call_operand.vmem [shape: f32[8,10,1], index: 3, kind: input, shape index: {}]
  %s4 = inlined_call_operand.vmem [shape: f32[10,1], index: 4, kind: input, shape index: {}]
  %s5 = inlined_call_operand.<no memory space> [shape: f32[1,1], index: 5, kind: input, shape index: {}]
  %s6 = inlined_call_operand.hbm [shape: f32[1,2048], index: 6, kind: output, shape index: {0}]
  %s7 = inlined_call_operand.vmem [shape: bf16[2,8,10,2048], index: 7, kind: output, shape index: {1}]
  %8 = xla_tuple %s6, %s7
  %s9 = sld [smem:[#allocation0]]
  $region84: #{tpu_custom_call.1} parent=0
    _
  %s11 = ssub.s32 1, %s9
  %s12 = scalar_select 0, %s11, %s9
  %13 = sst [smem:[#allocation2]] %s5
  $region1: #{tpu_custom_call.1} parent=0
    #allocation3 [shape = 'u8[8192]{0}', space=vmem, size = 0x2000, scoped, tag = 'output window, operand 0']
    #allocation4 [shape = 's32[2]{0}', space=sflag, size = 0x8, scoped, tag = 'scoped memory for tpu_custom_call.1']
    #allocation5 [shape = 'u8[1048576]{0}', space=vmem, size = 0x100000, scoped, tag = 'output window, operand 1']
    %14 = vsyncpa [#allocation4], 0
    %s15 = scalar_lea.sflag [#allocation4], 1
    %16 = vsyncpa %s15, 0
    loop: start=0, step=1, limit=4
    $region2: #{tpu_custom_call.1} parent=1 // loop_pre_header
      _
    $region3: #{tpu_custom_call.1} parent=1 // loop_header
      %s18 = sphi 0, %s22
      %p19 = scmp.ge.s32.totalorder %s18, 4
      %s28 = sphi 0, %s30
      %s31 = sphi 0, %s28
      %s32 = sphi 0, %s31
      %s48 = sphi 0, %s32
      %s52 = sphi 0, %s52
      %s54 = sphi 0, %s52
      %s55 = sphi 0, %s54
      %s69 = sphi 0, %s55
      %s73 = sphi 0, %s73
      %s75 = sphi 0, %s73
      %s76 = sphi 0, %s75
      %s90 = sphi 0, %s76
      %s94 = sphi 0, %s94
      %s96 = sphi 0, %s94
      %s97 = sphi 0, %s96
      %s111 = sphi 0, %s97
      %s115 = sphi 0, %s115
      %s117 = sphi 0, %s115
      %s118 = sphi 0, %s117
      %s132 = sphi 0, %s118
      %s136 = sphi 0, %s136
      %s138 = sphi 0, %s136
      %s139 = sphi 0, %s138
      %s153 = sphi 0, %s139
      %s159 = sphi 0, %s161
      %s162 = sphi 0, %s159
      %s163 = sphi 0, %s162
      %s179 = sphi 0, %s163
      %s185 = sphi 0, %s187
      %s188 = sphi 0, %s185
      %s189 = sphi 0, %s188
      %s205 = sphi 0, %s189
    $region4: #{tpu_custom_call.1} parent=1 // loop_header_branch
      %21 = sbr.rel (%p19) target = $region8
    $region5: #{tpu_custom_call.1} parent=1 // loop_body
      %s23 = ssub.s32 %s18, 1
      %s24 = ssub.s32 %s18, 2
      %s25 = sadd.s32 %s18, 1
      %s26 = ssub.s32 %s18, %s25
      %p27 = scmp.eq.s32.totalorder %s26, 0
      %s29 = sadd.s32 %s28, 1
      %s30 = scalar_select %p27, %s28, %s29
      %p33 = pneg %p27
      %p34 = scmp.eq.s32.totalorder %s18, 1
      %p35 = por %p33, %p34
      %p36 = scmp.ne.s32.totalorder %s28, %s31
      %p37 = scmp.eq.s32.totalorder %s18, 0
      %p38 = por %p36, %p37
      %p39 = scmp.ne.s32.totalorder %s28, %s31
      %p40 = scmp.eq.s32.totalorder %s23, 1
      %p41 = por %p39, %p40
      %p42 = scmp.ne.s32.totalorder %s31, %s32
      %p43 = scmp.eq.s32.totalorder %s23, 0
      %p44 = por %p42, %p43
      %p45 = scmp.ne.s32.totalorder %s31, %s32
      %p46 = scmp.eq.s32.totalorder %s24, 1
      %p47 = por %p45, %p46
      %p49 = scmp.ne.s32.totalorder %s32, %s48
      %p50 = scmp.eq.s32.totalorder %s24, 0
      %p51 = por %p49, %p50
      %s53 = sadd.s32 %s52, 1
      %p56 = scmp.eq.s32.totalorder %s18, 1
      %p57 = scmp.ne.s32.totalorder %s52, %s54
      %p58 = scmp.eq.s32.totalorder %s18, 0
      %p59 = por %p57, %p58
      %p60 = scmp.ne.s32.totalorder %s52, %s54
      %p61 = scmp.eq.s32.totalorder %s23, 1
      %p62 = por %p60, %p61
      %p63 = scmp.ne.s32.totalorder %s54, %s55
      %p64 = scmp.eq.s32.totalorder %s23, 0
      %p65 = por %p63, %p64
      %p66 = scmp.ne.s32.totalorder %s54, %s55
      %p67 = scmp.eq.s32.totalorder %s24, 1
      %p68 = por %p66, %p67
      %p70 = scmp.ne.s32.totalorder %s55, %s69
      %p71 = scmp.eq.s32.totalorder %s24, 0
      %p72 = por %p70, %p71
      %s74 = sadd.s32 %s73, 1
      %p77 = scmp.eq.s32.totalorder %s18, 1
      %p78 = scmp.ne.s32.totalorder %s73, %s75
      %p79 = scmp.eq.s32.totalorder %s18, 0
      %p80 = por %p78, %p79
      %p81 = scmp.ne.s32.totalorder %s73, %s75
      %p82 = scmp.eq.s32.totalorder %s23, 1
      %p83 = por %p81, %p82
      %p84 = scmp.ne.s32.totalorder %s75, %s76
      %p85 = scmp.eq.s32.totalorder %s23, 0
      %p86 = por %p84, %p85
      %p87 = scmp.ne.s32.totalorder %s75, %s76
      %p88 = scmp.eq.s32.totalorder %s24, 1
      %p89 = por %p87, %p88
      %p91 = scmp.ne.s32.totalorder %s76, %s90
      %p92 = scmp.eq.s32.totalorder %s24, 0
      %p93 = por %p91, %p92
      %s95 = sadd.s32 %s94, 1
      %p98 = scmp.eq.s32.totalorder %s18, 1
      %p99 = scmp.ne.s32.totalorder %s94, %s96
      %p100 = scmp.eq.s32.totalorder %s18, 0
      %p101 = por %p99, %p100
      %p102 = scmp.ne.s32.totalorder %s94, %s96
      %p103 = scmp.eq.s32.totalorder %s23, 1
      %p104 = por %p102, %p103
      %p105 = scmp.ne.s32.totalorder %s96, %s97
      %p106 = scmp.eq.s32.totalorder %s23, 0
      %p107 = por %p105, %p106
      %p108 = scmp.ne.s32.totalorder %s96, %s97
      %p109 = scmp.eq.s32.totalorder %s24, 1
      %p110 = por %p108, %p109
      %p112 = scmp.ne.s32.totalorder %s97, %s111
      %p113 = scmp.eq.s32.totalorder %s24, 0
      %p114 = por %p112, %p113
      %s116 = sadd.s32 %s115, 1
      %p119 = scmp.eq.s32.totalorder %s18, 1
      %p120 = scmp.ne.s32.totalorder %s115, %s117
      %p121 = scmp.eq.s32.totalorder %s18, 0
      %p122 = por %p120, %p121
      %p123 = scmp.ne.s32.totalorder %s115, %s117
      %p124 = scmp.eq.s32.totalorder %s23, 1
      %p125 = por %p123, %p124
      %p126 = scmp.ne.s32.totalorder %s117, %s118
      %p127 = scmp.eq.s32.totalorder %s23, 0
      %p128 = por %p126, %p127
      %p129 = scmp.ne.s32.totalorder %s117, %s118
      %p130 = scmp.eq.s32.totalorder %s24, 1
      %p131 = por %p129, %p130
      %p133 = scmp.ne.s32.totalorder %s118, %s132
      %p134 = scmp.eq.s32.totalorder %s24, 0
      %p135 = por %p133, %p134
      %s137 = sadd.s32 %s136, 1
      %p140 = scmp.eq.s32.totalorder %s18, 1
      %p141 = scmp.ne.s32.totalorder %s136, %s138
      %p142 = scmp.eq.s32.totalorder %s18, 0
      %p143 = por %p141, %p142
      %p144 = scmp.ne.s32.totalorder %s136, %s138
      %p145 = scmp.eq.s32.totalorder %s23, 1
      %p146 = por %p144, %p145
      %p147 = scmp.ne.s32.totalorder %s138, %s139
      %p148 = scmp.eq.s32.totalorder %s23, 0
      %p149 = por %p147, %p148
      %p150 = scmp.ne.s32.totalorder %s138, %s139
      %p151 = scmp.eq.s32.totalorder %s24, 1
      %p152 = por %p150, %p151
      %p154 = scmp.ne.s32.totalorder %s139, %s153
      %p155 = scmp.eq.s32.totalorder %s24, 0
      %p156 = por %p154, %p155
      %s157 = ssub.s32 %s18, %s25
      %p158 = scmp.eq.s32.totalorder %s157, 0
      %s160 = sadd.s32 %s159, 1
      %s161 = scalar_select %p158, %s159, %s160
      %p164 = pneg %p158
      %p165 = scmp.eq.s32.totalorder %s18, 1
      %p166 = por %p164, %p165
      %p167 = scmp.ne.s32.totalorder %s159, %s162
      %p168 = scmp.eq.s32.totalorder %s18, 0
      %p169 = por %p167, %p168
      %p170 = scmp.ne.s32.totalorder %s159, %s162
      %p171 = scmp.eq.s32.totalorder %s23, 1
      %p172 = por %p170, %p171
      %p173 = scmp.ne.s32.totalorder %s162, %s163
      %p174 = scmp.eq.s32.totalorder %s23, 0
      %p175 = por %p173, %p174
      %p176 = scmp.ne.s32.totalorder %s162, %s163
      %p177 = scmp.eq.s32.totalorder %s24, 1
      %p178 = por %p176, %p177
      %p180 = scmp.ne.s32.totalorder %s163, %s179
      %p181 = scmp.eq.s32.totalorder %s24, 0
      %p182 = por %p180, %p181
      %s183 = ssub.s32 %s18, %s25
      %p184 = scmp.eq.s32.totalorder %s183, 0
      %s186 = sadd.s32 %s185, 1
      %s187 = scalar_select %p184, %s185, %s186
      %p190 = pneg %p184
      %p191 = scmp.eq.s32.totalorder %s18, 1
      %p192 = por %p190, %p191
      %p193 = scmp.ne.s32.totalorder %s185, %s188
      %p194 = scmp.eq.s32.totalorder %s18, 0
      %p195 = por %p193, %p194
      %p196 = scmp.ne.s32.totalorder %s185, %s188
      %p197 = scmp.eq.s32.totalorder %s23, 1
      %p198 = por %p196, %p197
      %p199 = scmp.ne.s32.totalorder %s188, %s189
      %p200 = scmp.eq.s32.totalorder %s23, 0
      %p201 = por %p199, %p200
      %p202 = scmp.ne.s32.totalorder %s188, %s189
      %p203 = scmp.eq.s32.totalorder %s24, 1
      %p204 = por %p202, %p203
      %p206 = scmp.ne.s32.totalorder %s189, %s205
      %p207 = scmp.eq.s32.totalorder %s24, 0
      %p208 = por %p206, %p207
      %p209 = scmp.le.s32.totalorder 1, %s18
      %p210 = scmp.lt.s32.totalorder %s18, 3
      %p211 = pnand %p209, %p210
      %p212 = pneg %p211
      // Predicated region
      $region9: #{tpu_custom_call.1} parent=5 // pred_check
        _
      $region10: #{tpu_custom_call.1} parent=5 // pred_check_branch
        %214 = sbr.rel (%p211) target = $region12
      $region11: #{tpu_custom_call.1} parent=5 // pred_region
        %s215 = ssub.s32 %s18, 1
        // Predicated region
        $region13: #{tpu_custom_call.1} parent=11 // pred_check
          %p216 = pneg %p65
        $region14: #{tpu_custom_call.1} parent=11 // pred_check_branch
          %218 = sbr.rel (%p216) target = $region16
        $region15: #{tpu_custom_call.1} parent=11 // pred_region
          _
        $region16: #{tpu_custom_call.1} parent=11 // pred_fallthru
          _
        // Predicated region
        $region17: #{tpu_custom_call.1} parent=11 // pred_check
          %p219 = pneg %p86
        $region18: #{tpu_custom_call.1} parent=11 // pred_check_branch
          %221 = sbr.rel (%p219) target = $region20
        $region19: #{tpu_custom_call.1} parent=11 // pred_region
          _
        $region20: #{tpu_custom_call.1} parent=11 // pred_fallthru
          _
        // Predicated region
        $region21: #{tpu_custom_call.1} parent=11 // pred_check
          %p222 = pneg %p107
        $region22: #{tpu_custom_call.1} parent=11 // pred_check_branch
          %224 = sbr.rel (%p222) target = $region24
        $region23: #{tpu_custom_call.1} parent=11 // pred_region
          _
        $region24: #{tpu_custom_call.1} parent=11 // pred_fallthru
          _
        // Predicated region
        $region25: #{tpu_custom_call.1} parent=11 // pred_check
          %p225 = pneg %p128
        $region26: #{tpu_custom_call.1} parent=11 // pred_check_branch
          %227 = sbr.rel (%p225) target = $region28
        $region27: #{tpu_custom_call.1} parent=11 // pred_region
          _
        $region28: #{tpu_custom_call.1} parent=11 // pred_fallthru
          _
        // Predicated region
        $region29: #{tpu_custom_call.1} parent=11 // pred_check
          %p228 = pneg %p149
        $region30: #{tpu_custom_call.1} parent=11 // pred_check_branch
          %230 = sbr.rel (%p228) target = $region32
        $region31: #{tpu_custom_call.1} parent=11 // pred_region
          _
        $region32: #{tpu_custom_call.1} parent=11 // pred_fallthru
          _
      $region12: #{tpu_custom_call.1} parent=5 // pred_fallthru
        _
      %p231 = scmp.lt.s32.totalorder %s18, 2
      // Predicated region
      $region33: #{tpu_custom_call.1} parent=5 // pred_check
        %p232 = pneg %p231
      $region34: #{tpu_custom_call.1} parent=5 // pred_check_branch
        %234 = sbr.rel (%p232) target = $region36
      $region35: #{tpu_custom_call.1} parent=5 // pred_region
        // Predicated region
        $region37: #{tpu_custom_call.1} parent=35 // pred_check
          %p235 = pneg %p38
        $region38: #{tpu_custom_call.1} parent=35 // pred_check_branch
          %237 = sbr.rel (%p235) target = $region40
        $region39: #{tpu_custom_call.1} parent=35 // pred_region
          %s238 = smul.u32 8, %s18
          %p239 = scmp.lt.s32.totalorder %s238, 15
          %s240 = scalar_select %p239, %s238, 15
          %s241 = scalar_lea.vmem %s0, %s240
          %s242 = smul.u32 8, %s18
        $region40: #{tpu_custom_call.1} parent=35 // pred_fallthru
          _
      $region36: #{tpu_custom_call.1} parent=5 // pred_fallthru
        _
      %p243 = scmp.le.s32.totalorder 1, %s18
      %p244 = scmp.lt.s32.totalorder %s18, 3
      %p245 = pnand %p243, %p244
      %p246 = pneg %p245
      // Predicated region
      $region41: #{tpu_custom_call.1} parent=5 // pred_check
        _
      $region42: #{tpu_custom_call.1} parent=5 // pred_check_branch
        %248 = sbr.rel (%p245) target = $region44
      $region43: #{tpu_custom_call.1} parent=5 // pred_region
        %s249 = ssub.s32 %s18, 1
        %s250 = smul.u32 8, %s23
        %p251 = scmp.lt.s32.totalorder %s250, 15
        %s252 = scalar_select %p251, %s250, 15
        %s253 = scalar_lea.vmem %s0, %s252
        %p254 = pneg %p44
        %p255 = pneg %p41
        %p256 = pneg %p65
        %p257 = pneg %p62
        %p258 = pneg %p86
        %p259 = pneg %p83
        %p260 = pneg %p107
        %p261 = pneg %p104
        %p262 = pneg %p128
        %p263 = pneg %p125
        %p264 = pneg %p149
        %p265 = pneg %p146
        %p266 = pneg %p175
        %p267 = pneg %p172
        %s268 = sand.u32 %s162, 1
        %s269 = scalar_lea.sflag [#allocation4], %s268
        %s270 = sand.u32 %s162, 1
        %s271 = smul.addr %s270, 8
        %s272 = scalar_lea.vmem [#allocation3], %s271
        %p273 = pneg %p201
        %p274 = pneg %p198
        %s275 = sand.u32 %s188, 1
        %s276 = sand.u32 %s188, 1
        %s277 = smul.addr %s276, 1024
        %s278 = scalar_lea.vmem [#allocation5], %s277
        %s279 = smul.u32 8, %s23
        %p280 = scmp.lt.s32.totalorder %s279, 15
        %s281 = scalar_select %p280, %s279, 15
        %s282 = scalar_lea.vmem %s0, %s281
        %s283 = smul.u32 8, %s23
        %s284 = smul.u32 8, %s23
        %s285 = smul.u32 8, %s23
        %v286 = vld [vmem:[%s282] sm:$0xff]
        %v287 = vld [vmem:[%s1] sm:$0xff]
        %v288 = vld [vmem:[%s1 + $0x8] sm:$0x3]
        %290 = vset.pattern.permute.xlu0 0
        %291 = vperm.xlu0 %290, %v287
        %v292 = vpop.permute.xlu0 %291
        %295 = vset.pattern.permute.xlu0 0
        %296 = vperm.xlu0 %295, %v288
        %v297 = vpop.permute.xlu0 %296
        %v300 = vlaneseq
        %v301 = vshrl.u32 %v300, 7
        %v302 = vsub.s32 0, %v301
        %v303 = vrot.slane %v286, %v302
        %v304 = vlaneseq
        %v305 = vshrl.u32 %v304, 7
        %v306 = vsub.s32 1, %v305
        %v307 = vrot.slane %v286, %v306
        %v308 = vlaneseq
        %v309 = vshrl.u32 %v308, 7
        %v310 = vsub.s32 2, %v309
        %v311 = vrot.slane %v286, %v310
        %v312 = vlaneseq
        %v313 = vshrl.u32 %v312, 7
        %v314 = vsub.s32 3, %v313
        %v315 = vrot.slane %v286, %v314
        %v316 = vlaneseq
        %v317 = vshrl.u32 %v316, 7
        %v318 = vsub.s32 4, %v317
        %v319 = vrot.slane %v286, %v318
        %v320 = vlaneseq
        %v321 = vshrl.u32 %v320, 7
        %v322 = vsub.s32 5, %v321
        %v323 = vrot.slane %v286, %v322
        %v324 = vlaneseq
        %v325 = vshrl.u32 %v324, 7
        %v326 = vsub.s32 6, %v325
        %v327 = vrot.slane %v286, %v326
        %v328 = vlaneseq
        %v329 = vshrl.u32 %v328, 7
        %v330 = vsub.s32 7, %v329
        %v331 = vrot.slane %v286, %v330
        %v340 = vmul.f32 %v292, %v303
        %v341 = vmul.f32 %v292, %v307
        %v342 = vmul.f32 %v292, %v311
        %v343 = vmul.f32 %v292, %v315
        %v344 = vmul.f32 %v292, %v319
        %v345 = vmul.f32 %v292, %v323
        %v346 = vmul.f32 %v292, %v327
        %v347 = vmul.f32 %v292, %v331
        %v348 = vmul.f32 %v297, %v303
        %v349 = vmul.f32 %v297, %v307
        %v350 = vmul.f32 %v297, %v311
        %v351 = vmul.f32 %v297, %v315
        %v352 = vmul.f32 %v297, %v319
        %v353 = vmul.f32 %v297, %v323
        %v354 = vmul.f32 %v297, %v327
        %v355 = vmul.f32 %v297, %v331
        %v356 = vld [vmem:[%s3] sm:$0xff]
        %v357 = vld [vmem:[%s3 + $0x8] sm:$0x3]
        %359 = vset.pattern.permute.xlu0 0
        %360 = vperm.xlu0 %359, %v356
        %v361 = vpop.permute.xlu0 %360
        %364 = vset.pattern.permute.xlu0 0
        %365 = vperm.xlu0 %364, %v357
        %v366 = vpop.permute.xlu0 %365
        %v368 = vadd.f32 %v340, %v361
        %v369 = vadd.f32 %v341, %v361
        %v370 = vadd.f32 %v342, %v361
        %v371 = vadd.f32 %v343, %v361
        %v372 = vadd.f32 %v344, %v361
        %v373 = vadd.f32 %v345, %v361
        %v374 = vadd.f32 %v346, %v361
        %v375 = vadd.f32 %v347, %v361
        %v376 = vadd.f32 %v348, %v366
        %v377 = vadd.f32 %v349, %v366
        %v378 = vadd.f32 %v350, %v366
        %v379 = vadd.f32 %v351, %v366
        %v380 = vadd.f32 %v352, %v366
        %v381 = vadd.f32 %v353, %v366
        %v382 = vadd.f32 %v354, %v366
        %v383 = vadd.f32 %v355, %v366
        %v384 = vpack.c.bf16 %v376, %v368
        %v385 = vpack.c.bf16 %v377, %v369
        %v386 = vpack.c.bf16 %v378, %v370
        %v387 = vpack.c.bf16 %v379, %v371
        %v388 = vpack.c.bf16 %v380, %v372
        %v389 = vpack.c.bf16 %v381, %v373
        %v390 = vpack.c.bf16 %v382, %v374
        %v391 = vpack.c.bf16 %v383, %v375
        %v400 = vunpack.c.l.b16 %v384
        %v401 = vunpack.c.l.b16 %v385
        %v402 = vunpack.c.l.b16 %v386
        %v403 = vunpack.c.l.b16 %v387
        %v404 = vunpack.c.l.b16 %v388
        %v405 = vunpack.c.l.b16 %v389
        %v406 = vunpack.c.l.b16 %v390
        %v407 = vunpack.c.l.b16 %v391
        %v408 = vunpack.c.h.b16 %v384
        %v409 = vunpack.c.h.b16 %v385
        %v410 = vunpack.c.h.b16 %v386
        %v411 = vunpack.c.h.b16 %v387
        %v412 = vunpack.c.h.b16 %v388
        %v413 = vunpack.c.h.b16 %v389
        %v414 = vunpack.c.h.b16 %v390
        %v415 = vunpack.c.h.b16 %v391
        %v416 = vpack.c.b16 %v401, %v400
        %v417 = vpack.c.b16 %v403, %v402
        %v418 = vpack.c.b16 %v405, %v404
        %v419 = vpack.c.b16 %v407, %v406
        %v420 = vpack.c.b16 %v409, %v408
        %v421 = vpack.c.b16 %v411, %v410
        %v422 = vpack.c.b16 %v413, %v412
        %v423 = vpack.c.b16 %v415, %v414
        %432 = vst [vmem:[%s278] sm:$0xff] %v416
        %433 = vst [vmem:[%s278 + $0x8] sm:$0xff] %v417
        %434 = vst [vmem:[%s278 + $0x10] sm:$0xff] %v418
        %435 = vst [vmem:[%s278 + $0x18] sm:$0xff] %v419
        %436 = vst [vmem:[%s278 + $0x20] sm:$0x11] %v420
        %437 = vst [vmem:[%s278 + $0x28] sm:$0x11] %v421
        %438 = vst [vmem:[%s278 + $0x30] sm:$0x11] %v422
        %439 = vst [vmem:[%s278 + $0x38] sm:$0x11] %v423
        %v440 = vtanh.pop %v368
        %v441 = vtanh.pop %v369
        %v442 = vtanh.pop %v370
        %v443 = vtanh.pop %v371
        %v444 = vtanh.pop %v372
        %v445 = vtanh.pop %v373
        %v446 = vtanh.pop %v374
        %v447 = vtanh.pop %v375
        %v448 = vtanh.pop %v376
        %v449 = vtanh.pop %v377
        %v450 = vtanh.pop %v378
        %v451 = vtanh.pop %v379
        %v452 = vtanh.pop %v380
        %v453 = vtanh.pop %v381
        %v454 = vtanh.pop %v382
        %v455 = vtanh.pop %v383
        %v456 = vpack.c.bf16 %v448, %v440
        %v457 = vpack.c.bf16 %v449, %v441
        %v458 = vpack.c.bf16 %v450, %v442
        %v459 = vpack.c.bf16 %v451, %v443
        %v460 = vpack.c.bf16 %v452, %v444
        %v461 = vpack.c.bf16 %v453, %v445
        %v462 = vpack.c.bf16 %v454, %v446
        %v463 = vpack.c.bf16 %v455, %v447
        %v472 = vunpack.c.l.b16 %v456
        %v473 = vunpack.c.l.b16 %v457
        %v474 = vunpack.c.l.b16 %v458
        %v475 = vunpack.c.l.b16 %v459
        %v476 = vunpack.c.l.b16 %v460
        %v477 = vunpack.c.l.b16 %v461
        %v478 = vunpack.c.l.b16 %v462
        %v479 = vunpack.c.l.b16 %v463
        %v480 = vunpack.c.h.b16 %v456
        %v481 = vunpack.c.h.b16 %v457
        %v482 = vunpack.c.h.b16 %v458
        %v483 = vunpack.c.h.b16 %v459
        %v484 = vunpack.c.h.b16 %v460
        %v485 = vunpack.c.h.b16 %v461
        %v486 = vunpack.c.h.b16 %v462
        %v487 = vunpack.c.h.b16 %v463
        %v488 = vpack.c.b16 %v473, %v472
        %v489 = vpack.c.b16 %v475, %v474
        %v490 = vpack.c.b16 %v477, %v476
        %v491 = vpack.c.b16 %v479, %v478
        %v492 = vpack.c.b16 %v481, %v480
        %v493 = vpack.c.b16 %v483, %v482
        %v494 = vpack.c.b16 %v485, %v484
        %v495 = vpack.c.b16 %v487, %v486
        %s504 = scalar_lea.vmem %s278, 512 [#allocation5]
        %505 = vst [vmem:[%s504] sm:$0xff] %v488
        %506 = vst [vmem:[%s504 + $0x8] sm:$0xff] %v489
        %507 = vst [vmem:[%s504 + $0x10] sm:$0xff] %v490
        %508 = vst [vmem:[%s504 + $0x18] sm:$0xff] %v491
        %509 = vst [vmem:[%s504 + $0x20] sm:$0x11] %v492
        %510 = vst [vmem:[%s504 + $0x28] sm:$0x11] %v493
        %511 = vst [vmem:[%s504 + $0x30] sm:$0x11] %v494
        %512 = vst [vmem:[%s504 + $0x38] sm:$0x11] %v495
        %v513 = vld [vmem:[%s2] sm:$0xff]
        %v514 = vld [vmem:[%s2 + $0x8] sm:$0x3]
        %s515 = scalar_lea.vmem %s3, 16
        %v516 = vld [vmem:[%s515] sm:$0xff]
        %v517 = vld [vmem:[%s515 + $0x8] sm:$0x3]
        %519 = vset.pattern.permute.xlu0 0
        %520 = vperm.xlu0 %519, %v516
        %v521 = vpop.permute.xlu0 %520
        %524 = vset.pattern.permute.xlu0 0
        %525 = vperm.xlu0 %524, %v517
        %v526 = vpop.permute.xlu0 %525
        %vm528 = vcmask 80896
        %v530 = vsel %vm528, %v513, 0
        %v533 = vsel %vm528, %v514, 0
        %vm535 = vcmask 1041408
        %v537 = vsel %vm535, %v448, 0
        %v540 = vsel %vm535, %v449, 0
        %v543 = vsel %vm535, %v450, 0
        %v546 = vsel %vm535, %v451, 0
        %v549 = vsel %vm535, %v452, 0
        %v552 = vsel %vm535, %v453, 0
        %v555 = vsel %vm535, %v454, 0
        %v558 = vsel %vm535, %v455, 0
        %560 = vmatprep.subr.mxu0 0.0
        %561 = vmatpush1.msra.mxu0 0.0
        %562 = vmatprep.subr.mxu0 0.0
        %563 = vmatpush1.msra.mxu0 0.0
        %564 = vmatprep.subr.mxu0 0.0
        %565 = vmatpush1.msra.mxu0 0.0
        %566 = vmatprep.subr.mxu0 0.0
        %567 = vmatpush1.msra.mxu0 0.0
        %568 = vmatprep.subr.mxu0 0.0
        %569 = vmatpush1.msra.mxu0 0.0
        %570 = vmatprep.subr.mxu0 0.0
        %571 = vmatpush1.msra.mxu0 0.0
        %572 = vmatprep.subr.mxu0 0.0
        %573 = vmatpush1.msra.mxu0 0.0
        %574 = vmatprep.subr.mxu0 0.0
        %575 = vmatpush1.msra.mxu0 0.0
        %576 = vmatprep.subr.mxu0 0.0
        %577 = vmatpush1.msra.mxu0 0.0
        %578 = vmatprep.subr.mxu0 0.0
        %579 = vmatpush1.msra.mxu0 0.0
        %580 = vmatprep.subr.mxu0 0.0
        %581 = vmatpush1.msra.mxu0 0.0
        %582 = vmatprep.subr.mxu0 0.0
        %583 = vmatpush1.msra.mxu0 0.0
        %584 = vmatprep.subr.mxu0 0.0
        %585 = vmatpush1.msra.mxu0 0.0
        %586 = vmatprep.subr.mxu0 0.0
        %587 = vmatpush1.msra.mxu0 0.0
        %588 = vmatprep.subr.mxu0 %v540
        %589 = vmatpush1.msra.mxu0 %v537
        %590 = vmatprep.subr.mxu0 %v441
        %591 = vmatpush1.msra.mxu0 %v440
        %592 = vmatprep.subr.mxu0 0.0
        %593 = vmatpush2.msra.mxu0 0.0
        %594 = vmatprep.subr.mxu0 0.0
        %595 = vmatpush2.msra.mxu0 0.0
        %596 = vmatprep.subr.mxu0 0.0
        %597 = vmatpush2.msra.mxu0 0.0
        %598 = vmatprep.subr.mxu0 0.0
        %599 = vmatpush2.msra.mxu0 0.0
        %600 = vmatprep.subr.mxu0 0.0
        %601 = vmatpush2.msra.mxu0 0.0
        %602 = vmatprep.subr.mxu0 0.0
        %603 = vmatpush2.msra.mxu0 0.0
        %604 = vmatprep.subr.mxu0 0.0
        %605 = vmatpush2.msra.mxu0 0.0
        %606 = vmatprep.subr.mxu0 0.0
        %607 = vmatpush2.msra.mxu0 0.0
        %608 = vmatprep.subr.mxu0 0.0
        %609 = vmatpush2.msra.mxu0 0.0
        %610 = vmatprep.subr.mxu0 0.0
        %611 = vmatpush2.msra.mxu0 0.0
        %612 = vmatprep.subr.mxu0 0.0
        %613 = vmatpush2.msra.mxu0 0.0
        %614 = vmatprep.subr.mxu0 0.0
        %615 = vmatpush2.msra.mxu0 0.0
        %616 = vmatprep.subr.mxu0 0.0
        %617 = vmatpush2.msra.mxu0 0.0
        %618 = vmatprep.subr.mxu0 0.0
        %619 = vmatpush2.msra.mxu0 0.0
        %620 = vmatprep.subr.mxu0 0.0
        %621 = vmatpush2.msra.mxu0 0.0
        %622 = vmatprep.subr.mxu0 0.0
        %623 = vmatpush2.msra.mxu0 0.0
        %624 = vmatprep.mubr.f32.mxu0 0.0
        %625 = vmatmul.mubr.f32.gmra.mxu0 %v530
        %v626 = vpop.f32.mrf.mxu0
        %v627 = vadd.f32 %v521, %v626
        %v628 = vpop.f32.mrf.mxu0
        %v629 = vadd.f32 %v521, %v628
        %630 = vmatprep.mubr.f32.mxu0 0.0
        %631 = vmatmul.mubr.f32.gmra.mxu0 %v533
        %v632 = vpop.f32.mrf.mxu0
        %v633 = vadd.f32 %v526, %v632
        %v634 = vpop.f32.mrf.mxu0
        %v635 = vadd.f32 %v526, %v634
        %636 = vdwg.mxu0
        %637 = vmatprep.subr.mxu0 0.0
        %638 = vmatpush1.msra.mxu0 0.0
        %639 = vmatprep.subr.mxu0 0.0
        %640 = vmatpush1.msra.mxu0 0.0
        %641 = vmatprep.subr.mxu0 0.0
        %642 = vmatpush1.msra.mxu0 0.0
        %643 = vmatprep.subr.mxu0 0.0
        %644 = vmatpush1.msra.mxu0 0.0
        %645 = vmatprep.subr.mxu0 0.0
        %646 = vmatpush1.msra.mxu0 0.0
        %647 = vmatprep.subr.mxu0 0.0
        %648 = vmatpush1.msra.mxu0 0.0
        %649 = vmatprep.subr.mxu0 0.0
        %650 = vmatpush1.msra.mxu0 0.0
        %651 = vmatprep.subr.mxu0 0.0
        %652 = vmatpush1.msra.mxu0 0.0
        %653 = vmatprep.subr.mxu0 0.0
        %654 = vmatpush1.msra.mxu0 0.0
        %655 = vmatprep.subr.mxu0 0.0
        %656 = vmatpush1.msra.mxu0 0.0
        %657 = vmatprep.subr.mxu0 0.0
        %658 = vmatpush1.msra.mxu0 0.0
        %659 = vmatprep.subr.mxu0 0.0
        %660 = vmatpush1.msra.mxu0 0.0
        %661 = vmatprep.subr.mxu0 0.0
        %662 = vmatpush1.msra.mxu0 0.0
        %663 = vmatprep.subr.mxu0 0.0
        %664 = vmatpush1.msra.mxu0 0.0
        %665 = vmatprep.subr.mxu0 %v546
        %666 = vmatpush1.msra.mxu0 %v543
        %667 = vmatprep.subr.mxu0 %v443
        %668 = vmatpush1.msra.mxu0 %v442
        %669 = vmatprep.subr.mxu0 0.0
        %670 = vmatpush2.msra.mxu0 0.0
        %671 = vmatprep.subr.mxu0 0.0
        %672 = vmatpush2.msra.mxu0 0.0
        %673 = vmatprep.subr.mxu0 0.0
        %674 = vmatpush2.msra.mxu0 0.0
        %675 = vmatprep.subr.mxu0 0.0
        %676 = vmatpush2.msra.mxu0 0.0
        %677 = vmatprep.subr.mxu0 0.0
        %678 = vmatpush2.msra.mxu0 0.0
        %679 = vmatprep.subr.mxu0 0.0
        %680 = vmatpush2.msra.mxu0 0.0
        %681 = vmatprep.subr.mxu0 0.0
        %682 = vmatpush2.msra.mxu0 0.0
        %683 = vmatprep.subr.mxu0 0.0
        %684 = vmatpush2.msra.mxu0 0.0
        %685 = vmatprep.subr.mxu0 0.0
        %686 = vmatpush2.msra.mxu0 0.0
        %687 = vmatprep.subr.mxu0 0.0
        %688 = vmatpush2.msra.mxu0 0.0
        %689 = vmatprep.subr.mxu0 0.0
        %690 = vmatpush2.msra.mxu0 0.0
        %691 = vmatprep.subr.mxu0 0.0
        %692 = vmatpush2.msra.mxu0 0.0
        %693 = vmatprep.subr.mxu0 0.0
        %694 = vmatpush2.msra.mxu0 0.0
        %695 = vmatprep.subr.mxu0 0.0
        %696 = vmatpush2.msra.mxu0 0.0
        %697 = vmatprep.subr.mxu0 0.0
        %698 = vmatpush2.msra.mxu0 0.0
        %699 = vmatprep.subr.mxu0 0.0
        %700 = vmatpush2.msra.mxu0 0.0
        %701 = vmatprep.mubr.f32.mxu0 0.0
        %702 = vmatmul.mubr.f32.gmra.mxu0 %v530
        %v703 = vpop.f32.mrf.mxu0
        %v704 = vadd.f32 %v521, %v703
        %v705 = vpop.f32.mrf.mxu0
        %v706 = vadd.f32 %v521, %v705
        %707 = vmatprep.mubr.f32.mxu0 0.0
        %708 = vmatmul.mubr.f32.gmra.mxu0 %v533
        %v709 = vpop.f32.mrf.mxu0
        %v710 = vadd.f32 %v526, %v709
        %v711 = vpop.f32.mrf.mxu0
        %v712 = vadd.f32 %v526, %v711
        %713 = vdwg.mxu0
        %714 = vmatprep.subr.mxu0 0.0
        %715 = vmatpush1.msra.mxu0 0.0
        %716 = vmatprep.subr.mxu0 0.0
        %717 = vmatpush1.msra.mxu0 0.0
        %718 = vmatprep.subr.mxu0 0.0
        %719 = vmatpush1.msra.mxu0 0.0
        %720 = vmatprep.subr.mxu0 0.0
        %721 = vmatpush1.msra.mxu0 0.0
        %722 = vmatprep.subr.mxu0 0.0
        %723 = vmatpush1.msra.mxu0 0.0
        %724 = vmatprep.subr.mxu0 0.0
        %725 = vmatpush1.msra.mxu0 0.0
        %726 = vmatprep.subr.mxu0 0.0
        %727 = vmatpush1.msra.mxu0 0.0
        %728 = vmatprep.subr.mxu0 0.0
        %729 = vmatpush1.msra.mxu0 0.0
        %730 = vmatprep.subr.mxu0 0.0
        %731 = vmatpush1.msra.mxu0 0.0
        %732 = vmatprep.subr.mxu0 0.0
        %733 = vmatpush1.msra.mxu0 0.0
        %734 = vmatprep.subr.mxu0 0.0
        %735 = vmatpush1.msra.mxu0 0.0
        %736 = vmatprep.subr.mxu0 0.0
        %737 = vmatpush1.msra.mxu0 0.0
        %738 = vmatprep.subr.mxu0 0.0
        %739 = vmatpush1.msra.mxu0 0.0
        %740 = vmatprep.subr.mxu0 0.0
        %741 = vmatpush1.msra.mxu0 0.0
        %742 = vmatprep.subr.mxu0 %v552
        %743 = vmatpush1.msra.mxu0 %v549
        %744 = vmatprep.subr.mxu0 %v445
        %745 = vmatpush1.msra.mxu0 %v444
        %746 = vmatprep.subr.mxu0 0.0
        %747 = vmatpush2.msra.mxu0 0.0
        %748 = vmatprep.subr.mxu0 0.0
        %749 = vmatpush2.msra.mxu0 0.0
        %750 = vmatprep.subr.mxu0 0.0
        %751 = vmatpush2.msra.mxu0 0.0
        %752 = vmatprep.subr.mxu0 0.0
        %753 = vmatpush2.msra.mxu0 0.0
        %754 = vmatprep.subr.mxu0 0.0
        %755 = vmatpush2.msra.mxu0 0.0
        %756 = vmatprep.subr.mxu0 0.0
        %757 = vmatpush2.msra.mxu0 0.0
        %758 = vmatprep.subr.mxu0 0.0
        %759 = vmatpush2.msra.mxu0 0.0
        %760 = vmatprep.subr.mxu0 0.0
        %761 = vmatpush2.msra.mxu0 0.0
        %762 = vmatprep.subr.mxu0 0.0
        %763 = vmatpush2.msra.mxu0 0.0
        %764 = vmatprep.subr.mxu0 0.0
        %765 = vmatpush2.msra.mxu0 0.0
        %766 = vmatprep.subr.mxu0 0.0
        %767 = vmatpush2.msra.mxu0 0.0
        %768 = vmatprep.subr.mxu0 0.0
        %769 = vmatpush2.msra.mxu0 0.0
        %770 = vmatprep.subr.mxu0 0.0
        %771 = vmatpush2.msra.mxu0 0.0
        %772 = vmatprep.subr.mxu0 0.0
        %773 = vmatpush2.msra.mxu0 0.0
        %774 = vmatprep.subr.mxu0 0.0
        %775 = vmatpush2.msra.mxu0 0.0
        %776 = vmatprep.subr.mxu0 0.0
        %777 = vmatpush2.msra.mxu0 0.0
        %778 = vmatprep.mubr.f32.mxu0 0.0
        %779 = vmatmul.mubr.f32.gmra.mxu0 %v530
        %v780 = vpop.f32.mrf.mxu0
        %v781 = vadd.f32 %v521, %v780
        %v782 = vpop.f32.mrf.mxu0
        %v783 = vadd.f32 %v521, %v782
        %784 = vmatprep.mubr.f32.mxu0 0.0
        %785 = vmatmul.mubr.f32.gmra.mxu0 %v533
        %v786 = vpop.f32.mrf.mxu0
        %v787 = vadd.f32 %v526, %v786
        %v788 = vpop.f32.mrf.mxu0
        %v789 = vadd.f32 %v526, %v788
        %790 = vdwg.mxu0
        %791 = vmatprep.subr.mxu0 0.0
        %792 = vmatpush1.msra.mxu0 0.0
        %793 = vmatprep.subr.mxu0 0.0
        %794 = vmatpush1.msra.mxu0 0.0
        %795 = vmatprep.subr.mxu0 0.0
        %796 = vmatpush1.msra.mxu0 0.0
        %797 = vmatprep.subr.mxu0 0.0
        %798 = vmatpush1.msra.mxu0 0.0
        %799 = vmatprep.subr.mxu0 0.0
        %800 = vmatpush1.msra.mxu0 0.0
        %801 = vmatprep.subr.mxu0 0.0
        %802 = vmatpush1.msra.mxu0 0.0
        %803 = vmatprep.subr.mxu0 0.0
        %804 = vmatpush1.msra.mxu0 0.0
        %805 = vmatprep.subr.mxu0 0.0
        %806 = vmatpush1.msra.mxu0 0.0
        %807 = vmatprep.subr.mxu0 0.0
        %808 = vmatpush1.msra.mxu0 0.0
        %809 = vmatprep.subr.mxu0 0.0
        %810 = vmatpush1.msra.mxu0 0.0
        %811 = vmatprep.subr.mxu0 0.0
        %812 = vmatpush1.msra.mxu0 0.0
        %813 = vmatprep.subr.mxu0 0.0
        %814 = vmatpush1.msra.mxu0 0.0
        %815 = vmatprep.subr.mxu0 0.0
        %816 = vmatpush1.msra.mxu0 0.0
        %817 = vmatprep.subr.mxu0 0.0
        %818 = vmatpush1.msra.mxu0 0.0
        %819 = vmatprep.subr.mxu0 %v558
        %820 = vmatpush1.msra.mxu0 %v555
        %821 = vmatprep.subr.mxu0 %v447
        %822 = vmatpush1.msra.mxu0 %v446
        %823 = vmatprep.subr.mxu0 0.0
        %824 = vmatpush2.msra.mxu0 0.0
        %825 = vmatprep.subr.mxu0 0.0
        %826 = vmatpush2.msra.mxu0 0.0
        %827 = vmatprep.subr.mxu0 0.0
        %828 = vmatpush2.msra.mxu0 0.0
        %829 = vmatprep.subr.mxu0 0.0
        %830 = vmatpush2.msra.mxu0 0.0
        %831 = vmatprep.subr.mxu0 0.0
        %832 = vmatpush2.msra.mxu0 0.0
        %833 = vmatprep.subr.mxu0 0.0
        %834 = vmatpush2.msra.mxu0 0.0
        %835 = vmatprep.subr.mxu0 0.0
        %836 = vmatpush2.msra.mxu0 0.0
        %837 = vmatprep.subr.mxu0 0.0
        %838 = vmatpush2.msra.mxu0 0.0
        %839 = vmatprep.subr.mxu0 0.0
        %840 = vmatpush2.msra.mxu0 0.0
        %841 = vmatprep.subr.mxu0 0.0
        %842 = vmatpush2.msra.mxu0 0.0
        %843 = vmatprep.subr.mxu0 0.0
        %844 = vmatpush2.msra.mxu0 0.0
        %845 = vmatprep.subr.mxu0 0.0
        %846 = vmatpush2.msra.mxu0 0.0
        %847 = vmatprep.subr.mxu0 0.0
        %848 = vmatpush2.msra.mxu0 0.0
        %849 = vmatprep.subr.mxu0 0.0
        %850 = vmatpush2.msra.mxu0 0.0
        %851 = vmatprep.subr.mxu0 0.0
        %852 = vmatpush2.msra.mxu0 0.0
        %853 = vmatprep.subr.mxu0 0.0
        %854 = vmatpush2.msra.mxu0 0.0
        %855 = vmatprep.mubr.f32.mxu0 0.0
        %856 = vmatmul.mubr.f32.gmra.mxu0 %v530
        %v857 = vpop.f32.mrf.mxu0
        %v858 = vadd.f32 %v521, %v857
        %v859 = vpop.f32.mrf.mxu0
        %v860 = vadd.f32 %v521, %v859
        %861 = vmatprep.mubr.f32.mxu0 0.0
        %862 = vmatmul.mubr.f32.gmra.mxu0 %v533
        %v863 = vpop.f32.mrf.mxu0
        %v864 = vadd.f32 %v526, %v863
        %v865 = vpop.f32.mrf.mxu0
        %v866 = vadd.f32 %v526, %v865
        %867 = vdwg.mxu0
        %v868 = vpack.c.bf16 %v633, %v627
        %v869 = vpack.c.bf16 %v635, %v629
        %v870 = vpack.c.bf16 %v710, %v704
        %v871 = vpack.c.bf16 %v712, %v706
        %v872 = vpack.c.bf16 %v787, %v781
        %v873 = vpack.c.bf16 %v789, %v783
        %v874 = vpack.c.bf16 %v864, %v858
        %v875 = vpack.c.bf16 %v866, %v860
        %v884 = vunpack.c.l.b16 %v868
        %v885 = vunpack.c.l.b16 %v869
        %v886 = vunpack.c.l.b16 %v870
        %v887 = vunpack.c.l.b16 %v871
        %v888 = vunpack.c.l.b16 %v872
        %v889 = vunpack.c.l.b16 %v873
        %v890 = vunpack.c.l.b16 %v874
        %v891 = vunpack.c.l.b16 %v875
        %v892 = vunpack.c.h.b16 %v868
        %v893 = vunpack.c.h.b16 %v869
        %v894 = vunpack.c.h.b16 %v870
        %v895 = vunpack.c.h.b16 %v871
        %v896 = vunpack.c.h.b16 %v872
        %v897 = vunpack.c.h.b16 %v873
        %v898 = vunpack.c.h.b16 %v874
        %v899 = vunpack.c.h.b16 %v875
        %v900 = vpack.c.b16 %v885, %v884
        %v901 = vpack.c.b16 %v887, %v886
        %v902 = vpack.c.b16 %v889, %v888
        %v903 = vpack.c.b16 %v891, %v890
        %v904 = vpack.c.b16 %v893, %v892
        %v905 = vpack.c.b16 %v895, %v894
        %v906 = vpack.c.b16 %v897, %v896
        %v907 = vpack.c.b16 %v899, %v898
        %s916 = scalar_lea.vmem %s278, 64 [#allocation5]
        %917 = vst [vmem:[%s916] sm:$0xff] %v900
        %918 = vst [vmem:[%s916 + $0x8] sm:$0xff] %v901
        %919 = vst [vmem:[%s916 + $0x10] sm:$0xff] %v902
        %920 = vst [vmem:[%s916 + $0x18] sm:$0xff] %v903
        %921 = vst [vmem:[%s916 + $0x20] sm:$0x11] %v904
        %922 = vst [vmem:[%s916 + $0x28] sm:$0x11] %v905
        %923 = vst [vmem:[%s916 + $0x30] sm:$0x11] %v906
        %924 = vst [vmem:[%s916 + $0x38] sm:$0x11] %v907
        %v925 = vtanh.pop %v627
        %v926 = vtanh.pop %v629
        %v927 = vtanh.pop %v704
        %v928 = vtanh.pop %v706
        %v929 = vtanh.pop %v781
        %v930 = vtanh.pop %v783
        %v931 = vtanh.pop %v858
        %v932 = vtanh.pop %v860
        %v933 = vtanh.pop %v633
        %v934 = vtanh.pop %v635
        %v935 = vtanh.pop %v710
        %v936 = vtanh.pop %v712
        %v937 = vtanh.pop %v787
        %v938 = vtanh.pop %v789
        %v939 = vtanh.pop %v864
        %v940 = vtanh.pop %v866
        %v941 = vpack.c.bf16 %v933, %v925
        %v942 = vpack.c.bf16 %v934, %v926
        %v943 = vpack.c.bf16 %v935, %v927
        %v944 = vpack.c.bf16 %v936, %v928
        %v945 = vpack.c.bf16 %v937, %v929
        %v946 = vpack.c.bf16 %v938, %v930
        %v947 = vpack.c.bf16 %v939, %v931
        %v948 = vpack.c.bf16 %v940, %v932
        %v957 = vunpack.c.l.b16 %v941
        %v958 = vunpack.c.l.b16 %v942
        %v959 = vunpack.c.l.b16 %v943
        %v960 = vunpack.c.l.b16 %v944
        %v961 = vunpack.c.l.b16 %v945
        %v962 = vunpack.c.l.b16 %v946
        %v963 = vunpack.c.l.b16 %v947
        %v964 = vunpack.c.l.b16 %v948
        %v965 = vunpack.c.h.b16 %v941
        %v966 = vunpack.c.h.b16 %v942
        %v967 = vunpack.c.h.b16 %v943
        %v968 = vunpack.c.h.b16 %v944
        %v969 = vunpack.c.h.b16 %v945
        %v970 = vunpack.c.h.b16 %v946
        %v971 = vunpack.c.h.b16 %v947
        %v972 = vunpack.c.h.b16 %v948
        %v973 = vpack.c.b16 %v958, %v957
        %v974 = vpack.c.b16 %v960, %v959
        %v975 = vpack.c.b16 %v962, %v961
        %v976 = vpack.c.b16 %v964, %v963
        %v977 = vpack.c.b16 %v966, %v965
        %v978 = vpack.c.b16 %v968, %v967
        %v979 = vpack.c.b16 %v970, %v969
        %v980 = vpack.c.b16 %v972, %v971
        %s989 = scalar_lea.vmem %s278, 576 [#allocation5]
        %990 = vst [vmem:[%s989] sm:$0xff] %v973
        %991 = vst [vmem:[%s989 + $0x8] sm:$0xff] %v974
        %992 = vst [vmem:[%s989 + $0x10] sm:$0xff] %v975
        %993 = vst [vmem:[%s989 + $0x18] sm:$0xff] %v976
        %994 = vst [vmem:[%s989 + $0x20] sm:$0x11] %v977
        %995 = vst [vmem:[%s989 + $0x28] sm:$0x11] %v978
        %996 = vst [vmem:[%s989 + $0x30] sm:$0x11] %v979
        %997 = vst [vmem:[%s989 + $0x38] sm:$0x11] %v980
        %s998 = scalar_lea.vmem %s2, 16
        %v999 = vld [vmem:[%s998] sm:$0xff]
        %v1000 = vld [vmem:[%s998 + $0x8] sm:$0x3]
        %s1001 = scalar_lea.vmem %s3, 32
        %v1002 = vld [vmem:[%s1001] sm:$0xff]
        %v1003 = vld [vmem:[%s1001 + $0x8] sm:$0x3]
        %1005 = vset.pattern.permute.xlu0 0
        %1006 = vperm.xlu0 %1005, %v1002
        %v1007 = vpop.permute.xlu0 %1006
        %1010 = vset.pattern.permute.xlu0 0
        %1011 = vperm.xlu0 %1010, %v1003
        %v1012 = vpop.permute.xlu0 %1011
        %v1015 = vsel %vm528, %v999, 0
        %v1018 = vsel %vm528, %v1000, 0
        %v1021 = vsel %vm535, %v933, 0
        %v1024 = vsel %vm535, %v934, 0
        %v1027 = vsel %vm535, %v935, 0
        %v1030 = vsel %vm535, %v936, 0
        %v1033 = vsel %vm535, %v937, 0
        %v1036 = vsel %vm535, %v938, 0
        %v1039 = vsel %vm535, %v939, 0
        %v1042 = vsel %vm535, %v940, 0
        %1044 = vmatprep.subr.mxu0 0.0
        %1045 = vmatpush1.msra.mxu0 0.0
        %1046 = vmatprep.subr.mxu0 0.0
        %1047 = vmatpush1.msra.mxu0 0.0
        %1048 = vmatprep.subr.mxu0 0.0
        %1049 = vmatpush1.msra.mxu0 0.0
        %1050 = vmatprep.subr.mxu0 0.0
        %1051 = vmatpush1.msra.mxu0 0.0
        %1052 = vmatprep.subr.mxu0 0.0
        %1053 = vmatpush1.msra.mxu0 0.0
        %1054 = vmatprep.subr.mxu0 0.0
        %1055 = vmatpush1.msra.mxu0 0.0
        %1056 = vmatprep.subr.mxu0 0.0
        %1057 = vmatpush1.msra.mxu0 0.0
        %1058 = vmatprep.subr.mxu0 0.0
        %1059 = vmatpush1.msra.mxu0 0.0
        %1060 = vmatprep.subr.mxu0 0.0
        %1061 = vmatpush1.msra.mxu0 0.0
        %1062 = vmatprep.subr.mxu0 0.0
        %1063 = vmatpush1.msra.mxu0 0.0
        %1064 = vmatprep.subr.mxu0 0.0
        %1065 = vmatpush1.msra.mxu0 0.0
        %1066 = vmatprep.subr.mxu0 0.0
        %1067 = vmatpush1.msra.mxu0 0.0
        %1068 = vmatprep.subr.mxu0 0.0
        %1069 = vmatpush1.msra.mxu0 0.0
        %1070 = vmatprep.subr.mxu0 0.0
        %1071 = vmatpush1.msra.mxu0 0.0
        %1072 = vmatprep.subr.mxu0 %v1024
        %1073 = vmatpush1.msra.mxu0 %v1021
        %1074 = vmatprep.subr.mxu0 %v926
        %1075 = vmatpush1.msra.mxu0 %v925
        %1076 = vmatprep.subr.mxu0 0.0
        %1077 = vmatpush2.msra.mxu0 0.0
        %1078 = vmatprep.subr.mxu0 0.0
        %1079 = vmatpush2.msra.mxu0 0.0
        %1080 = vmatprep.subr.mxu0 0.0
        %1081 = vmatpush2.msra.mxu0 0.0
        %1082 = vmatprep.subr.mxu0 0.0
        %1083 = vmatpush2.msra.mxu0 0.0
        %1084 = vmatprep.subr.mxu0 0.0
        %1085 = vmatpush2.msra.mxu0 0.0
        %1086 = vmatprep.subr.mxu0 0.0
        %1087 = vmatpush2.msra.mxu0 0.0
        %1088 = vmatprep.subr.mxu0 0.0
        %1089 = vmatpush2.msra.mxu0 0.0
        %1090 = vmatprep.subr.mxu0 0.0
        %1091 = vmatpush2.msra.mxu0 0.0
        %1092 = vmatprep.subr.mxu0 0.0
        %1093 = vmatpush2.msra.mxu0 0.0
        %1094 = vmatprep.subr.mxu0 0.0
        %1095 = vmatpush2.msra.mxu0 0.0
        %1096 = vmatprep.subr.mxu0 0.0
        %1097 = vmatpush2.msra.mxu0 0.0
        %1098 = vmatprep.subr.mxu0 0.0
        %1099 = vmatpush2.msra.mxu0 0.0
        %1100 = vmatprep.subr.mxu0 0.0
        %1101 = vmatpush2.msra.mxu0 0.0
        %1102 = vmatprep.subr.mxu0 0.0
        %1103 = vmatpush2.msra.mxu0 0.0
        %1104 = vmatprep.subr.mxu0 0.0
        %1105 = vmatpush2.msra.mxu0 0.0
        %1106 = vmatprep.subr.mxu0 0.0
        %1107 = vmatpush2.msra.mxu0 0.0
        %1108 = vmatprep.mubr.f32.mxu0 0.0
        %1109 = vmatmul.mubr.f32.gmra.mxu0 %v1015
        %v1110 = vpop.f32.mrf.mxu0
        %v1111 = vadd.f32 %v1007, %v1110
        %v1112 = vpop.f32.mrf.mxu0
        %v1113 = vadd.f32 %v1007, %v1112
        %1114 = vmatprep.mubr.f32.mxu0 0.0
        %1115 = vmatmul.mubr.f32.gmra.mxu0 %v1018
        %v1116 = vpop.f32.mrf.mxu0
        %v1117 = vadd.f32 %v1012, %v1116
        %v1118 = vpop.f32.mrf.mxu0
        %v1119 = vadd.f32 %v1012, %v1118
        %1120 = vdwg.mxu0
        %1121 = vmatprep.subr.mxu0 0.0
        %1122 = vmatpush1.msra.mxu0 0.0
        %1123 = vmatprep.subr.mxu0 0.0
        %1124 = vmatpush1.msra.mxu0 0.0
        %1125 = vmatprep.subr.mxu0 0.0
        %1126 = vmatpush1.msra.mxu0 0.0
        %1127 = vmatprep.subr.mxu0 0.0
        %1128 = vmatpush1.msra.mxu0 0.0
        %1129 = vmatprep.subr.mxu0 0.0
        %1130 = vmatpush1.msra.mxu0 0.0
        %1131 = vmatprep.subr.mxu0 0.0
        %1132 = vmatpush1.msra.mxu0 0.0
        %1133 = vmatprep.subr.mxu0 0.0
        %1134 = vmatpush1.msra.mxu0 0.0
        %1135 = vmatprep.subr.mxu0 0.0
        %1136 = vmatpush1.msra.mxu0 0.0
        %1137 = vmatprep.subr.mxu0 0.0
        %1138 = vmatpush1.msra.mxu0 0.0
        %1139 = vmatprep.subr.mxu0 0.0
        %1140 = vmatpush1.msra.mxu0 0.0
        %1141 = vmatprep.subr.mxu0 0.0
        %1142 = vmatpush1.msra.mxu0 0.0
        %1143 = vmatprep.subr.mxu0 0.0
        %1144 = vmatpush1.msra.mxu0 0.0
        %1145 = vmatprep.subr.mxu0 0.0
        %1146 = vmatpush1.msra.mxu0 0.0
        %1147 = vmatprep.subr.mxu0 0.0
        %1148 = vmatpush1.msra.mxu0 0.0
        %1149 = vmatprep.subr.mxu0 %v1030
        %1150 = vmatpush1.msra.mxu0 %v1027
        %1151 = vmatprep.subr.mxu0 %v928
        %1152 = vmatpush1.msra.mxu0 %v927
        %1153 = vmatprep.subr.mxu0 0.0
        %1154 = vmatpush2.msra.mxu0 0.0
        %1155 = vmatprep.subr.mxu0 0.0
        %1156 = vmatpush2.msra.mxu0 0.0
        %1157 = vmatprep.subr.mxu0 0.0
        %1158 = vmatpush2.msra.mxu0 0.0
        %1159 = vmatprep.subr.mxu0 0.0
        %1160 = vmatpush2.msra.mxu0 0.0
        %1161 = vmatprep.subr.mxu0 0.0
        %1162 = vmatpush2.msra.mxu0 0.0
        %1163 = vmatprep.subr.mxu0 0.0
        %1164 = vmatpush2.msra.mxu0 0.0
        %1165 = vmatprep.subr.mxu0 0.0
        %1166 = vmatpush2.msra.mxu0 0.0
        %1167 = vmatprep.subr.mxu0 0.0
        %1168 = vmatpush2.msra.mxu0 0.0
        %1169 = vmatprep.subr.mxu0 0.0
        %1170 = vmatpush2.msra.mxu0 0.0
        %1171 = vmatprep.subr.mxu0 0.0
        %1172 = vmatpush2.msra.mxu0 0.0
        %1173 = vmatprep.subr.mxu0 0.0
        %1174 = vmatpush2.msra.mxu0 0.0
        %1175 = vmatprep.subr.mxu0 0.0
        %1176 = vmatpush2.msra.mxu0 0.0
        %1177 = vmatprep.subr.mxu0 0.0
        %1178 = vmatpush2.msra.mxu0 0.0
        %1179 = vmatprep.subr.mxu0 0.0
        %1180 = vmatpush2.msra.mxu0 0.0
        %1181 = vmatprep.subr.mxu0 0.0
        %1182 = vmatpush2.msra.mxu0 0.0
        %1183 = vmatprep.subr.mxu0 0.0
        %1184 = vmatpush2.msra.mxu0 0.0
        %1185 = vmatprep.mubr.f32.mxu0 0.0
        %1186 = vmatmul.mubr.f32.gmra.mxu0 %v1015
        %v1187 = vpop.f32.mrf.mxu0
        %v1188 = vadd.f32 %v1007, %v1187
        %v1189 = vpop.f32.mrf.mxu0
        %v1190 = vadd.f32 %v1007, %v1189
        %1191 = vmatprep.mubr.f32.mxu0 0.0
        %1192 = vmatmul.mubr.f32.gmra.mxu0 %v1018
        %v1193 = vpop.f32.mrf.mxu0
        %v1194 = vadd.f32 %v1012, %v1193
        %v1195 = vpop.f32.mrf.mxu0
        %v1196 = vadd.f32 %v1012, %v1195
        %1197 = vdwg.mxu0
        %1198 = vmatprep.subr.mxu0 0.0
        %1199 = vmatpush1.msra.mxu0 0.0
        %1200 = vmatprep.subr.mxu0 0.0
        %1201 = vmatpush1.msra.mxu0 0.0
        %1202 = vmatprep.subr.mxu0 0.0
        %1203 = vmatpush1.msra.mxu0 0.0
        %1204 = vmatprep.subr.mxu0 0.0
        %1205 = vmatpush1.msra.mxu0 0.0
        %1206 = vmatprep.subr.mxu0 0.0
        %1207 = vmatpush1.msra.mxu0 0.0
        %1208 = vmatprep.subr.mxu0 0.0
        %1209 = vmatpush1.msra.mxu0 0.0
        %1210 = vmatprep.subr.mxu0 0.0
        %1211 = vmatpush1.msra.mxu0 0.0
        %1212 = vmatprep.subr.mxu0 0.0
        %1213 = vmatpush1.msra.mxu0 0.0
        %1214 = vmatprep.subr.mxu0 0.0
        %1215 = vmatpush1.msra.mxu0 0.0
        %1216 = vmatprep.subr.mxu0 0.0
        %1217 = vmatpush1.msra.mxu0 0.0
        %1218 = vmatprep.subr.mxu0 0.0
        %1219 = vmatpush1.msra.mxu0 0.0
        %1220 = vmatprep.subr.mxu0 0.0
        %1221 = vmatpush1.msra.mxu0 0.0
        %1222 = vmatprep.subr.mxu0 0.0
        %1223 = vmatpush1.msra.mxu0 0.0
        %1224 = vmatprep.subr.mxu0 0.0
        %1225 = vmatpush1.msra.mxu0 0.0
        %1226 = vmatprep.subr.mxu0 %v1036
        %1227 = vmatpush1.msra.mxu0 %v1033
        %1228 = vmatprep.subr.mxu0 %v930
        %1229 = vmatpush1.msra.mxu0 %v929
        %1230 = vmatprep.subr.mxu0 0.0
        %1231 = vmatpush2.msra.mxu0 0.0
        %1232 = vmatprep.subr.mxu0 0.0
        %1233 = vmatpush2.msra.mxu0 0.0
        %1234 = vmatprep.subr.mxu0 0.0
        %1235 = vmatpush2.msra.mxu0 0.0
        %1236 = vmatprep.subr.mxu0 0.0
        %1237 = vmatpush2.msra.mxu0 0.0
        %1238 = vmatprep.subr.mxu0 0.0
        %1239 = vmatpush2.msra.mxu0 0.0
        %1240 = vmatprep.subr.mxu0 0.0
        %1241 = vmatpush2.msra.mxu0 0.0
        %1242 = vmatprep.subr.mxu0 0.0
        %1243 = vmatpush2.msra.mxu0 0.0
        %1244 = vmatprep.subr.mxu0 0.0
        %1245 = vmatpush2.msra.mxu0 0.0
        %1246 = vmatprep.subr.mxu0 0.0
        %1247 = vmatpush2.msra.mxu0 0.0
        %1248 = vmatprep.subr.mxu0 0.0
        %1249 = vmatpush2.msra.mxu0 0.0
        %1250 = vmatprep.subr.mxu0 0.0
        %1251 = vmatpush2.msra.mxu0 0.0
        %1252 = vmatprep.subr.mxu0 0.0
        %1253 = vmatpush2.msra.mxu0 0.0
        %1254 = vmatprep.subr.mxu0 0.0
        %1255 = vmatpush2.msra.mxu0 0.0
        %1256 = vmatprep.subr.mxu0 0.0
        %1257 = vmatpush2.msra.mxu0 0.0
        %1258 = vmatprep.subr.mxu0 0.0
        %1259 = vmatpush2.msra.mxu0 0.0
        %1260 = vmatprep.subr.mxu0 0.0
        %1261 = vmatpush2.msra.mxu0 0.0
        %1262 = vmatprep.mubr.f32.mxu0 0.0
        %1263 = vmatmul.mubr.f32.gmra.mxu0 %v1015
        %v1264 = vpop.f32.mrf.mxu0
        %v1265 = vadd.f32 %v1007, %v1264
        %v1266 = vpop.f32.mrf.mxu0
        %v1267 = vadd.f32 %v1007, %v1266
        %1268 = vmatprep.mubr.f32.mxu0 0.0
        %1269 = vmatmul.mubr.f32.gmra.mxu0 %v1018
        %v1270 = vpop.f32.mrf.mxu0
        %v1271 = vadd.f32 %v1012, %v1270
        %v1272 = vpop.f32.mrf.mxu0
        %v1273 = vadd.f32 %v1012, %v1272
        %1274 = vdwg.mxu0
        %1275 = vmatprep.subr.mxu0 0.0
        %1276 = vmatpush1.msra.mxu0 0.0
        %1277 = vmatprep.subr.mxu0 0.0
        %1278 = vmatpush1.msra.mxu0 0.0
        %1279 = vmatprep.subr.mxu0 0.0
        %1280 = vmatpush1.msra.mxu0 0.0
        %1281 = vmatprep.subr.mxu0 0.0
        %1282 = vmatpush1.msra.mxu0 0.0
        %1283 = vmatprep.subr.mxu0 0.0
        %1284 = vmatpush1.msra.mxu0 0.0
        %1285 = vmatprep.subr.mxu0 0.0
        %1286 = vmatpush1.msra.mxu0 0.0
        %1287 = vmatprep.subr.mxu0 0.0
        %1288 = vmatpush1.msra.mxu0 0.0
        %1289 = vmatprep.subr.mxu0 0.0
        %1290 = vmatpush1.msra.mxu0 0.0
        %1291 = vmatprep.subr.mxu0 0.0
        %1292 = vmatpush1.msra.mxu0 0.0
        %1293 = vmatprep.subr.mxu0 0.0
        %1294 = vmatpush1.msra.mxu0 0.0
        %1295 = vmatprep.subr.mxu0 0.0
        %1296 = vmatpush1.msra.mxu0 0.0
        %1297 = vmatprep.subr.mxu0 0.0
        %1298 = vmatpush1.msra.mxu0 0.0
        %1299 = vmatprep.subr.mxu0 0.0
        %1300 = vmatpush1.msra.mxu0 0.0
        %1301 = vmatprep.subr.mxu0 0.0
        %1302 = vmatpush1.msra.mxu0 0.0
        %1303 = vmatprep.subr.mxu0 %v1042
        %1304 = vmatpush1.msra.mxu0 %v1039
        %1305 = vmatprep.subr.mxu0 %v932
        %1306 = vmatpush1.msra.mxu0 %v931
        %1307 = vmatprep.subr.mxu0 0.0
        %1308 = vmatpush2.msra.mxu0 0.0
        %1309 = vmatprep.subr.mxu0 0.0
        %1310 = vmatpush2.msra.mxu0 0.0
        %1311 = vmatprep.subr.mxu0 0.0
        %1312 = vmatpush2.msra.mxu0 0.0
        %1313 = vmatprep.subr.mxu0 0.0
        %1314 = vmatpush2.msra.mxu0 0.0
        %1315 = vmatprep.subr.mxu0 0.0
        %1316 = vmatpush2.msra.mxu0 0.0
        %1317 = vmatprep.subr.mxu0 0.0
        %1318 = vmatpush2.msra.mxu0 0.0
        %1319 = vmatprep.subr.mxu0 0.0
        %1320 = vmatpush2.msra.mxu0 0.0
        %1321 = vmatprep.subr.mxu0 0.0
        %1322 = vmatpush2.msra.mxu0 0.0
        %1323 = vmatprep.subr.mxu0 0.0
        %1324 = vmatpush2.msra.mxu0 0.0
        %1325 = vmatprep.subr.mxu0 0.0
        %1326 = vmatpush2.msra.mxu0 0.0
        %1327 = vmatprep.subr.mxu0 0.0
        %1328 = vmatpush2.msra.mxu0 0.0
        %1329 = vmatprep.subr.mxu0 0.0
        %1330 = vmatpush2.msra.mxu0 0.0
        %1331 = vmatprep.subr.mxu0 0.0
        %1332 = vmatpush2.msra.mxu0 0.0
        %1333 = vmatprep.subr.mxu0 0.0
        %1334 = vmatpush2.msra.mxu0 0.0
        %1335 = vmatprep.subr.mxu0 0.0
        %1336 = vmatpush2.msra.mxu0 0.0
        %1337 = vmatprep.subr.mxu0 0.0
        %1338 = vmatpush2.msra.mxu0 0.0
        %1339 = vmatprep.mubr.f32.mxu0 0.0
        %1340 = vmatmul.mubr.f32.gmra.mxu0 %v1015
        %v1341 = vpop.f32.mrf.mxu0
        %v1342 = vadd.f32 %v1007, %v1341
        %v1343 = vpop.f32.mrf.mxu0
        %v1344 = vadd.f32 %v1007, %v1343
        %1345 = vmatprep.mubr.f32.mxu0 0.0
        %1346 = vmatmul.mubr.f32.gmra.mxu0 %v1018
        %v1347 = vpop.f32.mrf.mxu0
        %v1348 = vadd.f32 %v1012, %v1347
        %v1349 = vpop.f32.mrf.mxu0
        %v1350 = vadd.f32 %v1012, %v1349
        %1351 = vdwg.mxu0
        %v1352 = vpack.c.bf16 %v1117, %v1111
        %v1353 = vpack.c.bf16 %v1119, %v1113
        %v1354 = vpack.c.bf16 %v1194, %v1188
        %v1355 = vpack.c.bf16 %v1196, %v1190
        %v1356 = vpack.c.bf16 %v1271, %v1265
        %v1357 = vpack.c.bf16 %v1273, %v1267
        %v1358 = vpack.c.bf16 %v1348, %v1342
        %v1359 = vpack.c.bf16 %v1350, %v1344
        %v1368 = vunpack.c.l.b16 %v1352
        %v1369 = vunpack.c.l.b16 %v1353
        %v1370 = vunpack.c.l.b16 %v1354
        %v1371 = vunpack.c.l.b16 %v1355
        %v1372 = vunpack.c.l.b16 %v1356
        %v1373 = vunpack.c.l.b16 %v1357
        %v1374 = vunpack.c.l.b16 %v1358
        %v1375 = vunpack.c.l.b16 %v1359
        %v1376 = vunpack.c.h.b16 %v1352
        %v1377 = vunpack.c.h.b16 %v1353
        %v1378 = vunpack.c.h.b16 %v1354
        %v1379 = vunpack.c.h.b16 %v1355
        %v1380 = vunpack.c.h.b16 %v1356
        %v1381 = vunpack.c.h.b16 %v1357
        %v1382 = vunpack.c.h.b16 %v1358
        %v1383 = vunpack.c.h.b16 %v1359
        %v1384 = vpack.c.b16 %v1369, %v1368
        %v1385 = vpack.c.b16 %v1371, %v1370
        %v1386 = vpack.c.b16 %v1373, %v1372
        %v1387 = vpack.c.b16 %v1375, %v1374
        %v1388 = vpack.c.b16 %v1377, %v1376
        %v1389 = vpack.c.b16 %v1379, %v1378
        %v1390 = vpack.c.b16 %v1381, %v1380
        %v1391 = vpack.c.b16 %v1383, %v1382
        %s1400 = scalar_lea.vmem %s278, 128 [#allocation5]
        %1401 = vst [vmem:[%s1400] sm:$0xff] %v1384
        %1402 = vst [vmem:[%s1400 + $0x8] sm:$0xff] %v1385
        %1403 = vst [vmem:[%s1400 + $0x10] sm:$0xff] %v1386
        %1404 = vst [vmem:[%s1400 + $0x18] sm:$0xff] %v1387
        %1405 = vst [vmem:[%s1400 + $0x20] sm:$0x11] %v1388
        %1406 = vst [vmem:[%s1400 + $0x28] sm:$0x11] %v1389
        %1407 = vst [vmem:[%s1400 + $0x30] sm:$0x11] %v1390
        %1408 = vst [vmem:[%s1400 + $0x38] sm:$0x11] %v1391
        %v1409 = vtanh.pop %v1111
        %v1410 = vtanh.pop %v1113
        %v1411 = vtanh.pop %v1188
        %v1412 = vtanh.pop %v1190
        %v1413 = vtanh.pop %v1265
        %v1414 = vtanh.pop %v1267
        %v1415 = vtanh.pop %v1342
        %v1416 = vtanh.pop %v1344
        %v1417 = vtanh.pop %v1117
        %v1418 = vtanh.pop %v1119
        %v1419 = vtanh.pop %v1194
        %v1420 = vtanh.pop %v1196
        %v1421 = vtanh.pop %v1271
        %v1422 = vtanh.pop %v1273
        %v1423 = vtanh.pop %v1348
        %v1424 = vtanh.pop %v1350
        %v1425 = vpack.c.bf16 %v1417, %v1409
        %v1426 = vpack.c.bf16 %v1418, %v1410
        %v1427 = vpack.c.bf16 %v1419, %v1411
        %v1428 = vpack.c.bf16 %v1420, %v1412
        %v1429 = vpack.c.bf16 %v1421, %v1413
        %v1430 = vpack.c.bf16 %v1422, %v1414
        %v1431 = vpack.c.bf16 %v1423, %v1415
        %v1432 = vpack.c.bf16 %v1424, %v1416
        %v1441 = vunpack.c.l.b16 %v1425
        %v1442 = vunpack.c.l.b16 %v1426
        %v1443 = vunpack.c.l.b16 %v1427
        %v1444 = vunpack.c.l.b16 %v1428
        %v1445 = vunpack.c.l.b16 %v1429
        %v1446 = vunpack.c.l.b16 %v1430
        %v1447 = vunpack.c.l.b16 %v1431
        %v1448 = vunpack.c.l.b16 %v1432
        %v1449 = vunpack.c.h.b16 %v1425
        %v1450 = vunpack.c.h.b16 %v1426
        %v1451 = vunpack.c.h.b16 %v1427
        %v1452 = vunpack.c.h.b16 %v1428
        %v1453 = vunpack.c.h.b16 %v1429
        %v1454 = vunpack.c.h.b16 %v1430
        %v1455 = vunpack.c.h.b16 %v1431
        %v1456 = vunpack.c.h.b16 %v1432
        %v1457 = vpack.c.b16 %v1442, %v1441
        %v1458 = vpack.c.b16 %v1444, %v1443
        %v1459 = vpack.c.b16 %v1446, %v1445
        %v1460 = vpack.c.b16 %v1448, %v1447
        %v1461 = vpack.c.b16 %v1450, %v1449
        %v1462 = vpack.c.b16 %v1452, %v1451
        %v1463 = vpack.c.b16 %v1454, %v1453
        %v1464 = vpack.c.b16 %v1456, %v1455
        %s1473 = scalar_lea.vmem %s278, 640 [#allocation5]
        %1474 = vst [vmem:[%s1473] sm:$0xff] %v1457
        %1475 = vst [vmem:[%s1473 + $0x8] sm:$0xff] %v1458
        %1476 = vst [vmem:[%s1473 + $0x10] sm:$0xff] %v1459
        %1477 = vst [vmem:[%s1473 + $0x18] sm:$0xff] %v1460
        %1478 = vst [vmem:[%s1473 + $0x20] sm:$0x11] %v1461
        %1479 = vst [vmem:[%s1473 + $0x28] sm:$0x11] %v1462
        %1480 = vst [vmem:[%s1473 + $0x30] sm:$0x11] %v1463
        %1481 = vst [vmem:[%s1473 + $0x38] sm:$0x11] %v1464
        %s1482 = scalar_lea.vmem %s2, 32
        %v1483 = vld [vmem:[%s1482] sm:$0xff]
        %v1484 = vld [vmem:[%s1482 + $0x8] sm:$0x3]
        %s1485 = scalar_lea.vmem %s3, 48
        %v1486 = vld [vmem:[%s1485] sm:$0xff]
        %v1487 = vld [vmem:[%s1485 + $0x8] sm:$0x3]
        %1489 = vset.pattern.permute.xlu0 0
        %1490 = vperm.xlu0 %1489, %v1486
        %v1491 = vpop.permute.xlu0 %1490
        %1494 = vset.pattern.permute.xlu0 0
        %1495 = vperm.xlu0 %1494, %v1487
        %v1496 = vpop.permute.xlu0 %1495
        %v1499 = vsel %vm528, %v1483, 0
        %v1502 = vsel %vm528, %v1484, 0
        %v1505 = vsel %vm535, %v1417, 0
        %v1508 = vsel %vm535, %v1418, 0
        %v1511 = vsel %vm535, %v1419, 0
        %v1514 = vsel %vm535, %v1420, 0
        %v1517 = vsel %vm535, %v1421, 0
        %v1520 = vsel %vm535, %v1422, 0
        %v1523 = vsel %vm535, %v1423, 0
        %v1526 = vsel %vm535, %v1424, 0
        %1528 = vmatprep.subr.mxu0 0.0
        %1529 = vmatpush1.msra.mxu0 0.0
        %1530 = vmatprep.subr.mxu0 0.0
        %1531 = vmatpush1.msra.mxu0 0.0
        %1532 = vmatprep.subr.mxu0 0.0
        %1533 = vmatpush1.msra.mxu0 0.0
        %1534 = vmatprep.subr.mxu0 0.0
        %1535 = vmatpush1.msra.mxu0 0.0
        %1536 = vmatprep.subr.mxu0 0.0
        %1537 = vmatpush1.msra.mxu0 0.0
        %1538 = vmatprep.subr.mxu0 0.0
        %1539 = vmatpush1.msra.mxu0 0.0
        %1540 = vmatprep.subr.mxu0 0.0
        %1541 = vmatpush1.msra.mxu0 0.0
        %1542 = vmatprep.subr.mxu0 0.0
        %1543 = vmatpush1.msra.mxu0 0.0
        %1544 = vmatprep.subr.mxu0 0.0
        %1545 = vmatpush1.msra.mxu0 0.0
        %1546 = vmatprep.subr.mxu0 0.0
        %1547 = vmatpush1.msra.mxu0 0.0
        %1548 = vmatprep.subr.mxu0 0.0
        %1549 = vmatpush1.msra.mxu0 0.0
        %1550 = vmatprep.subr.mxu0 0.0
        %1551 = vmatpush1.msra.mxu0 0.0
        %1552 = vmatprep.subr.mxu0 0.0
        %1553 = vmatpush1.msra.mxu0 0.0
        %1554 = vmatprep.subr.mxu0 0.0
        %1555 = vmatpush1.msra.mxu0 0.0
        %1556 = vmatprep.subr.mxu0 %v1508
        %1557 = vmatpush1.msra.mxu0 %v1505
        %1558 = vmatprep.subr.mxu0 %v1410
        %1559 = vmatpush1.msra.mxu0 %v1409
        %1560 = vmatprep.subr.mxu0 0.0
        %1561 = vmatpush2.msra.mxu0 0.0
        %1562 = vmatprep.subr.mxu0 0.0
        %1563 = vmatpush2.msra.mxu0 0.0
        %1564 = vmatprep.subr.mxu0 0.0
        %1565 = vmatpush2.msra.mxu0 0.0
        %1566 = vmatprep.subr.mxu0 0.0
        %1567 = vmatpush2.msra.mxu0 0.0
        %1568 = vmatprep.subr.mxu0 0.0
        %1569 = vmatpush2.msra.mxu0 0.0
        %1570 = vmatprep.subr.mxu0 0.0
        %1571 = vmatpush2.msra.mxu0 0.0
        %1572 = vmatprep.subr.mxu0 0.0
        %1573 = vmatpush2.msra.mxu0 0.0
        %1574 = vmatprep.subr.mxu0 0.0
        %1575 = vmatpush2.msra.mxu0 0.0
        %1576 = vmatprep.subr.mxu0 0.0
        %1577 = vmatpush2.msra.mxu0 0.0
        %1578 = vmatprep.subr.mxu0 0.0
        %1579 = vmatpush2.msra.mxu0 0.0
        %1580 = vmatprep.subr.mxu0 0.0
        %1581 = vmatpush2.msra.mxu0 0.0
        %1582 = vmatprep.subr.mxu0 0.0
        %1583 = vmatpush2.msra.mxu0 0.0
        %1584 = vmatprep.subr.mxu0 0.0
        %1585 = vmatpush2.msra.mxu0 0.0
        %1586 = vmatprep.subr.mxu0 0.0
        %1587 = vmatpush2.msra.mxu0 0.0
        %1588 = vmatprep.subr.mxu0 0.0
        %1589 = vmatpush2.msra.mxu0 0.0
        %1590 = vmatprep.subr.mxu0 0.0
        %1591 = vmatpush2.msra.mxu0 0.0
        %1592 = vmatprep.mubr.f32.mxu0 0.0
        %1593 = vmatmul.mubr.f32.gmra.mxu0 %v1499
        %v1594 = vpop.f32.mrf.mxu0
        %v1595 = vadd.f32 %v1491, %v1594
        %v1596 = vpop.f32.mrf.mxu0
        %v1597 = vadd.f32 %v1491, %v1596
        %1598 = vmatprep.mubr.f32.mxu0 0.0
        %1599 = vmatmul.mubr.f32.gmra.mxu0 %v1502
        %v1600 = vpop.f32.mrf.mxu0
        %v1601 = vadd.f32 %v1496, %v1600
        %v1602 = vpop.f32.mrf.mxu0
        %v1603 = vadd.f32 %v1496, %v1602
        %1604 = vdwg.mxu0
        %1605 = vmatprep.subr.mxu0 0.0
        %1606 = vmatpush1.msra.mxu0 0.0
        %1607 = vmatprep.subr.mxu0 0.0
        %1608 = vmatpush1.msra.mxu0 0.0
        %1609 = vmatprep.subr.mxu0 0.0
        %1610 = vmatpush1.msra.mxu0 0.0
        %1611 = vmatprep.subr.mxu0 0.0
        %1612 = vmatpush1.msra.mxu0 0.0
        %1613 = vmatprep.subr.mxu0 0.0
        %1614 = vmatpush1.msra.mxu0 0.0
        %1615 = vmatprep.subr.mxu0 0.0
        %1616 = vmatpush1.msra.mxu0 0.0
        %1617 = vmatprep.subr.mxu0 0.0
        %1618 = vmatpush1.msra.mxu0 0.0
        %1619 = vmatprep.subr.mxu0 0.0
        %1620 = vmatpush1.msra.mxu0 0.0
        %1621 = vmatprep.subr.mxu0 0.0
        %1622 = vmatpush1.msra.mxu0 0.0
        %1623 = vmatprep.subr.mxu0 0.0
        %1624 = vmatpush1.msra.mxu0 0.0
        %1625 = vmatprep.subr.mxu0 0.0
        %1626 = vmatpush1.msra.mxu0 0.0
        %1627 = vmatprep.subr.mxu0 0.0
        %1628 = vmatpush1.msra.mxu0 0.0
        %1629 = vmatprep.subr.mxu0 0.0
        %1630 = vmatpush1.msra.mxu0 0.0
        %1631 = vmatprep.subr.mxu0 0.0
        %1632 = vmatpush1.msra.mxu0 0.0
        %1633 = vmatprep.subr.mxu0 %v1514
        %1634 = vmatpush1.msra.mxu0 %v1511
        %1635 = vmatprep.subr.mxu0 %v1412
        %1636 = vmatpush1.msra.mxu0 %v1411
        %1637 = vmatprep.subr.mxu0 0.0
        %1638 = vmatpush2.msra.mxu0 0.0
        %1639 = vmatprep.subr.mxu0 0.0
        %1640 = vmatpush2.msra.mxu0 0.0
        %1641 = vmatprep.subr.mxu0 0.0
        %1642 = vmatpush2.msra.mxu0 0.0
        %1643 = vmatprep.subr.mxu0 0.0
        %1644 = vmatpush2.msra.mxu0 0.0
        %1645 = vmatprep.subr.mxu0 0.0
        %1646 = vmatpush2.msra.mxu0 0.0
        %1647 = vmatprep.subr.mxu0 0.0
        %1648 = vmatpush2.msra.mxu0 0.0
        %1649 = vmatprep.subr.mxu0 0.0
        %1650 = vmatpush2.msra.mxu0 0.0
        %1651 = vmatprep.subr.mxu0 0.0
        %1652 = vmatpush2.msra.mxu0 0.0
        %1653 = vmatprep.subr.mxu0 0.0
        %1654 = vmatpush2.msra.mxu0 0.0
        %1655 = vmatprep.subr.mxu0 0.0
        %1656 = vmatpush2.msra.mxu0 0.0
        %1657 = vmatprep.subr.mxu0 0.0
        %1658 = vmatpush2.msra.mxu0 0.0
        %1659 = vmatprep.subr.mxu0 0.0
        %1660 = vmatpush2.msra.mxu0 0.0
        %1661 = vmatprep.subr.mxu0 0.0
        %1662 = vmatpush2.msra.mxu0 0.0
        %1663 = vmatprep.subr.mxu0 0.0
        %1664 = vmatpush2.msra.mxu0 0.0
        %1665 = vmatprep.subr.mxu0 0.0
        %1666 = vmatpush2.msra.mxu0 0.0
        %1667 = vmatprep.subr.mxu0 0.0
        %1668 = vmatpush2.msra.mxu0 0.0
        %1669 = vmatprep.mubr.f32.mxu0 0.0
        %1670 = vmatmul.mubr.f32.gmra.mxu0 %v1499
        %v1671 = vpop.f32.mrf.mxu0
        %v1672 = vadd.f32 %v1491, %v1671
        %v1673 = vpop.f32.mrf.mxu0
        %v1674 = vadd.f32 %v1491, %v1673
        %1675 = vmatprep.mubr.f32.mxu0 0.0
        %1676 = vmatmul.mubr.f32.gmra.mxu0 %v1502
        %v1677 = vpop.f32.mrf.mxu0
        %v1678 = vadd.f32 %v1496, %v1677
        %v1679 = vpop.f32.mrf.mxu0
        %v1680 = vadd.f32 %v1496, %v1679
        %1681 = vdwg.mxu0
        %1682 = vmatprep.subr.mxu0 0.0
        %1683 = vmatpush1.msra.mxu0 0.0
        %1684 = vmatprep.subr.mxu0 0.0
        %1685 = vmatpush1.msra.mxu0 0.0
        %1686 = vmatprep.subr.mxu0 0.0
        %1687 = vmatpush1.msra.mxu0 0.0
        %1688 = vmatprep.subr.mxu0 0.0
        %1689 = vmatpush1.msra.mxu0 0.0
        %1690 = vmatprep.subr.mxu0 0.0
        %1691 = vmatpush1.msra.mxu0 0.0
        %1692 = vmatprep.subr.mxu0 0.0
        %1693 = vmatpush1.msra.mxu0 0.0
        %1694 = vmatprep.subr.mxu0 0.0
        %1695 = vmatpush1.msra.mxu0 0.0
        %1696 = vmatprep.subr.mxu0 0.0
        %1697 = vmatpush1.msra.mxu0 0.0
        %1698 = vmatprep.subr.mxu0 0.0
        %1699 = vmatpush1.msra.mxu0 0.0
        %1700 = vmatprep.subr.mxu0 0.0
        %1701 = vmatpush1.msra.mxu0 0.0
        %1702 = vmatprep.subr.mxu0 0.0
        %1703 = vmatpush1.msra.mxu0 0.0
        %1704 = vmatprep.subr.mxu0 0.0
        %1705 = vmatpush1.msra.mxu0 0.0
        %1706 = vmatprep.subr.mxu0 0.0
        %1707 = vmatpush1.msra.mxu0 0.0
        %1708 = vmatprep.subr.mxu0 0.0
        %1709 = vmatpush1.msra.mxu0 0.0
        %1710 = vmatprep.subr.mxu0 %v1520
        %1711 = vmatpush1.msra.mxu0 %v1517
        %1712 = vmatprep.subr.mxu0 %v1414
        %1713 = vmatpush1.msra.mxu0 %v1413
        %1714 = vmatprep.subr.mxu0 0.0
        %1715 = vmatpush2.msra.mxu0 0.0
        %1716 = vmatprep.subr.mxu0 0.0
        %1717 = vmatpush2.msra.mxu0 0.0
        %1718 = vmatprep.subr.mxu0 0.0
        %1719 = vmatpush2.msra.mxu0 0.0
        %1720 = vmatprep.subr.mxu0 0.0
        %1721 = vmatpush2.msra.mxu0 0.0
        %1722 = vmatprep.subr.mxu0 0.0
        %1723 = vmatpush2.msra.mxu0 0.0
        %1724 = vmatprep.subr.mxu0 0.0
        %1725 = vmatpush2.msra.mxu0 0.0
        %1726 = vmatprep.subr.mxu0 0.0
        %1727 = vmatpush2.msra.mxu0 0.0
        %1728 = vmatprep.subr.mxu0 0.0
        %1729 = vmatpush2.msra.mxu0 0.0
        %1730 = vmatprep.subr.mxu0 0.0
        %1731 = vmatpush2.msra.mxu0 0.0
        %1732 = vmatprep.subr.mxu0 0.0
        %1733 = vmatpush2.msra.mxu0 0.0
        %1734 = vmatprep.subr.mxu0 0.0
        %1735 = vmatpush2.msra.mxu0 0.0
        %1736 = vmatprep.subr.mxu0 0.0
        %1737 = vmatpush2.msra.mxu0 0.0
        %1738 = vmatprep.subr.mxu0 0.0
        %1739 = vmatpush2.msra.mxu0 0.0
        %1740 = vmatprep.subr.mxu0 0.0
        %1741 = vmatpush2.msra.mxu0 0.0
        %1742 = vmatprep.subr.mxu0 0.0
        %1743 = vmatpush2.msra.mxu0 0.0
        %1744 = vmatprep.subr.mxu0 0.0
        %1745 = vmatpush2.msra.mxu0 0.0
        %1746 = vmatprep.mubr.f32.mxu0 0.0
        %1747 = vmatmul.mubr.f32.gmra.mxu0 %v1499
        %v1748 = vpop.f32.mrf.mxu0
        %v1749 = vadd.f32 %v1491, %v1748
        %v1750 = vpop.f32.mrf.mxu0
        %v1751 = vadd.f32 %v1491, %v1750
        %1752 = vmatprep.mubr.f32.mxu0 0.0
        %1753 = vmatmul.mubr.f32.gmra.mxu0 %v1502
        %v1754 = vpop.f32.mrf.mxu0
        %v1755 = vadd.f32 %v1496, %v1754
        %v1756 = vpop.f32.mrf.mxu0
        %v1757 = vadd.f32 %v1496, %v1756
        %1758 = vdwg.mxu0
        %1759 = vmatprep.subr.mxu0 0.0
        %1760 = vmatpush1.msra.mxu0 0.0
        %1761 = vmatprep.subr.mxu0 0.0
        %1762 = vmatpush1.msra.mxu0 0.0
        %1763 = vmatprep.subr.mxu0 0.0
        %1764 = vmatpush1.msra.mxu0 0.0
        %1765 = vmatprep.subr.mxu0 0.0
        %1766 = vmatpush1.msra.mxu0 0.0
        %1767 = vmatprep.subr.mxu0 0.0
        %1768 = vmatpush1.msra.mxu0 0.0
        %1769 = vmatprep.subr.mxu0 0.0
        %1770 = vmatpush1.msra.mxu0 0.0
        %1771 = vmatprep.subr.mxu0 0.0
        %1772 = vmatpush1.msra.mxu0 0.0
        %1773 = vmatprep.subr.mxu0 0.0
        %1774 = vmatpush1.msra.mxu0 0.0
        %1775 = vmatprep.subr.mxu0 0.0
        %1776 = vmatpush1.msra.mxu0 0.0
        %1777 = vmatprep.subr.mxu0 0.0
        %1778 = vmatpush1.msra.mxu0 0.0
        %1779 = vmatprep.subr.mxu0 0.0
        %1780 = vmatpush1.msra.mxu0 0.0
        %1781 = vmatprep.subr.mxu0 0.0
        %1782 = vmatpush1.msra.mxu0 0.0
        %1783 = vmatprep.subr.mxu0 0.0
        %1784 = vmatpush1.msra.mxu0 0.0
        %1785 = vmatprep.subr.mxu0 0.0
        %1786 = vmatpush1.msra.mxu0 0.0
        %1787 = vmatprep.subr.mxu0 %v1526
        %1788 = vmatpush1.msra.mxu0 %v1523
        %1789 = vmatprep.subr.mxu0 %v1416
        %1790 = vmatpush1.msra.mxu0 %v1415
        %1791 = vmatprep.subr.mxu0 0.0
        %1792 = vmatpush2.msra.mxu0 0.0
        %1793 = vmatprep.subr.mxu0 0.0
        %1794 = vmatpush2.msra.mxu0 0.0
        %1795 = vmatprep.subr.mxu0 0.0
        %1796 = vmatpush2.msra.mxu0 0.0
        %1797 = vmatprep.subr.mxu0 0.0
        %1798 = vmatpush2.msra.mxu0 0.0
        %1799 = vmatprep.subr.mxu0 0.0
        %1800 = vmatpush2.msra.mxu0 0.0
        %1801 = vmatprep.subr.mxu0 0.0
        %1802 = vmatpush2.msra.mxu0 0.0
        %1803 = vmatprep.subr.mxu0 0.0
        %1804 = vmatpush2.msra.mxu0 0.0
        %1805 = vmatprep.subr.mxu0 0.0
        %1806 = vmatpush2.msra.mxu0 0.0
        %1807 = vmatprep.subr.mxu0 0.0
        %1808 = vmatpush2.msra.mxu0 0.0
        %1809 = vmatprep.subr.mxu0 0.0
        %1810 = vmatpush2.msra.mxu0 0.0
        %1811 = vmatprep.subr.mxu0 0.0
        %1812 = vmatpush2.msra.mxu0 0.0
        %1813 = vmatprep.subr.mxu0 0.0
        %1814 = vmatpush2.msra.mxu0 0.0
        %1815 = vmatprep.subr.mxu0 0.0
        %1816 = vmatpush2.msra.mxu0 0.0
        %1817 = vmatprep.subr.mxu0 0.0
        %1818 = vmatpush2.msra.mxu0 0.0
        %1819 = vmatprep.subr.mxu0 0.0
        %1820 = vmatpush2.msra.mxu0 0.0
        %1821 = vmatprep.subr.mxu0 0.0
        %1822 = vmatpush2.msra.mxu0 0.0
        %1823 = vmatprep.mubr.f32.mxu0 0.0
        %1824 = vmatmul.mubr.f32.gmra.mxu0 %v1499
        %v1825 = vpop.f32.mrf.mxu0
        %v1826 = vadd.f32 %v1491, %v1825
        %v1827 = vpop.f32.mrf.mxu0
        %v1828 = vadd.f32 %v1491, %v1827
        %1829 = vmatprep.mubr.f32.mxu0 0.0
        %1830 = vmatmul.mubr.f32.gmra.mxu0 %v1502
        %v1831 = vpop.f32.mrf.mxu0
        %v1832 = vadd.f32 %v1496, %v1831
        %v1833 = vpop.f32.mrf.mxu0
        %v1834 = vadd.f32 %v1496, %v1833
        %1835 = vdwg.mxu0
        %v1836 = vpack.c.bf16 %v1601, %v1595
        %v1837 = vpack.c.bf16 %v1603, %v1597
        %v1838 = vpack.c.bf16 %v1678, %v1672
        %v1839 = vpack.c.bf16 %v1680, %v1674
        %v1840 = vpack.c.bf16 %v1755, %v1749
        %v1841 = vpack.c.bf16 %v1757, %v1751
        %v1842 = vpack.c.bf16 %v1832, %v1826
        %v1843 = vpack.c.bf16 %v1834, %v1828
        %v1852 = vunpack.c.l.b16 %v1836
        %v1853 = vunpack.c.l.b16 %v1837
        %v1854 = vunpack.c.l.b16 %v1838
        %v1855 = vunpack.c.l.b16 %v1839
        %v1856 = vunpack.c.l.b16 %v1840
        %v1857 = vunpack.c.l.b16 %v1841
        %v1858 = vunpack.c.l.b16 %v1842
        %v1859 = vunpack.c.l.b16 %v1843
        %v1860 = vunpack.c.h.b16 %v1836
        %v1861 = vunpack.c.h.b16 %v1837
        %v1862 = vunpack.c.h.b16 %v1838
        %v1863 = vunpack.c.h.b16 %v1839
        %v1864 = vunpack.c.h.b16 %v1840
        %v1865 = vunpack.c.h.b16 %v1841
        %v1866 = vunpack.c.h.b16 %v1842
        %v1867 = vunpack.c.h.b16 %v1843
        %v1868 = vpack.c.b16 %v1853, %v1852
        %v1869 = vpack.c.b16 %v1855, %v1854
        %v1870 = vpack.c.b16 %v1857, %v1856
        %v1871 = vpack.c.b16 %v1859, %v1858
        %v1872 = vpack.c.b16 %v1861, %v1860
        %v1873 = vpack.c.b16 %v1863, %v1862
        %v1874 = vpack.c.b16 %v1865, %v1864
        %v1875 = vpack.c.b16 %v1867, %v1866
        %s1884 = scalar_lea.vmem %s278, 192 [#allocation5]
        %1885 = vst [vmem:[%s1884] sm:$0xff] %v1868
        %1886 = vst [vmem:[%s1884 + $0x8] sm:$0xff] %v1869
        %1887 = vst [vmem:[%s1884 + $0x10] sm:$0xff] %v1870
        %1888 = vst [vmem:[%s1884 + $0x18] sm:$0xff] %v1871
        %1889 = vst [vmem:[%s1884 + $0x20] sm:$0x11] %v1872
        %1890 = vst [vmem:[%s1884 + $0x28] sm:$0x11] %v1873
        %1891 = vst [vmem:[%s1884 + $0x30] sm:$0x11] %v1874
        %1892 = vst [vmem:[%s1884 + $0x38] sm:$0x11] %v1875
        %v1893 = vtanh.pop %v1595
        %v1894 = vtanh.pop %v1597
        %v1895 = vtanh.pop %v1672
        %v1896 = vtanh.pop %v1674
        %v1897 = vtanh.pop %v1749
        %v1898 = vtanh.pop %v1751
        %v1899 = vtanh.pop %v1826
        %v1900 = vtanh.pop %v1828
        %v1901 = vtanh.pop %v1601
        %v1902 = vtanh.pop %v1603
        %v1903 = vtanh.pop %v1678
        %v1904 = vtanh.pop %v1680
        %v1905 = vtanh.pop %v1755
        %v1906 = vtanh.pop %v1757
        %v1907 = vtanh.pop %v1832
        %v1908 = vtanh.pop %v1834
        %v1909 = vpack.c.bf16 %v1901, %v1893
        %v1910 = vpack.c.bf16 %v1902, %v1894
        %v1911 = vpack.c.bf16 %v1903, %v1895
        %v1912 = vpack.c.bf16 %v1904, %v1896
        %v1913 = vpack.c.bf16 %v1905, %v1897
        %v1914 = vpack.c.bf16 %v1906, %v1898
        %v1915 = vpack.c.bf16 %v1907, %v1899
        %v1916 = vpack.c.bf16 %v1908, %v1900
        %v1925 = vunpack.c.l.b16 %v1909
        %v1926 = vunpack.c.l.b16 %v1910
        %v1927 = vunpack.c.l.b16 %v1911
        %v1928 = vunpack.c.l.b16 %v1912
        %v1929 = vunpack.c.l.b16 %v1913
        %v1930 = vunpack.c.l.b16 %v1914
        %v1931 = vunpack.c.l.b16 %v1915
        %v1932 = vunpack.c.l.b16 %v1916
        %v1933 = vunpack.c.h.b16 %v1909
        %v1934 = vunpack.c.h.b16 %v1910
        %v1935 = vunpack.c.h.b16 %v1911
        %v1936 = vunpack.c.h.b16 %v1912
        %v1937 = vunpack.c.h.b16 %v1913
        %v1938 = vunpack.c.h.b16 %v1914
        %v1939 = vunpack.c.h.b16 %v1915
        %v1940 = vunpack.c.h.b16 %v1916
        %v1941 = vpack.c.b16 %v1926, %v1925
        %v1942 = vpack.c.b16 %v1928, %v1927
        %v1943 = vpack.c.b16 %v1930, %v1929
        %v1944 = vpack.c.b16 %v1932, %v1931
        %v1945 = vpack.c.b16 %v1934, %v1933
        %v1946 = vpack.c.b16 %v1936, %v1935
        %v1947 = vpack.c.b16 %v1938, %v1937
        %v1948 = vpack.c.b16 %v1940, %v1939
        %s1957 = scalar_lea.vmem %s278, 704 [#allocation5]
        %1958 = vst [vmem:[%s1957] sm:$0xff] %v1941
        %1959 = vst [vmem:[%s1957 + $0x8] sm:$0xff] %v1942
        %1960 = vst [vmem:[%s1957 + $0x10] sm:$0xff] %v1943
        %1961 = vst [vmem:[%s1957 + $0x18] sm:$0xff] %v1944
        %1962 = vst [vmem:[%s1957 + $0x20] sm:$0x11] %v1945
        %1963 = vst [vmem:[%s1957 + $0x28] sm:$0x11] %v1946
        %1964 = vst [vmem:[%s1957 + $0x30] sm:$0x11] %v1947
        %1965 = vst [vmem:[%s1957 + $0x38] sm:$0x11] %v1948
        %s1966 = scalar_lea.vmem %s2, 48
        %v1967 = vld [vmem:[%s1966] sm:$0xff]
        %v1968 = vld [vmem:[%s1966 + $0x8] sm:$0x3]
        %s1969 = scalar_lea.vmem %s3, 64
        %v1970 = vld [vmem:[%s1969] sm:$0xff]
        %v1971 = vld [vmem:[%s1969 + $0x8] sm:$0x3]
        %1973 = vset.pattern.permute.xlu0 0
        %1974 = vperm.xlu0 %1973, %v1970
        %v1975 = vpop.permute.xlu0 %1974
        %1978 = vset.pattern.permute.xlu0 0
        %1979 = vperm.xlu0 %1978, %v1971
        %v1980 = vpop.permute.xlu0 %1979
        %v1983 = vsel %vm528, %v1967, 0
        %v1986 = vsel %vm528, %v1968, 0
        %v1989 = vsel %vm535, %v1901, 0
        %v1992 = vsel %vm535, %v1902, 0
        %v1995 = vsel %vm535, %v1903, 0
        %v1998 = vsel %vm535, %v1904, 0
        %v2001 = vsel %vm535, %v1905, 0
        %v2004 = vsel %vm535, %v1906, 0
        %v2007 = vsel %vm535, %v1907, 0
        %v2010 = vsel %vm535, %v1908, 0
        %2012 = vmatprep.subr.mxu0 0.0
        %2013 = vmatpush1.msra.mxu0 0.0
        %2014 = vmatprep.subr.mxu0 0.0
        %2015 = vmatpush1.msra.mxu0 0.0
        %2016 = vmatprep.subr.mxu0 0.0
        %2017 = vmatpush1.msra.mxu0 0.0
        %2018 = vmatprep.subr.mxu0 0.0
        %2019 = vmatpush1.msra.mxu0 0.0
        %2020 = vmatprep.subr.mxu0 0.0
        %2021 = vmatpush1.msra.mxu0 0.0
        %2022 = vmatprep.subr.mxu0 0.0
        %2023 = vmatpush1.msra.mxu0 0.0
        %2024 = vmatprep.subr.mxu0 0.0
        %2025 = vmatpush1.msra.mxu0 0.0
        %2026 = vmatprep.subr.mxu0 0.0
        %2027 = vmatpush1.msra.mxu0 0.0
        %2028 = vmatprep.subr.mxu0 0.0
        %2029 = vmatpush1.msra.mxu0 0.0
        %2030 = vmatprep.subr.mxu0 0.0
        %2031 = vmatpush1.msra.mxu0 0.0
        %2032 = vmatprep.subr.mxu0 0.0
        %2033 = vmatpush1.msra.mxu0 0.0
        %2034 = vmatprep.subr.mxu0 0.0
        %2035 = vmatpush1.msra.mxu0 0.0
        %2036 = vmatprep.subr.mxu0 0.0
        %2037 = vmatpush1.msra.mxu0 0.0
        %2038 = vmatprep.subr.mxu0 0.0
        %2039 = vmatpush1.msra.mxu0 0.0
        %2040 = vmatprep.subr.mxu0 %v1992
        %2041 = vmatpush1.msra.mxu0 %v1989
        %2042 = vmatprep.subr.mxu0 %v1894
        %2043 = vmatpush1.msra.mxu0 %v1893
        %2044 = vmatprep.subr.mxu0 0.0
        %2045 = vmatpush2.msra.mxu0 0.0
        %2046 = vmatprep.subr.mxu0 0.0
        %2047 = vmatpush2.msra.mxu0 0.0
        %2048 = vmatprep.subr.mxu0 0.0
        %2049 = vmatpush2.msra.mxu0 0.0
        %2050 = vmatprep.subr.mxu0 0.0
        %2051 = vmatpush2.msra.mxu0 0.0
        %2052 = vmatprep.subr.mxu0 0.0
        %2053 = vmatpush2.msra.mxu0 0.0
        %2054 = vmatprep.subr.mxu0 0.0
        %2055 = vmatpush2.msra.mxu0 0.0
        %2056 = vmatprep.subr.mxu0 0.0
        %2057 = vmatpush2.msra.mxu0 0.0
        %2058 = vmatprep.subr.mxu0 0.0
        %2059 = vmatpush2.msra.mxu0 0.0
        %2060 = vmatprep.subr.mxu0 0.0
        %2061 = vmatpush2.msra.mxu0 0.0
        %2062 = vmatprep.subr.mxu0 0.0
        %2063 = vmatpush2.msra.mxu0 0.0
        %2064 = vmatprep.subr.mxu0 0.0
        %2065 = vmatpush2.msra.mxu0 0.0
        %2066 = vmatprep.subr.mxu0 0.0
        %2067 = vmatpush2.msra.mxu0 0.0
        %2068 = vmatprep.subr.mxu0 0.0
        %2069 = vmatpush2.msra.mxu0 0.0
        %2070 = vmatprep.subr.mxu0 0.0
        %2071 = vmatpush2.msra.mxu0 0.0
        %2072 = vmatprep.subr.mxu0 0.0
        %2073 = vmatpush2.msra.mxu0 0.0
        %2074 = vmatprep.subr.mxu0 0.0
        %2075 = vmatpush2.msra.mxu0 0.0
        %2076 = vmatprep.mubr.f32.mxu0 0.0
        %2077 = vmatmul.mubr.f32.gmra.mxu0 %v1983
        %v2078 = vpop.f32.mrf.mxu0
        %v2079 = vadd.f32 %v1975, %v2078
        %v2080 = vpop.f32.mrf.mxu0
        %v2081 = vadd.f32 %v1975, %v2080
        %2082 = vmatprep.mubr.f32.mxu0 0.0
        %2083 = vmatmul.mubr.f32.gmra.mxu0 %v1986
        %v2084 = vpop.f32.mrf.mxu0
        %v2085 = vadd.f32 %v1980, %v2084
        %v2086 = vpop.f32.mrf.mxu0
        %v2087 = vadd.f32 %v1980, %v2086
        %2088 = vdwg.mxu0
        %2089 = vmatprep.subr.mxu0 0.0
        %2090 = vmatpush1.msra.mxu0 0.0
        %2091 = vmatprep.subr.mxu0 0.0
        %2092 = vmatpush1.msra.mxu0 0.0
        %2093 = vmatprep.subr.mxu0 0.0
        %2094 = vmatpush1.msra.mxu0 0.0
        %2095 = vmatprep.subr.mxu0 0.0
        %2096 = vmatpush1.msra.mxu0 0.0
        %2097 = vmatprep.subr.mxu0 0.0
        %2098 = vmatpush1.msra.mxu0 0.0
        %2099 = vmatprep.subr.mxu0 0.0
        %2100 = vmatpush1.msra.mxu0 0.0
        %2101 = vmatprep.subr.mxu0 0.0
        %2102 = vmatpush1.msra.mxu0 0.0
        %2103 = vmatprep.subr.mxu0 0.0
        %2104 = vmatpush1.msra.mxu0 0.0
        %2105 = vmatprep.subr.mxu0 0.0
        %2106 = vmatpush1.msra.mxu0 0.0
        %2107 = vmatprep.subr.mxu0 0.0
        %2108 = vmatpush1.msra.mxu0 0.0
        %2109 = vmatprep.subr.mxu0 0.0
        %2110 = vmatpush1.msra.mxu0 0.0
        %2111 = vmatprep.subr.mxu0 0.0
        %2112 = vmatpush1.msra.mxu0 0.0
        %2113 = vmatprep.subr.mxu0 0.0
        %2114 = vmatpush1.msra.mxu0 0.0
        %2115 = vmatprep.subr.mxu0 0.0
        %2116 = vmatpush1.msra.mxu0 0.0
        %2117 = vmatprep.subr.mxu0 %v1998
        %2118 = vmatpush1.msra.mxu0 %v1995
        %2119 = vmatprep.subr.mxu0 %v1896
        %2120 = vmatpush1.msra.mxu0 %v1895
        %2121 = vmatprep.subr.mxu0 0.0
        %2122 = vmatpush2.msra.mxu0 0.0
        %2123 = vmatprep.subr.mxu0 0.0
        %2124 = vmatpush2.msra.mxu0 0.0
        %2125 = vmatprep.subr.mxu0 0.0
        %2126 = vmatpush2.msra.mxu0 0.0
        %2127 = vmatprep.subr.mxu0 0.0
        %2128 = vmatpush2.msra.mxu0 0.0
        %2129 = vmatprep.subr.mxu0 0.0
        %2130 = vmatpush2.msra.mxu0 0.0
        %2131 = vmatprep.subr.mxu0 0.0
        %2132 = vmatpush2.msra.mxu0 0.0
        %2133 = vmatprep.subr.mxu0 0.0
        %2134 = vmatpush2.msra.mxu0 0.0
        %2135 = vmatprep.subr.mxu0 0.0
        %2136 = vmatpush2.msra.mxu0 0.0
        %2137 = vmatprep.subr.mxu0 0.0
        %2138 = vmatpush2.msra.mxu0 0.0
        %2139 = vmatprep.subr.mxu0 0.0
        %2140 = vmatpush2.msra.mxu0 0.0
        %2141 = vmatprep.subr.mxu0 0.0
        %2142 = vmatpush2.msra.mxu0 0.0
        %2143 = vmatprep.subr.mxu0 0.0
        %2144 = vmatpush2.msra.mxu0 0.0
        %2145 = vmatprep.subr.mxu0 0.0
        %2146 = vmatpush2.msra.mxu0 0.0
        %2147 = vmatprep.subr.mxu0 0.0
        %2148 = vmatpush2.msra.mxu0 0.0
        %2149 = vmatprep.subr.mxu0 0.0
        %2150 = vmatpush2.msra.mxu0 0.0
        %2151 = vmatprep.subr.mxu0 0.0
        %2152 = vmatpush2.msra.mxu0 0.0
        %2153 = vmatprep.mubr.f32.mxu0 0.0
        %2154 = vmatmul.mubr.f32.gmra.mxu0 %v1983
        %v2155 = vpop.f32.mrf.mxu0
        %v2156 = vadd.f32 %v1975, %v2155
        %v2157 = vpop.f32.mrf.mxu0
        %v2158 = vadd.f32 %v1975, %v2157
        %2159 = vmatprep.mubr.f32.mxu0 0.0
        %2160 = vmatmul.mubr.f32.gmra.mxu0 %v1986
        %v2161 = vpop.f32.mrf.mxu0
        %v2162 = vadd.f32 %v1980, %v2161
        %v2163 = vpop.f32.mrf.mxu0
        %v2164 = vadd.f32 %v1980, %v2163
        %2165 = vdwg.mxu0
        %2166 = vmatprep.subr.mxu0 0.0
        %2167 = vmatpush1.msra.mxu0 0.0
        %2168 = vmatprep.subr.mxu0 0.0
        %2169 = vmatpush1.msra.mxu0 0.0
        %2170 = vmatprep.subr.mxu0 0.0
        %2171 = vmatpush1.msra.mxu0 0.0
        %2172 = vmatprep.subr.mxu0 0.0
        %2173 = vmatpush1.msra.mxu0 0.0
        %2174 = vmatprep.subr.mxu0 0.0
        %2175 = vmatpush1.msra.mxu0 0.0
        %2176 = vmatprep.subr.mxu0 0.0
        %2177 = vmatpush1.msra.mxu0 0.0
        %2178 = vmatprep.subr.mxu0 0.0
        %2179 = vmatpush1.msra.mxu0 0.0
        %2180 = vmatprep.subr.mxu0 0.0
        %2181 = vmatpush1.msra.mxu0 0.0
        %2182 = vmatprep.subr.mxu0 0.0
        %2183 = vmatpush1.msra.mxu0 0.0
        %2184 = vmatprep.subr.mxu0 0.0
        %2185 = vmatpush1.msra.mxu0 0.0
        %2186 = vmatprep.subr.mxu0 0.0
        %2187 = vmatpush1.msra.mxu0 0.0
        %2188 = vmatprep.subr.mxu0 0.0
        %2189 = vmatpush1.msra.mxu0 0.0
        %2190 = vmatprep.subr.mxu0 0.0
        %2191 = vmatpush1.msra.mxu0 0.0
        %2192 = vmatprep.subr.mxu0 0.0
        %2193 = vmatpush1.msra.mxu0 0.0
        %2194 = vmatprep.subr.mxu0 %v2004
        %2195 = vmatpush1.msra.mxu0 %v2001
        %2196 = vmatprep.subr.mxu0 %v1898
        %2197 = vmatpush1.msra.mxu0 %v1897
        %2198 = vmatprep.subr.mxu0 0.0
        %2199 = vmatpush2.msra.mxu0 0.0
        %2200 = vmatprep.subr.mxu0 0.0
        %2201 = vmatpush2.msra.mxu0 0.0
        %2202 = vmatprep.subr.mxu0 0.0
        %2203 = vmatpush2.msra.mxu0 0.0
        %2204 = vmatprep.subr.mxu0 0.0
        %2205 = vmatpush2.msra.mxu0 0.0
        %2206 = vmatprep.subr.mxu0 0.0
        %2207 = vmatpush2.msra.mxu0 0.0
        %2208 = vmatprep.subr.mxu0 0.0
        %2209 = vmatpush2.msra.mxu0 0.0
        %2210 = vmatprep.subr.mxu0 0.0
        %2211 = vmatpush2.msra.mxu0 0.0
        %2212 = vmatprep.subr.mxu0 0.0
        %2213 = vmatpush2.msra.mxu0 0.0
        %2214 = vmatprep.subr.mxu0 0.0
        %2215 = vmatpush2.msra.mxu0 0.0
        %2216 = vmatprep.subr.mxu0 0.0
        %2217 = vmatpush2.msra.mxu0 0.0
        %2218 = vmatprep.subr.mxu0 0.0
        %2219 = vmatpush2.msra.mxu0 0.0
        %2220 = vmatprep.subr.mxu0 0.0
        %2221 = vmatpush2.msra.mxu0 0.0
        %2222 = vmatprep.subr.mxu0 0.0
        %2223 = vmatpush2.msra.mxu0 0.0
        %2224 = vmatprep.subr.mxu0 0.0
        %2225 = vmatpush2.msra.mxu0 0.0
        %2226 = vmatprep.subr.mxu0 0.0
        %2227 = vmatpush2.msra.mxu0 0.0
        %2228 = vmatprep.subr.mxu0 0.0
        %2229 = vmatpush2.msra.mxu0 0.0
        %2230 = vmatprep.mubr.f32.mxu0 0.0
        %2231 = vmatmul.mubr.f32.gmra.mxu0 %v1983
        %v2232 = vpop.f32.mrf.mxu0
        %v2233 = vadd.f32 %v1975, %v2232
        %v2234 = vpop.f32.mrf.mxu0
        %v2235 = vadd.f32 %v1975, %v2234
        %2236 = vmatprep.mubr.f32.mxu0 0.0
        %2237 = vmatmul.mubr.f32.gmra.mxu0 %v1986
        %v2238 = vpop.f32.mrf.mxu0
        %v2239 = vadd.f32 %v1980, %v2238
        %v2240 = vpop.f32.mrf.mxu0
        %v2241 = vadd.f32 %v1980, %v2240
        %2242 = vdwg.mxu0
        %2243 = vmatprep.subr.mxu0 0.0
        %2244 = vmatpush1.msra.mxu0 0.0
        %2245 = vmatprep.subr.mxu0 0.0
        %2246 = vmatpush1.msra.mxu0 0.0
        %2247 = vmatprep.subr.mxu0 0.0
        %2248 = vmatpush1.msra.mxu0 0.0
        %2249 = vmatprep.subr.mxu0 0.0
        %2250 = vmatpush1.msra.mxu0 0.0
        %2251 = vmatprep.subr.mxu0 0.0
        %2252 = vmatpush1.msra.mxu0 0.0
        %2253 = vmatprep.subr.mxu0 0.0
        %2254 = vmatpush1.msra.mxu0 0.0
        %2255 = vmatprep.subr.mxu0 0.0
        %2256 = vmatpush1.msra.mxu0 0.0
        %2257 = vmatprep.subr.mxu0 0.0
        %2258 = vmatpush1.msra.mxu0 0.0
        %2259 = vmatprep.subr.mxu0 0.0
        %2260 = vmatpush1.msra.mxu0 0.0
        %2261 = vmatprep.subr.mxu0 0.0
        %2262 = vmatpush1.msra.mxu0 0.0
        %2263 = vmatprep.subr.mxu0 0.0
        %2264 = vmatpush1.msra.mxu0 0.0
        %2265 = vmatprep.subr.mxu0 0.0
        %2266 = vmatpush1.msra.mxu0 0.0
        %2267 = vmatprep.subr.mxu0 0.0
        %2268 = vmatpush1.msra.mxu0 0.0
        %2269 = vmatprep.subr.mxu0 0.0
        %2270 = vmatpush1.msra.mxu0 0.0
        %2271 = vmatprep.subr.mxu0 %v2010
        %2272 = vmatpush1.msra.mxu0 %v2007
        %2273 = vmatprep.subr.mxu0 %v1900
        %2274 = vmatpush1.msra.mxu0 %v1899
        %2275 = vmatprep.subr.mxu0 0.0
        %2276 = vmatpush2.msra.mxu0 0.0
        %2277 = vmatprep.subr.mxu0 0.0
        %2278 = vmatpush2.msra.mxu0 0.0
        %2279 = vmatprep.subr.mxu0 0.0
        %2280 = vmatpush2.msra.mxu0 0.0
        %2281 = vmatprep.subr.mxu0 0.0
        %2282 = vmatpush2.msra.mxu0 0.0
        %2283 = vmatprep.subr.mxu0 0.0
        %2284 = vmatpush2.msra.mxu0 0.0
        %2285 = vmatprep.subr.mxu0 0.0
        %2286 = vmatpush2.msra.mxu0 0.0
        %2287 = vmatprep.subr.mxu0 0.0
        %2288 = vmatpush2.msra.mxu0 0.0
        %2289 = vmatprep.subr.mxu0 0.0
        %2290 = vmatpush2.msra.mxu0 0.0
        %2291 = vmatprep.subr.mxu0 0.0
        %2292 = vmatpush2.msra.mxu0 0.0
        %2293 = vmatprep.subr.mxu0 0.0
        %2294 = vmatpush2.msra.mxu0 0.0
        %2295 = vmatprep.subr.mxu0 0.0
        %2296 = vmatpush2.msra.mxu0 0.0
        %2297 = vmatprep.subr.mxu0 0.0
        %2298 = vmatpush2.msra.mxu0 0.0
        %2299 = vmatprep.subr.mxu0 0.0
        %2300 = vmatpush2.msra.mxu0 0.0
        %2301 = vmatprep.subr.mxu0 0.0
        %2302 = vmatpush2.msra.mxu0 0.0
        %2303 = vmatprep.subr.mxu0 0.0
        %2304 = vmatpush2.msra.mxu0 0.0
        %2305 = vmatprep.subr.mxu0 0.0
        %2306 = vmatpush2.msra.mxu0 0.0
        %2307 = vmatprep.mubr.f32.mxu0 0.0
        %2308 = vmatmul.mubr.f32.gmra.mxu0 %v1983
        %v2309 = vpop.f32.mrf.mxu0
        %v2310 = vadd.f32 %v1975, %v2309
        %v2311 = vpop.f32.mrf.mxu0
        %v2312 = vadd.f32 %v1975, %v2311
        %2313 = vmatprep.mubr.f32.mxu0 0.0
        %2314 = vmatmul.mubr.f32.gmra.mxu0 %v1986
        %v2315 = vpop.f32.mrf.mxu0
        %v2316 = vadd.f32 %v1980, %v2315
        %v2317 = vpop.f32.mrf.mxu0
        %v2318 = vadd.f32 %v1980, %v2317
        %2319 = vdwg.mxu0
        %v2320 = vpack.c.bf16 %v2085, %v2079
        %v2321 = vpack.c.bf16 %v2087, %v2081
        %v2322 = vpack.c.bf16 %v2162, %v2156
        %v2323 = vpack.c.bf16 %v2164, %v2158
        %v2324 = vpack.c.bf16 %v2239, %v2233
        %v2325 = vpack.c.bf16 %v2241, %v2235
        %v2326 = vpack.c.bf16 %v2316, %v2310
        %v2327 = vpack.c.bf16 %v2318, %v2312
        %v2336 = vunpack.c.l.b16 %v2320
        %v2337 = vunpack.c.l.b16 %v2321
        %v2338 = vunpack.c.l.b16 %v2322
        %v2339 = vunpack.c.l.b16 %v2323
        %v2340 = vunpack.c.l.b16 %v2324
        %v2341 = vunpack.c.l.b16 %v2325
        %v2342 = vunpack.c.l.b16 %v2326
        %v2343 = vunpack.c.l.b16 %v2327
        %v2344 = vunpack.c.h.b16 %v2320
        %v2345 = vunpack.c.h.b16 %v2321
        %v2346 = vunpack.c.h.b16 %v2322
        %v2347 = vunpack.c.h.b16 %v2323
        %v2348 = vunpack.c.h.b16 %v2324
        %v2349 = vunpack.c.h.b16 %v2325
        %v2350 = vunpack.c.h.b16 %v2326
        %v2351 = vunpack.c.h.b16 %v2327
        %v2352 = vpack.c.b16 %v2337, %v2336
        %v2353 = vpack.c.b16 %v2339, %v2338
        %v2354 = vpack.c.b16 %v2341, %v2340
        %v2355 = vpack.c.b16 %v2343, %v2342
        %v2356 = vpack.c.b16 %v2345, %v2344
        %v2357 = vpack.c.b16 %v2347, %v2346
        %v2358 = vpack.c.b16 %v2349, %v2348
        %v2359 = vpack.c.b16 %v2351, %v2350
        %s2368 = scalar_lea.vmem %s278, 256 [#allocation5]
        %2369 = vst [vmem:[%s2368] sm:$0xff] %v2352
        %2370 = vst [vmem:[%s2368 + $0x8] sm:$0xff] %v2353
        %2371 = vst [vmem:[%s2368 + $0x10] sm:$0xff] %v2354
        %2372 = vst [vmem:[%s2368 + $0x18] sm:$0xff] %v2355
        %2373 = vst [vmem:[%s2368 + $0x20] sm:$0x11] %v2356
        %2374 = vst [vmem:[%s2368 + $0x28] sm:$0x11] %v2357
        %2375 = vst [vmem:[%s2368 + $0x30] sm:$0x11] %v2358
        %2376 = vst [vmem:[%s2368 + $0x38] sm:$0x11] %v2359
        %v2377 = vtanh.pop %v2079
        %v2378 = vtanh.pop %v2081
        %v2379 = vtanh.pop %v2156
        %v2380 = vtanh.pop %v2158
        %v2381 = vtanh.pop %v2233
        %v2382 = vtanh.pop %v2235
        %v2383 = vtanh.pop %v2310
        %v2384 = vtanh.pop %v2312
        %v2385 = vtanh.pop %v2085
        %v2386 = vtanh.pop %v2087
        %v2387 = vtanh.pop %v2162
        %v2388 = vtanh.pop %v2164
        %v2389 = vtanh.pop %v2239
        %v2390 = vtanh.pop %v2241
        %v2391 = vtanh.pop %v2316
        %v2392 = vtanh.pop %v2318
        %v2393 = vpack.c.bf16 %v2385, %v2377
        %v2394 = vpack.c.bf16 %v2386, %v2378
        %v2395 = vpack.c.bf16 %v2387, %v2379
        %v2396 = vpack.c.bf16 %v2388, %v2380
        %v2397 = vpack.c.bf16 %v2389, %v2381
        %v2398 = vpack.c.bf16 %v2390, %v2382
        %v2399 = vpack.c.bf16 %v2391, %v2383
        %v2400 = vpack.c.bf16 %v2392, %v2384
        %v2409 = vunpack.c.l.b16 %v2393
        %v2410 = vunpack.c.l.b16 %v2394
        %v2411 = vunpack.c.l.b16 %v2395
        %v2412 = vunpack.c.l.b16 %v2396
        %v2413 = vunpack.c.l.b16 %v2397
        %v2414 = vunpack.c.l.b16 %v2398
        %v2415 = vunpack.c.l.b16 %v2399
        %v2416 = vunpack.c.l.b16 %v2400
        %v2417 = vunpack.c.h.b16 %v2393
        %v2418 = vunpack.c.h.b16 %v2394
        %v2419 = vunpack.c.h.b16 %v2395
        %v2420 = vunpack.c.h.b16 %v2396
        %v2421 = vunpack.c.h.b16 %v2397
        %v2422 = vunpack.c.h.b16 %v2398
        %v2423 = vunpack.c.h.b16 %v2399
        %v2424 = vunpack.c.h.b16 %v2400
        %v2425 = vpack.c.b16 %v2410, %v2409
        %v2426 = vpack.c.b16 %v2412, %v2411
        %v2427 = vpack.c.b16 %v2414, %v2413
        %v2428 = vpack.c.b16 %v2416, %v2415
        %v2429 = vpack.c.b16 %v2418, %v2417
        %v2430 = vpack.c.b16 %v2420, %v2419
        %v2431 = vpack.c.b16 %v2422, %v2421
        %v2432 = vpack.c.b16 %v2424, %v2423
        %s2441 = scalar_lea.vmem %s278, 768 [#allocation5]
        %2442 = vst [vmem:[%s2441] sm:$0xff] %v2425
        %2443 = vst [vmem:[%s2441 + $0x8] sm:$0xff] %v2426
        %2444 = vst [vmem:[%s2441 + $0x10] sm:$0xff] %v2427
        %2445 = vst [vmem:[%s2441 + $0x18] sm:$0xff] %v2428
        %2446 = vst [vmem:[%s2441 + $0x20] sm:$0x11] %v2429
        %2447 = vst [vmem:[%s2441 + $0x28] sm:$0x11] %v2430
        %2448 = vst [vmem:[%s2441 + $0x30] sm:$0x11] %v2431
        %2449 = vst [vmem:[%s2441 + $0x38] sm:$0x11] %v2432
        %s2450 = scalar_lea.vmem %s2, 64
        %v2451 = vld [vmem:[%s2450] sm:$0xff]
        %v2452 = vld [vmem:[%s2450 + $0x8] sm:$0x3]
        %s2453 = scalar_lea.vmem %s3, 80
        %v2454 = vld [vmem:[%s2453] sm:$0xff]
        %v2455 = vld [vmem:[%s2453 + $0x8] sm:$0x3]
        %2457 = vset.pattern.permute.xlu0 0
        %2458 = vperm.xlu0 %2457, %v2454
        %v2459 = vpop.permute.xlu0 %2458
        %2462 = vset.pattern.permute.xlu0 0
        %2463 = vperm.xlu0 %2462, %v2455
        %v2464 = vpop.permute.xlu0 %2463
        %v2467 = vsel %vm528, %v2451, 0
        %v2470 = vsel %vm528, %v2452, 0
        %v2473 = vsel %vm535, %v2385, 0
        %v2476 = vsel %vm535, %v2386, 0
        %v2479 = vsel %vm535, %v2387, 0
        %v2482 = vsel %vm535, %v2388, 0
        %v2485 = vsel %vm535, %v2389, 0
        %v2488 = vsel %vm535, %v2390, 0
        %v2491 = vsel %vm535, %v2391, 0
        %v2494 = vsel %vm535, %v2392, 0
        %2496 = vmatprep.subr.mxu0 0.0
        %2497 = vmatpush1.msra.mxu0 0.0
        %2498 = vmatprep.subr.mxu0 0.0
        %2499 = vmatpush1.msra.mxu0 0.0
        %2500 = vmatprep.subr.mxu0 0.0
        %2501 = vmatpush1.msra.mxu0 0.0
        %2502 = vmatprep.subr.mxu0 0.0
        %2503 = vmatpush1.msra.mxu0 0.0
        %2504 = vmatprep.subr.mxu0 0.0
        %2505 = vmatpush1.msra.mxu0 0.0
        %2506 = vmatprep.subr.mxu0 0.0
        %2507 = vmatpush1.msra.mxu0 0.0
        %2508 = vmatprep.subr.mxu0 0.0
        %2509 = vmatpush1.msra.mxu0 0.0
        %2510 = vmatprep.subr.mxu0 0.0
        %2511 = vmatpush1.msra.mxu0 0.0
        %2512 = vmatprep.subr.mxu0 0.0
        %2513 = vmatpush1.msra.mxu0 0.0
        %2514 = vmatprep.subr.mxu0 0.0
        %2515 = vmatpush1.msra.mxu0 0.0
        %2516 = vmatprep.subr.mxu0 0.0
        %2517 = vmatpush1.msra.mxu0 0.0
        %2518 = vmatprep.subr.mxu0 0.0
        %2519 = vmatpush1.msra.mxu0 0.0
        %2520 = vmatprep.subr.mxu0 0.0
        %2521 = vmatpush1.msra.mxu0 0.0
        %2522 = vmatprep.subr.mxu0 0.0
        %2523 = vmatpush1.msra.mxu0 0.0
        %2524 = vmatprep.subr.mxu0 %v2476
        %2525 = vmatpush1.msra.mxu0 %v2473
        %2526 = vmatprep.subr.mxu0 %v2378
        %2527 = vmatpush1.msra.mxu0 %v2377
        %2528 = vmatprep.subr.mxu0 0.0
        %2529 = vmatpush2.msra.mxu0 0.0
        %2530 = vmatprep.subr.mxu0 0.0
        %2531 = vmatpush2.msra.mxu0 0.0
        %2532 = vmatprep.subr.mxu0 0.0
        %2533 = vmatpush2.msra.mxu0 0.0
        %2534 = vmatprep.subr.mxu0 0.0
        %2535 = vmatpush2.msra.mxu0 0.0
        %2536 = vmatprep.subr.mxu0 0.0
        %2537 = vmatpush2.msra.mxu0 0.0
        %2538 = vmatprep.subr.mxu0 0.0
        %2539 = vmatpush2.msra.mxu0 0.0
        %2540 = vmatprep.subr.mxu0 0.0
        %2541 = vmatpush2.msra.mxu0 0.0
        %2542 = vmatprep.subr.mxu0 0.0
        %2543 = vmatpush2.msra.mxu0 0.0
        %2544 = vmatprep.subr.mxu0 0.0
        %2545 = vmatpush2.msra.mxu0 0.0
        %2546 = vmatprep.subr.mxu0 0.0
        %2547 = vmatpush2.msra.mxu0 0.0
        %2548 = vmatprep.subr.mxu0 0.0
        %2549 = vmatpush2.msra.mxu0 0.0
        %2550 = vmatprep.subr.mxu0 0.0
        %2551 = vmatpush2.msra.mxu0 0.0
        %2552 = vmatprep.subr.mxu0 0.0
        %2553 = vmatpush2.msra.mxu0 0.0
        %2554 = vmatprep.subr.mxu0 0.0
        %2555 = vmatpush2.msra.mxu0 0.0
        %2556 = vmatprep.subr.mxu0 0.0
        %2557 = vmatpush2.msra.mxu0 0.0
        %2558 = vmatprep.subr.mxu0 0.0
        %2559 = vmatpush2.msra.mxu0 0.0
        %2560 = vmatprep.mubr.f32.mxu0 0.0
        %2561 = vmatmul.mubr.f32.gmra.mxu0 %v2467
        %v2562 = vpop.f32.mrf.mxu0
        %v2563 = vadd.f32 %v2459, %v2562
        %v2564 = vpop.f32.mrf.mxu0
        %v2565 = vadd.f32 %v2459, %v2564
        %2566 = vmatprep.mubr.f32.mxu0 0.0
        %2567 = vmatmul.mubr.f32.gmra.mxu0 %v2470
        %v2568 = vpop.f32.mrf.mxu0
        %v2569 = vadd.f32 %v2464, %v2568
        %v2570 = vpop.f32.mrf.mxu0
        %v2571 = vadd.f32 %v2464, %v2570
        %2572 = vdwg.mxu0
        %2573 = vmatprep.subr.mxu0 0.0
        %2574 = vmatpush1.msra.mxu0 0.0
        %2575 = vmatprep.subr.mxu0 0.0
        %2576 = vmatpush1.msra.mxu0 0.0
        %2577 = vmatprep.subr.mxu0 0.0
        %2578 = vmatpush1.msra.mxu0 0.0
        %2579 = vmatprep.subr.mxu0 0.0
        %2580 = vmatpush1.msra.mxu0 0.0
        %2581 = vmatprep.subr.mxu0 0.0
        %2582 = vmatpush1.msra.mxu0 0.0
        %2583 = vmatprep.subr.mxu0 0.0
        %2584 = vmatpush1.msra.mxu0 0.0
        %2585 = vmatprep.subr.mxu0 0.0
        %2586 = vmatpush1.msra.mxu0 0.0
        %2587 = vmatprep.subr.mxu0 0.0
        %2588 = vmatpush1.msra.mxu0 0.0
        %2589 = vmatprep.subr.mxu0 0.0
        %2590 = vmatpush1.msra.mxu0 0.0
        %2591 = vmatprep.subr.mxu0 0.0
        %2592 = vmatpush1.msra.mxu0 0.0
        %2593 = vmatprep.subr.mxu0 0.0
        %2594 = vmatpush1.msra.mxu0 0.0
        %2595 = vmatprep.subr.mxu0 0.0
        %2596 = vmatpush1.msra.mxu0 0.0
        %2597 = vmatprep.subr.mxu0 0.0
        %2598 = vmatpush1.msra.mxu0 0.0
        %2599 = vmatprep.subr.mxu0 0.0
        %2600 = vmatpush1.msra.mxu0 0.0
        %2601 = vmatprep.subr.mxu0 %v2482
        %2602 = vmatpush1.msra.mxu0 %v2479
        %2603 = vmatprep.subr.mxu0 %v2380
        %2604 = vmatpush1.msra.mxu0 %v2379
        %2605 = vmatprep.subr.mxu0 0.0
        %2606 = vmatpush2.msra.mxu0 0.0
        %2607 = vmatprep.subr.mxu0 0.0
        %2608 = vmatpush2.msra.mxu0 0.0
        %2609 = vmatprep.subr.mxu0 0.0
        %2610 = vmatpush2.msra.mxu0 0.0
        %2611 = vmatprep.subr.mxu0 0.0
        %2612 = vmatpush2.msra.mxu0 0.0
        %2613 = vmatprep.subr.mxu0 0.0
        %2614 = vmatpush2.msra.mxu0 0.0
        %2615 = vmatprep.subr.mxu0 0.0
        %2616 = vmatpush2.msra.mxu0 0.0
        %2617 = vmatprep.subr.mxu0 0.0
        %2618 = vmatpush2.msra.mxu0 0.0
        %2619 = vmatprep.subr.mxu0 0.0
        %2620 = vmatpush2.msra.mxu0 0.0
        %2621 = vmatprep.subr.mxu0 0.0
        %2622 = vmatpush2.msra.mxu0 0.0
        %2623 = vmatprep.subr.mxu0 0.0
        %2624 = vmatpush2.msra.mxu0 0.0
        %2625 = vmatprep.subr.mxu0 0.0
        %2626 = vmatpush2.msra.mxu0 0.0
        %2627 = vmatprep.subr.mxu0 0.0
        %2628 = vmatpush2.msra.mxu0 0.0
        %2629 = vmatprep.subr.mxu0 0.0
        %2630 = vmatpush2.msra.mxu0 0.0
        %2631 = vmatprep.subr.mxu0 0.0
        %2632 = vmatpush2.msra.mxu0 0.0
        %2633 = vmatprep.subr.mxu0 0.0
        %2634 = vmatpush2.msra.mxu0 0.0
        %2635 = vmatprep.subr.mxu0 0.0
        %2636 = vmatpush2.msra.mxu0 0.0
        %2637 = vmatprep.mubr.f32.mxu0 0.0
        %2638 = vmatmul.mubr.f32.gmra.mxu0 %v2467
        %v2639 = vpop.f32.mrf.mxu0
        %v2640 = vadd.f32 %v2459, %v2639
        %v2641 = vpop.f32.mrf.mxu0
        %v2642 = vadd.f32 %v2459, %v2641
        %2643 = vmatprep.mubr.f32.mxu0 0.0
        %2644 = vmatmul.mubr.f32.gmra.mxu0 %v2470
        %v2645 = vpop.f32.mrf.mxu0
        %v2646 = vadd.f32 %v2464, %v2645
        %v2647 = vpop.f32.mrf.mxu0
        %v2648 = vadd.f32 %v2464, %v2647
        %2649 = vdwg.mxu0
        %2650 = vmatprep.subr.mxu0 0.0
        %2651 = vmatpush1.msra.mxu0 0.0
        %2652 = vmatprep.subr.mxu0 0.0
        %2653 = vmatpush1.msra.mxu0 0.0
        %2654 = vmatprep.subr.mxu0 0.0
        %2655 = vmatpush1.msra.mxu0 0.0
        %2656 = vmatprep.subr.mxu0 0.0
        %2657 = vmatpush1.msra.mxu0 0.0
        %2658 = vmatprep.subr.mxu0 0.0
        %2659 = vmatpush1.msra.mxu0 0.0
        %2660 = vmatprep.subr.mxu0 0.0
        %2661 = vmatpush1.msra.mxu0 0.0
        %2662 = vmatprep.subr.mxu0 0.0
        %2663 = vmatpush1.msra.mxu0 0.0
        %2664 = vmatprep.subr.mxu0 0.0
        %2665 = vmatpush1.msra.mxu0 0.0
        %2666 = vmatprep.subr.mxu0 0.0
        %2667 = vmatpush1.msra.mxu0 0.0
        %2668 = vmatprep.subr.mxu0 0.0
        %2669 = vmatpush1.msra.mxu0 0.0
        %2670 = vmatprep.subr.mxu0 0.0
        %2671 = vmatpush1.msra.mxu0 0.0
        %2672 = vmatprep.subr.mxu0 0.0
        %2673 = vmatpush1.msra.mxu0 0.0
        %2674 = vmatprep.subr.mxu0 0.0
        %2675 = vmatpush1.msra.mxu0 0.0
        %2676 = vmatprep.subr.mxu0 0.0
        %2677 = vmatpush1.msra.mxu0 0.0
        %2678 = vmatprep.subr.mxu0 %v2488
        %2679 = vmatpush1.msra.mxu0 %v2485
        %2680 = vmatprep.subr.mxu0 %v2382
        %2681 = vmatpush1.msra.mxu0 %v2381
        %2682 = vmatprep.subr.mxu0 0.0
        %2683 = vmatpush2.msra.mxu0 0.0
        %2684 = vmatprep.subr.mxu0 0.0
        %2685 = vmatpush2.msra.mxu0 0.0
        %2686 = vmatprep.subr.mxu0 0.0
        %2687 = vmatpush2.msra.mxu0 0.0
        %2688 = vmatprep.subr.mxu0 0.0
        %2689 = vmatpush2.msra.mxu0 0.0
        %2690 = vmatprep.subr.mxu0 0.0
        %2691 = vmatpush2.msra.mxu0 0.0
        %2692 = vmatprep.subr.mxu0 0.0
        %2693 = vmatpush2.msra.mxu0 0.0
        %2694 = vmatprep.subr.mxu0 0.0
        %2695 = vmatpush2.msra.mxu0 0.0
        %2696 = vmatprep.subr.mxu0 0.0
        %2697 = vmatpush2.msra.mxu0 0.0
        %2698 = vmatprep.subr.mxu0 0.0
        %2699 = vmatpush2.msra.mxu0 0.0
        %2700 = vmatprep.subr.mxu0 0.0
        %2701 = vmatpush2.msra.mxu0 0.0
        %2702 = vmatprep.subr.mxu0 0.0
        %2703 = vmatpush2.msra.mxu0 0.0
        %2704 = vmatprep.subr.mxu0 0.0
        %2705 = vmatpush2.msra.mxu0 0.0
        %2706 = vmatprep.subr.mxu0 0.0
        %2707 = vmatpush2.msra.mxu0 0.0
        %2708 = vmatprep.subr.mxu0 0.0
        %2709 = vmatpush2.msra.mxu0 0.0
        %2710 = vmatprep.subr.mxu0 0.0
        %2711 = vmatpush2.msra.mxu0 0.0
        %2712 = vmatprep.subr.mxu0 0.0
        %2713 = vmatpush2.msra.mxu0 0.0
        %2714 = vmatprep.mubr.f32.mxu0 0.0
        %2715 = vmatmul.mubr.f32.gmra.mxu0 %v2467
        %v2716 = vpop.f32.mrf.mxu0
        %v2717 = vadd.f32 %v2459, %v2716
        %v2718 = vpop.f32.mrf.mxu0
        %v2719 = vadd.f32 %v2459, %v2718
        %2720 = vmatprep.mubr.f32.mxu0 0.0
        %2721 = vmatmul.mubr.f32.gmra.mxu0 %v2470
        %v2722 = vpop.f32.mrf.mxu0
        %v2723 = vadd.f32 %v2464, %v2722
        %v2724 = vpop.f32.mrf.mxu0
        %v2725 = vadd.f32 %v2464, %v2724
        %2726 = vdwg.mxu0
        %2727 = vmatprep.subr.mxu0 0.0
        %2728 = vmatpush1.msra.mxu0 0.0
        %2729 = vmatprep.subr.mxu0 0.0
        %2730 = vmatpush1.msra.mxu0 0.0
        %2731 = vmatprep.subr.mxu0 0.0
        %2732 = vmatpush1.msra.mxu0 0.0
        %2733 = vmatprep.subr.mxu0 0.0
        %2734 = vmatpush1.msra.mxu0 0.0
        %2735 = vmatprep.subr.mxu0 0.0
        %2736 = vmatpush1.msra.mxu0 0.0
        %2737 = vmatprep.subr.mxu0 0.0
        %2738 = vmatpush1.msra.mxu0 0.0
        %2739 = vmatprep.subr.mxu0 0.0
        %2740 = vmatpush1.msra.mxu0 0.0
        %2741 = vmatprep.subr.mxu0 0.0
        %2742 = vmatpush1.msra.mxu0 0.0
        %2743 = vmatprep.subr.mxu0 0.0
        %2744 = vmatpush1.msra.mxu0 0.0
        %2745 = vmatprep.subr.mxu0 0.0
        %2746 = vmatpush1.msra.mxu0 0.0
        %2747 = vmatprep.subr.mxu0 0.0
        %2748 = vmatpush1.msra.mxu0 0.0
        %2749 = vmatprep.subr.mxu0 0.0
        %2750 = vmatpush1.msra.mxu0 0.0
        %2751 = vmatprep.subr.mxu0 0.0
        %2752 = vmatpush1.msra.mxu0 0.0
        %2753 = vmatprep.subr.mxu0 0.0
        %2754 = vmatpush1.msra.mxu0 0.0
        %2755 = vmatprep.subr.mxu0 %v2494
        %2756 = vmatpush1.msra.mxu0 %v2491
        %2757 = vmatprep.subr.mxu0 %v2384
        %2758 = vmatpush1.msra.mxu0 %v2383
        %2759 = vmatprep.subr.mxu0 0.0
        %2760 = vmatpush2.msra.mxu0 0.0
        %2761 = vmatprep.subr.mxu0 0.0
        %2762 = vmatpush2.msra.mxu0 0.0
        %2763 = vmatprep.subr.mxu0 0.0
        %2764 = vmatpush2.msra.mxu0 0.0
        %2765 = vmatprep.subr.mxu0 0.0
        %2766 = vmatpush2.msra.mxu0 0.0
        %2767 = vmatprep.subr.mxu0 0.0
        %2768 = vmatpush2.msra.mxu0 0.0
        %2769 = vmatprep.subr.mxu0 0.0
        %2770 = vmatpush2.msra.mxu0 0.0
        %2771 = vmatprep.subr.mxu0 0.0
        %2772 = vmatpush2.msra.mxu0 0.0
        %2773 = vmatprep.subr.mxu0 0.0
        %2774 = vmatpush2.msra.mxu0 0.0
        %2775 = vmatprep.subr.mxu0 0.0
        %2776 = vmatpush2.msra.mxu0 0.0
        %2777 = vmatprep.subr.mxu0 0.0
        %2778 = vmatpush2.msra.mxu0 0.0
        %2779 = vmatprep.subr.mxu0 0.0
        %2780 = vmatpush2.msra.mxu0 0.0
        %2781 = vmatprep.subr.mxu0 0.0
        %2782 = vmatpush2.msra.mxu0 0.0
        %2783 = vmatprep.subr.mxu0 0.0
        %2784 = vmatpush2.msra.mxu0 0.0
        %2785 = vmatprep.subr.mxu0 0.0
        %2786 = vmatpush2.msra.mxu0 0.0
        %2787 = vmatprep.subr.mxu0 0.0
        %2788 = vmatpush2.msra.mxu0 0.0
        %2789 = vmatprep.subr.mxu0 0.0
        %2790 = vmatpush2.msra.mxu0 0.0
        %2791 = vmatprep.mubr.f32.mxu0 0.0
        %2792 = vmatmul.mubr.f32.gmra.mxu0 %v2467
        %v2793 = vpop.f32.mrf.mxu0
        %v2794 = vadd.f32 %v2459, %v2793
        %v2795 = vpop.f32.mrf.mxu0
        %v2796 = vadd.f32 %v2459, %v2795
        %2797 = vmatprep.mubr.f32.mxu0 0.0
        %2798 = vmatmul.mubr.f32.gmra.mxu0 %v2470
        %v2799 = vpop.f32.mrf.mxu0
        %v2800 = vadd.f32 %v2464, %v2799
        %v2801 = vpop.f32.mrf.mxu0
        %v2802 = vadd.f32 %v2464, %v2801
        %2803 = vdwg.mxu0
        %v2804 = vpack.c.bf16 %v2569, %v2563
        %v2805 = vpack.c.bf16 %v2571, %v2565
        %v2806 = vpack.c.bf16 %v2646, %v2640
        %v2807 = vpack.c.bf16 %v2648, %v2642
        %v2808 = vpack.c.bf16 %v2723, %v2717
        %v2809 = vpack.c.bf16 %v2725, %v2719
        %v2810 = vpack.c.bf16 %v2800, %v2794
        %v2811 = vpack.c.bf16 %v2802, %v2796
        %v2820 = vunpack.c.l.b16 %v2804
        %v2821 = vunpack.c.l.b16 %v2805
        %v2822 = vunpack.c.l.b16 %v2806
        %v2823 = vunpack.c.l.b16 %v2807
        %v2824 = vunpack.c.l.b16 %v2808
        %v2825 = vunpack.c.l.b16 %v2809
        %v2826 = vunpack.c.l.b16 %v2810
        %v2827 = vunpack.c.l.b16 %v2811
        %v2828 = vunpack.c.h.b16 %v2804
        %v2829 = vunpack.c.h.b16 %v2805
        %v2830 = vunpack.c.h.b16 %v2806
        %v2831 = vunpack.c.h.b16 %v2807
        %v2832 = vunpack.c.h.b16 %v2808
        %v2833 = vunpack.c.h.b16 %v2809
        %v2834 = vunpack.c.h.b16 %v2810
        %v2835 = vunpack.c.h.b16 %v2811
        %v2836 = vpack.c.b16 %v2821, %v2820
        %v2837 = vpack.c.b16 %v2823, %v2822
        %v2838 = vpack.c.b16 %v2825, %v2824
        %v2839 = vpack.c.b16 %v2827, %v2826
        %v2840 = vpack.c.b16 %v2829, %v2828
        %v2841 = vpack.c.b16 %v2831, %v2830
        %v2842 = vpack.c.b16 %v2833, %v2832
        %v2843 = vpack.c.b16 %v2835, %v2834
        %s2852 = scalar_lea.vmem %s278, 320 [#allocation5]
        %2853 = vst [vmem:[%s2852] sm:$0xff] %v2836
        %2854 = vst [vmem:[%s2852 + $0x8] sm:$0xff] %v2837
        %2855 = vst [vmem:[%s2852 + $0x10] sm:$0xff] %v2838
        %2856 = vst [vmem:[%s2852 + $0x18] sm:$0xff] %v2839
        %2857 = vst [vmem:[%s2852 + $0x20] sm:$0x11] %v2840
        %2858 = vst [vmem:[%s2852 + $0x28] sm:$0x11] %v2841
        %2859 = vst [vmem:[%s2852 + $0x30] sm:$0x11] %v2842
        %2860 = vst [vmem:[%s2852 + $0x38] sm:$0x11] %v2843
        %v2861 = vtanh.pop %v2563
        %v2862 = vtanh.pop %v2565
        %v2863 = vtanh.pop %v2640
        %v2864 = vtanh.pop %v2642
        %v2865 = vtanh.pop %v2717
        %v2866 = vtanh.pop %v2719
        %v2867 = vtanh.pop %v2794
        %v2868 = vtanh.pop %v2796
        %v2869 = vtanh.pop %v2569
        %v2870 = vtanh.pop %v2571
        %v2871 = vtanh.pop %v2646
        %v2872 = vtanh.pop %v2648
        %v2873 = vtanh.pop %v2723
        %v2874 = vtanh.pop %v2725
        %v2875 = vtanh.pop %v2800
        %v2876 = vtanh.pop %v2802
        %v2877 = vpack.c.bf16 %v2869, %v2861
        %v2878 = vpack.c.bf16 %v2870, %v2862
        %v2879 = vpack.c.bf16 %v2871, %v2863
        %v2880 = vpack.c.bf16 %v2872, %v2864
        %v2881 = vpack.c.bf16 %v2873, %v2865
        %v2882 = vpack.c.bf16 %v2874, %v2866
        %v2883 = vpack.c.bf16 %v2875, %v2867
        %v2884 = vpack.c.bf16 %v2876, %v2868
        %v2893 = vunpack.c.l.b16 %v2877
        %v2894 = vunpack.c.l.b16 %v2878
        %v2895 = vunpack.c.l.b16 %v2879
        %v2896 = vunpack.c.l.b16 %v2880
        %v2897 = vunpack.c.l.b16 %v2881
        %v2898 = vunpack.c.l.b16 %v2882
        %v2899 = vunpack.c.l.b16 %v2883
        %v2900 = vunpack.c.l.b16 %v2884
        %v2901 = vunpack.c.h.b16 %v2877
        %v2902 = vunpack.c.h.b16 %v2878
        %v2903 = vunpack.c.h.b16 %v2879
        %v2904 = vunpack.c.h.b16 %v2880
        %v2905 = vunpack.c.h.b16 %v2881
        %v2906 = vunpack.c.h.b16 %v2882
        %v2907 = vunpack.c.h.b16 %v2883
        %v2908 = vunpack.c.h.b16 %v2884
        %v2909 = vpack.c.b16 %v2894, %v2893
        %v2910 = vpack.c.b16 %v2896, %v2895
        %v2911 = vpack.c.b16 %v2898, %v2897
        %v2912 = vpack.c.b16 %v2900, %v2899
        %v2913 = vpack.c.b16 %v2902, %v2901
        %v2914 = vpack.c.b16 %v2904, %v2903
        %v2915 = vpack.c.b16 %v2906, %v2905
        %v2916 = vpack.c.b16 %v2908, %v2907
        %s2925 = scalar_lea.vmem %s278, 832 [#allocation5]
        %2926 = vst [vmem:[%s2925] sm:$0xff] %v2909
        %2927 = vst [vmem:[%s2925 + $0x8] sm:$0xff] %v2910
        %2928 = vst [vmem:[%s2925 + $0x10] sm:$0xff] %v2911
        %2929 = vst [vmem:[%s2925 + $0x18] sm:$0xff] %v2912
        %2930 = vst [vmem:[%s2925 + $0x20] sm:$0x11] %v2913
        %2931 = vst [vmem:[%s2925 + $0x28] sm:$0x11] %v2914
        %2932 = vst [vmem:[%s2925 + $0x30] sm:$0x11] %v2915
        %2933 = vst [vmem:[%s2925 + $0x38] sm:$0x11] %v2916
        %s2934 = scalar_lea.vmem %s2, 80
        %v2935 = vld [vmem:[%s2934] sm:$0xff]
        %v2936 = vld [vmem:[%s2934 + $0x8] sm:$0x3]
        %s2937 = scalar_lea.vmem %s3, 96
        %v2938 = vld [vmem:[%s2937] sm:$0xff]
        %v2939 = vld [vmem:[%s2937 + $0x8] sm:$0x3]
        %2941 = vset.pattern.permute.xlu0 0
        %2942 = vperm.xlu0 %2941, %v2938
        %v2943 = vpop.permute.xlu0 %2942
        %2946 = vset.pattern.permute.xlu0 0
        %2947 = vperm.xlu0 %2946, %v2939
        %v2948 = vpop.permute.xlu0 %2947
        %v2951 = vsel %vm528, %v2935, 0
        %v2954 = vsel %vm528, %v2936, 0
        %v2957 = vsel %vm535, %v2869, 0
        %v2960 = vsel %vm535, %v2870, 0
        %v2963 = vsel %vm535, %v2871, 0
        %v2966 = vsel %vm535, %v2872, 0
        %v2969 = vsel %vm535, %v2873, 0
        %v2972 = vsel %vm535, %v2874, 0
        %v2975 = vsel %vm535, %v2875, 0
        %v2978 = vsel %vm535, %v2876, 0
        %2980 = vmatprep.subr.mxu0 0.0
        %2981 = vmatpush1.msra.mxu0 0.0
        %2982 = vmatprep.subr.mxu0 0.0
        %2983 = vmatpush1.msra.mxu0 0.0
        %2984 = vmatprep.subr.mxu0 0.0
        %2985 = vmatpush1.msra.mxu0 0.0
        %2986 = vmatprep.subr.mxu0 0.0
        %2987 = vmatpush1.msra.mxu0 0.0
        %2988 = vmatprep.subr.mxu0 0.0
        %2989 = vmatpush1.msra.mxu0 0.0
        %2990 = vmatprep.subr.mxu0 0.0
        %2991 = vmatpush1.msra.mxu0 0.0
        %2992 = vmatprep.subr.mxu0 0.0
        %2993 = vmatpush1.msra.mxu0 0.0
        %2994 = vmatprep.subr.mxu0 0.0
        %2995 = vmatpush1.msra.mxu0 0.0
        %2996 = vmatprep.subr.mxu0 0.0
        %2997 = vmatpush1.msra.mxu0 0.0
        %2998 = vmatprep.subr.mxu0 0.0
        %2999 = vmatpush1.msra.mxu0 0.0
        %3000 = vmatprep.subr.mxu0 0.0
        %3001 = vmatpush1.msra.mxu0 0.0
        %3002 = vmatprep.subr.mxu0 0.0
        %3003 = vmatpush1.msra.mxu0 0.0
        %3004 = vmatprep.subr.mxu0 0.0
        %3005 = vmatpush1.msra.mxu0 0.0
        %3006 = vmatprep.subr.mxu0 0.0
        %3007 = vmatpush1.msra.mxu0 0.0
        %3008 = vmatprep.subr.mxu0 %v2960
        %3009 = vmatpush1.msra.mxu0 %v2957
        %3010 = vmatprep.subr.mxu0 %v2862
        %3011 = vmatpush1.msra.mxu0 %v2861
        %3012 = vmatprep.subr.mxu0 0.0
        %3013 = vmatpush2.msra.mxu0 0.0
        %3014 = vmatprep.subr.mxu0 0.0
        %3015 = vmatpush2.msra.mxu0 0.0
        %3016 = vmatprep.subr.mxu0 0.0
        %3017 = vmatpush2.msra.mxu0 0.0
        %3018 = vmatprep.subr.mxu0 0.0
        %3019 = vmatpush2.msra.mxu0 0.0
        %3020 = vmatprep.subr.mxu0 0.0
        %3021 = vmatpush2.msra.mxu0 0.0
        %3022 = vmatprep.subr.mxu0 0.0
        %3023 = vmatpush2.msra.mxu0 0.0
        %3024 = vmatprep.subr.mxu0 0.0
        %3025 = vmatpush2.msra.mxu0 0.0
        %3026 = vmatprep.subr.mxu0 0.0
        %3027 = vmatpush2.msra.mxu0 0.0
        %3028 = vmatprep.subr.mxu0 0.0
        %3029 = vmatpush2.msra.mxu0 0.0
        %3030 = vmatprep.subr.mxu0 0.0
        %3031 = vmatpush2.msra.mxu0 0.0
        %3032 = vmatprep.subr.mxu0 0.0
        %3033 = vmatpush2.msra.mxu0 0.0
        %3034 = vmatprep.subr.mxu0 0.0
        %3035 = vmatpush2.msra.mxu0 0.0
        %3036 = vmatprep.subr.mxu0 0.0
        %3037 = vmatpush2.msra.mxu0 0.0
        %3038 = vmatprep.subr.mxu0 0.0
        %3039 = vmatpush2.msra.mxu0 0.0
        %3040 = vmatprep.subr.mxu0 0.0
        %3041 = vmatpush2.msra.mxu0 0.0
        %3042 = vmatprep.subr.mxu0 0.0
        %3043 = vmatpush2.msra.mxu0 0.0
        %3044 = vmatprep.mubr.f32.mxu0 0.0
        %3045 = vmatmul.mubr.f32.gmra.mxu0 %v2951
        %v3046 = vpop.f32.mrf.mxu0
        %v3047 = vadd.f32 %v2943, %v3046
        %v3048 = vpop.f32.mrf.mxu0
        %v3049 = vadd.f32 %v2943, %v3048
        %3050 = vmatprep.mubr.f32.mxu0 0.0
        %3051 = vmatmul.mubr.f32.gmra.mxu0 %v2954
        %v3052 = vpop.f32.mrf.mxu0
        %v3053 = vadd.f32 %v2948, %v3052
        %v3054 = vpop.f32.mrf.mxu0
        %v3055 = vadd.f32 %v2948, %v3054
        %3056 = vdwg.mxu0
        %3057 = vmatprep.subr.mxu0 0.0
        %3058 = vmatpush1.msra.mxu0 0.0
        %3059 = vmatprep.subr.mxu0 0.0
        %3060 = vmatpush1.msra.mxu0 0.0
        %3061 = vmatprep.subr.mxu0 0.0
        %3062 = vmatpush1.msra.mxu0 0.0
        %3063 = vmatprep.subr.mxu0 0.0
        %3064 = vmatpush1.msra.mxu0 0.0
        %3065 = vmatprep.subr.mxu0 0.0
        %3066 = vmatpush1.msra.mxu0 0.0
        %3067 = vmatprep.subr.mxu0 0.0
        %3068 = vmatpush1.msra.mxu0 0.0
        %3069 = vmatprep.subr.mxu0 0.0
        %3070 = vmatpush1.msra.mxu0 0.0
        %3071 = vmatprep.subr.mxu0 0.0
        %3072 = vmatpush1.msra.mxu0 0.0
        %3073 = vmatprep.subr.mxu0 0.0
        %3074 = vmatpush1.msra.mxu0 0.0
        %3075 = vmatprep.subr.mxu0 0.0
        %3076 = vmatpush1.msra.mxu0 0.0
        %3077 = vmatprep.subr.mxu0 0.0
        %3078 = vmatpush1.msra.mxu0 0.0
        %3079 = vmatprep.subr.mxu0 0.0
        %3080 = vmatpush1.msra.mxu0 0.0
        %3081 = vmatprep.subr.mxu0 0.0
        %3082 = vmatpush1.msra.mxu0 0.0
        %3083 = vmatprep.subr.mxu0 0.0
        %3084 = vmatpush1.msra.mxu0 0.0
        %3085 = vmatprep.subr.mxu0 %v2966
        %3086 = vmatpush1.msra.mxu0 %v2963
        %3087 = vmatprep.subr.mxu0 %v2864
        %3088 = vmatpush1.msra.mxu0 %v2863
        %3089 = vmatprep.subr.mxu0 0.0
        %3090 = vmatpush2.msra.mxu0 0.0
        %3091 = vmatprep.subr.mxu0 0.0
        %3092 = vmatpush2.msra.mxu0 0.0
        %3093 = vmatprep.subr.mxu0 0.0
        %3094 = vmatpush2.msra.mxu0 0.0
        %3095 = vmatprep.subr.mxu0 0.0
        %3096 = vmatpush2.msra.mxu0 0.0
        %3097 = vmatprep.subr.mxu0 0.0
        %3098 = vmatpush2.msra.mxu0 0.0
        %3099 = vmatprep.subr.mxu0 0.0
        %3100 = vmatpush2.msra.mxu0 0.0
        %3101 = vmatprep.subr.mxu0 0.0
        %3102 = vmatpush2.msra.mxu0 0.0
        %3103 = vmatprep.subr.mxu0 0.0
        %3104 = vmatpush2.msra.mxu0 0.0
        %3105 = vmatprep.subr.mxu0 0.0
        %3106 = vmatpush2.msra.mxu0 0.0
        %3107 = vmatprep.subr.mxu0 0.0
        %3108 = vmatpush2.msra.mxu0 0.0
        %3109 = vmatprep.subr.mxu0 0.0
        %3110 = vmatpush2.msra.mxu0 0.0
        %3111 = vmatprep.subr.mxu0 0.0
        %3112 = vmatpush2.msra.mxu0 0.0
        %3113 = vmatprep.subr.mxu0 0.0
        %3114 = vmatpush2.msra.mxu0 0.0
        %3115 = vmatprep.subr.mxu0 0.0
        %3116 = vmatpush2.msra.mxu0 0.0
        %3117 = vmatprep.subr.mxu0 0.0
        %3118 = vmatpush2.msra.mxu0 0.0
        %3119 = vmatprep.subr.mxu0 0.0
        %3120 = vmatpush2.msra.mxu0 0.0
        %3121 = vmatprep.mubr.f32.mxu0 0.0
        %3122 = vmatmul.mubr.f32.gmra.mxu0 %v2951
        %v3123 = vpop.f32.mrf.mxu0
        %v3124 = vadd.f32 %v2943, %v3123
        %v3125 = vpop.f32.mrf.mxu0
        %v3126 = vadd.f32 %v2943, %v3125
        %3127 = vmatprep.mubr.f32.mxu0 0.0
        %3128 = vmatmul.mubr.f32.gmra.mxu0 %v2954
        %v3129 = vpop.f32.mrf.mxu0
        %v3130 = vadd.f32 %v2948, %v3129
        %v3131 = vpop.f32.mrf.mxu0
        %v3132 = vadd.f32 %v2948, %v3131
        %3133 = vdwg.mxu0
        %3134 = vmatprep.subr.mxu0 0.0
        %3135 = vmatpush1.msra.mxu0 0.0
        %3136 = vmatprep.subr.mxu0 0.0
        %3137 = vmatpush1.msra.mxu0 0.0
        %3138 = vmatprep.subr.mxu0 0.0
        %3139 = vmatpush1.msra.mxu0 0.0
        %3140 = vmatprep.subr.mxu0 0.0
        %3141 = vmatpush1.msra.mxu0 0.0
        %3142 = vmatprep.subr.mxu0 0.0
        %3143 = vmatpush1.msra.mxu0 0.0
        %3144 = vmatprep.subr.mxu0 0.0
        %3145 = vmatpush1.msra.mxu0 0.0
        %3146 = vmatprep.subr.mxu0 0.0
        %3147 = vmatpush1.msra.mxu0 0.0
        %3148 = vmatprep.subr.mxu0 0.0
        %3149 = vmatpush1.msra.mxu0 0.0
        %3150 = vmatprep.subr.mxu0 0.0
        %3151 = vmatpush1.msra.mxu0 0.0
        %3152 = vmatprep.subr.mxu0 0.0
        %3153 = vmatpush1.msra.mxu0 0.0
        %3154 = vmatprep.subr.mxu0 0.0
        %3155 = vmatpush1.msra.mxu0 0.0
        %3156 = vmatprep.subr.mxu0 0.0
        %3157 = vmatpush1.msra.mxu0 0.0
        %3158 = vmatprep.subr.mxu0 0.0
        %3159 = vmatpush1.msra.mxu0 0.0
        %3160 = vmatprep.subr.mxu0 0.0
        %3161 = vmatpush1.msra.mxu0 0.0
        %3162 = vmatprep.subr.mxu0 %v2972
        %3163 = vmatpush1.msra.mxu0 %v2969
        %3164 = vmatprep.subr.mxu0 %v2866
        %3165 = vmatpush1.msra.mxu0 %v2865
        %3166 = vmatprep.subr.mxu0 0.0
        %3167 = vmatpush2.msra.mxu0 0.0
        %3168 = vmatprep.subr.mxu0 0.0
        %3169 = vmatpush2.msra.mxu0 0.0
        %3170 = vmatprep.subr.mxu0 0.0
        %3171 = vmatpush2.msra.mxu0 0.0
        %3172 = vmatprep.subr.mxu0 0.0
        %3173 = vmatpush2.msra.mxu0 0.0
        %3174 = vmatprep.subr.mxu0 0.0
        %3175 = vmatpush2.msra.mxu0 0.0
        %3176 = vmatprep.subr.mxu0 0.0
        %3177 = vmatpush2.msra.mxu0 0.0
        %3178 = vmatprep.subr.mxu0 0.0
        %3179 = vmatpush2.msra.mxu0 0.0
        %3180 = vmatprep.subr.mxu0 0.0
        %3181 = vmatpush2.msra.mxu0 0.0
        %3182 = vmatprep.subr.mxu0 0.0
        %3183 = vmatpush2.msra.mxu0 0.0
        %3184 = vmatprep.subr.mxu0 0.0
        %3185 = vmatpush2.msra.mxu0 0.0
        %3186 = vmatprep.subr.mxu0 0.0
        %3187 = vmatpush2.msra.mxu0 0.0
        %3188 = vmatprep.subr.mxu0 0.0
        %3189 = vmatpush2.msra.mxu0 0.0
        %3190 = vmatprep.subr.mxu0 0.0
        %3191 = vmatpush2.msra.mxu0 0.0
        %3192 = vmatprep.subr.mxu0 0.0
        %3193 = vmatpush2.msra.mxu0 0.0
        %3194 = vmatprep.subr.mxu0 0.0
        %3195 = vmatpush2.msra.mxu0 0.0
        %3196 = vmatprep.subr.mxu0 0.0
        %3197 = vmatpush2.msra.mxu0 0.0
        %3198 = vmatprep.mubr.f32.mxu0 0.0
        %3199 = vmatmul.mubr.f32.gmra.mxu0 %v2951
        %v3200 = vpop.f32.mrf.mxu0
        %v3201 = vadd.f32 %v2943, %v3200
        %v3202 = vpop.f32.mrf.mxu0
        %v3203 = vadd.f32 %v2943, %v3202
        %3204 = vmatprep.mubr.f32.mxu0 0.0
        %3205 = vmatmul.mubr.f32.gmra.mxu0 %v2954
        %v3206 = vpop.f32.mrf.mxu0
        %v3207 = vadd.f32 %v2948, %v3206
        %v3208 = vpop.f32.mrf.mxu0
        %v3209 = vadd.f32 %v2948, %v3208
        %3210 = vdwg.mxu0
        %3211 = vmatprep.subr.mxu0 0.0
        %3212 = vmatpush1.msra.mxu0 0.0
        %3213 = vmatprep.subr.mxu0 0.0
        %3214 = vmatpush1.msra.mxu0 0.0
        %3215 = vmatprep.subr.mxu0 0.0
        %3216 = vmatpush1.msra.mxu0 0.0
        %3217 = vmatprep.subr.mxu0 0.0
        %3218 = vmatpush1.msra.mxu0 0.0
        %3219 = vmatprep.subr.mxu0 0.0
        %3220 = vmatpush1.msra.mxu0 0.0
        %3221 = vmatprep.subr.mxu0 0.0
        %3222 = vmatpush1.msra.mxu0 0.0
        %3223 = vmatprep.subr.mxu0 0.0
        %3224 = vmatpush1.msra.mxu0 0.0
        %3225 = vmatprep.subr.mxu0 0.0
        %3226 = vmatpush1.msra.mxu0 0.0
        %3227 = vmatprep.subr.mxu0 0.0
        %3228 = vmatpush1.msra.mxu0 0.0
        %3229 = vmatprep.subr.mxu0 0.0
        %3230 = vmatpush1.msra.mxu0 0.0
        %3231 = vmatprep.subr.mxu0 0.0
        %3232 = vmatpush1.msra.mxu0 0.0
        %3233 = vmatprep.subr.mxu0 0.0
        %3234 = vmatpush1.msra.mxu0 0.0
        %3235 = vmatprep.subr.mxu0 0.0
        %3236 = vmatpush1.msra.mxu0 0.0
        %3237 = vmatprep.subr.mxu0 0.0
        %3238 = vmatpush1.msra.mxu0 0.0
        %3239 = vmatprep.subr.mxu0 %v2978
        %3240 = vmatpush1.msra.mxu0 %v2975
        %3241 = vmatprep.subr.mxu0 %v2868
        %3242 = vmatpush1.msra.mxu0 %v2867
        %3243 = vmatprep.subr.mxu0 0.0
        %3244 = vmatpush2.msra.mxu0 0.0
        %3245 = vmatprep.subr.mxu0 0.0
        %3246 = vmatpush2.msra.mxu0 0.0
        %3247 = vmatprep.subr.mxu0 0.0
        %3248 = vmatpush2.msra.mxu0 0.0
        %3249 = vmatprep.subr.mxu0 0.0
        %3250 = vmatpush2.msra.mxu0 0.0
        %3251 = vmatprep.subr.mxu0 0.0
        %3252 = vmatpush2.msra.mxu0 0.0
        %3253 = vmatprep.subr.mxu0 0.0
        %3254 = vmatpush2.msra.mxu0 0.0
        %3255 = vmatprep.subr.mxu0 0.0
        %3256 = vmatpush2.msra.mxu0 0.0
        %3257 = vmatprep.subr.mxu0 0.0
        %3258 = vmatpush2.msra.mxu0 0.0
        %3259 = vmatprep.subr.mxu0 0.0
        %3260 = vmatpush2.msra.mxu0 0.0
        %3261 = vmatprep.subr.mxu0 0.0
        %3262 = vmatpush2.msra.mxu0 0.0
        %3263 = vmatprep.subr.mxu0 0.0
        %3264 = vmatpush2.msra.mxu0 0.0
        %3265 = vmatprep.subr.mxu0 0.0
        %3266 = vmatpush2.msra.mxu0 0.0
        %3267 = vmatprep.subr.mxu0 0.0
        %3268 = vmatpush2.msra.mxu0 0.0
        %3269 = vmatprep.subr.mxu0 0.0
        %3270 = vmatpush2.msra.mxu0 0.0
        %3271 = vmatprep.subr.mxu0 0.0
        %3272 = vmatpush2.msra.mxu0 0.0
        %3273 = vmatprep.subr.mxu0 0.0
        %3274 = vmatpush2.msra.mxu0 0.0
        %3275 = vmatprep.mubr.f32.mxu0 0.0
        %3276 = vmatmul.mubr.f32.gmra.mxu0 %v2951
        %v3277 = vpop.f32.mrf.mxu0
        %v3278 = vadd.f32 %v2943, %v3277
        %v3279 = vpop.f32.mrf.mxu0
        %v3280 = vadd.f32 %v2943, %v3279
        %3281 = vmatprep.mubr.f32.mxu0 0.0
        %3282 = vmatmul.mubr.f32.gmra.mxu0 %v2954
        %v3283 = vpop.f32.mrf.mxu0
        %v3284 = vadd.f32 %v2948, %v3283
        %v3285 = vpop.f32.mrf.mxu0
        %v3286 = vadd.f32 %v2948, %v3285
        %3287 = vdwg.mxu0
        %v3288 = vpack.c.bf16 %v3053, %v3047
        %v3289 = vpack.c.bf16 %v3055, %v3049
        %v3290 = vpack.c.bf16 %v3130, %v3124
        %v3291 = vpack.c.bf16 %v3132, %v3126
        %v3292 = vpack.c.bf16 %v3207, %v3201
        %v3293 = vpack.c.bf16 %v3209, %v3203
        %v3294 = vpack.c.bf16 %v3284, %v3278
        %v3295 = vpack.c.bf16 %v3286, %v3280
        %v3304 = vunpack.c.l.b16 %v3288
        %v3305 = vunpack.c.l.b16 %v3289
        %v3306 = vunpack.c.l.b16 %v3290
        %v3307 = vunpack.c.l.b16 %v3291
        %v3308 = vunpack.c.l.b16 %v3292
        %v3309 = vunpack.c.l.b16 %v3293
        %v3310 = vunpack.c.l.b16 %v3294
        %v3311 = vunpack.c.l.b16 %v3295
        %v3312 = vunpack.c.h.b16 %v3288
        %v3313 = vunpack.c.h.b16 %v3289
        %v3314 = vunpack.c.h.b16 %v3290
        %v3315 = vunpack.c.h.b16 %v3291
        %v3316 = vunpack.c.h.b16 %v3292
        %v3317 = vunpack.c.h.b16 %v3293
        %v3318 = vunpack.c.h.b16 %v3294
        %v3319 = vunpack.c.h.b16 %v3295
        %v3320 = vpack.c.b16 %v3305, %v3304
        %v3321 = vpack.c.b16 %v3307, %v3306
        %v3322 = vpack.c.b16 %v3309, %v3308
        %v3323 = vpack.c.b16 %v3311, %v3310
        %v3324 = vpack.c.b16 %v3313, %v3312
        %v3325 = vpack.c.b16 %v3315, %v3314
        %v3326 = vpack.c.b16 %v3317, %v3316
        %v3327 = vpack.c.b16 %v3319, %v3318
        %s3336 = scalar_lea.vmem %s278, 384 [#allocation5]
        %3337 = vst [vmem:[%s3336] sm:$0xff] %v3320
        %3338 = vst [vmem:[%s3336 + $0x8] sm:$0xff] %v3321
        %3339 = vst [vmem:[%s3336 + $0x10] sm:$0xff] %v3322
        %3340 = vst [vmem:[%s3336 + $0x18] sm:$0xff] %v3323
        %3341 = vst [vmem:[%s3336 + $0x20] sm:$0x11] %v3324
        %3342 = vst [vmem:[%s3336 + $0x28] sm:$0x11] %v3325
        %3343 = vst [vmem:[%s3336 + $0x30] sm:$0x11] %v3326
        %3344 = vst [vmem:[%s3336 + $0x38] sm:$0x11] %v3327
        %v3345 = vtanh.pop %v3047
        %v3346 = vtanh.pop %v3049
        %v3347 = vtanh.pop %v3124
        %v3348 = vtanh.pop %v3126
        %v3349 = vtanh.pop %v3201
        %v3350 = vtanh.pop %v3203
        %v3351 = vtanh.pop %v3278
        %v3352 = vtanh.pop %v3280
        %v3353 = vtanh.pop %v3053
        %v3354 = vtanh.pop %v3055
        %v3355 = vtanh.pop %v3130
        %v3356 = vtanh.pop %v3132
        %v3357 = vtanh.pop %v3207
        %v3358 = vtanh.pop %v3209
        %v3359 = vtanh.pop %v3284
        %v3360 = vtanh.pop %v3286
        %v3361 = vpack.c.bf16 %v3353, %v3345
        %v3362 = vpack.c.bf16 %v3354, %v3346
        %v3363 = vpack.c.bf16 %v3355, %v3347
        %v3364 = vpack.c.bf16 %v3356, %v3348
        %v3365 = vpack.c.bf16 %v3357, %v3349
        %v3366 = vpack.c.bf16 %v3358, %v3350
        %v3367 = vpack.c.bf16 %v3359, %v3351
        %v3368 = vpack.c.bf16 %v3360, %v3352
        %v3377 = vunpack.c.l.b16 %v3361
        %v3378 = vunpack.c.l.b16 %v3362
        %v3379 = vunpack.c.l.b16 %v3363
        %v3380 = vunpack.c.l.b16 %v3364
        %v3381 = vunpack.c.l.b16 %v3365
        %v3382 = vunpack.c.l.b16 %v3366
        %v3383 = vunpack.c.l.b16 %v3367
        %v3384 = vunpack.c.l.b16 %v3368
        %v3385 = vunpack.c.h.b16 %v3361
        %v3386 = vunpack.c.h.b16 %v3362
        %v3387 = vunpack.c.h.b16 %v3363
        %v3388 = vunpack.c.h.b16 %v3364
        %v3389 = vunpack.c.h.b16 %v3365
        %v3390 = vunpack.c.h.b16 %v3366
        %v3391 = vunpack.c.h.b16 %v3367
        %v3392 = vunpack.c.h.b16 %v3368
        %v3393 = vpack.c.b16 %v3378, %v3377
        %v3394 = vpack.c.b16 %v3380, %v3379
        %v3395 = vpack.c.b16 %v3382, %v3381
        %v3396 = vpack.c.b16 %v3384, %v3383
        %v3397 = vpack.c.b16 %v3386, %v3385
        %v3398 = vpack.c.b16 %v3388, %v3387
        %v3399 = vpack.c.b16 %v3390, %v3389
        %v3400 = vpack.c.b16 %v3392, %v3391
        %s3409 = scalar_lea.vmem %s278, 896 [#allocation5]
        %3410 = vst [vmem:[%s3409] sm:$0xff] %v3393
        %3411 = vst [vmem:[%s3409 + $0x8] sm:$0xff] %v3394
        %3412 = vst [vmem:[%s3409 + $0x10] sm:$0xff] %v3395
        %3413 = vst [vmem:[%s3409 + $0x18] sm:$0xff] %v3396
        %3414 = vst [vmem:[%s3409 + $0x20] sm:$0x11] %v3397
        %3415 = vst [vmem:[%s3409 + $0x28] sm:$0x11] %v3398
        %3416 = vst [vmem:[%s3409 + $0x30] sm:$0x11] %v3399
        %3417 = vst [vmem:[%s3409 + $0x38] sm:$0x11] %v3400
        %s3418 = scalar_lea.vmem %s2, 96
        %v3419 = vld [vmem:[%s3418] sm:$0xff]
        %v3420 = vld [vmem:[%s3418 + $0x8] sm:$0x3]
        %s3421 = scalar_lea.vmem %s3, 112
        %v3422 = vld [vmem:[%s3421] sm:$0xff]
        %v3423 = vld [vmem:[%s3421 + $0x8] sm:$0x3]
        %3425 = vset.pattern.permute.xlu0 0
        %3426 = vperm.xlu0 %3425, %v3422
        %v3427 = vpop.permute.xlu0 %3426
        %3430 = vset.pattern.permute.xlu0 0
        %3431 = vperm.xlu0 %3430, %v3423
        %v3432 = vpop.permute.xlu0 %3431
        %v3435 = vsel %vm528, %v3419, 0
        %v3438 = vsel %vm528, %v3420, 0
        %v3441 = vsel %vm535, %v3353, 0
        %v3444 = vsel %vm535, %v3354, 0
        %v3447 = vsel %vm535, %v3355, 0
        %v3450 = vsel %vm535, %v3356, 0
        %v3453 = vsel %vm535, %v3357, 0
        %v3456 = vsel %vm535, %v3358, 0
        %v3459 = vsel %vm535, %v3359, 0
        %v3462 = vsel %vm535, %v3360, 0
        %3464 = vmatprep.subr.mxu0 0.0
        %3465 = vmatpush1.msra.mxu0 0.0
        %3466 = vmatprep.subr.mxu0 0.0
        %3467 = vmatpush1.msra.mxu0 0.0
        %3468 = vmatprep.subr.mxu0 0.0
        %3469 = vmatpush1.msra.mxu0 0.0
        %3470 = vmatprep.subr.mxu0 0.0
        %3471 = vmatpush1.msra.mxu0 0.0
        %3472 = vmatprep.subr.mxu0 0.0
        %3473 = vmatpush1.msra.mxu0 0.0
        %3474 = vmatprep.subr.mxu0 0.0
        %3475 = vmatpush1.msra.mxu0 0.0
        %3476 = vmatprep.subr.mxu0 0.0
        %3477 = vmatpush1.msra.mxu0 0.0
        %3478 = vmatprep.subr.mxu0 0.0
        %3479 = vmatpush1.msra.mxu0 0.0
        %3480 = vmatprep.subr.mxu0 0.0
        %3481 = vmatpush1.msra.mxu0 0.0
        %3482 = vmatprep.subr.mxu0 0.0
        %3483 = vmatpush1.msra.mxu0 0.0
        %3484 = vmatprep.subr.mxu0 0.0
        %3485 = vmatpush1.msra.mxu0 0.0
        %3486 = vmatprep.subr.mxu0 0.0
        %3487 = vmatpush1.msra.mxu0 0.0
        %3488 = vmatprep.subr.mxu0 0.0
        %3489 = vmatpush1.msra.mxu0 0.0
        %3490 = vmatprep.subr.mxu0 0.0
        %3491 = vmatpush1.msra.mxu0 0.0
        %3492 = vmatprep.subr.mxu0 %v3444
        %3493 = vmatpush1.msra.mxu0 %v3441
        %3494 = vmatprep.subr.mxu0 %v3346
        %3495 = vmatpush1.msra.mxu0 %v3345
        %3496 = vmatprep.subr.mxu0 0.0
        %3497 = vmatpush2.msra.mxu0 0.0
        %3498 = vmatprep.subr.mxu0 0.0
        %3499 = vmatpush2.msra.mxu0 0.0
        %3500 = vmatprep.subr.mxu0 0.0
        %3501 = vmatpush2.msra.mxu0 0.0
        %3502 = vmatprep.subr.mxu0 0.0
        %3503 = vmatpush2.msra.mxu0 0.0
        %3504 = vmatprep.subr.mxu0 0.0
        %3505 = vmatpush2.msra.mxu0 0.0
        %3506 = vmatprep.subr.mxu0 0.0
        %3507 = vmatpush2.msra.mxu0 0.0
        %3508 = vmatprep.subr.mxu0 0.0
        %3509 = vmatpush2.msra.mxu0 0.0
        %3510 = vmatprep.subr.mxu0 0.0
        %3511 = vmatpush2.msra.mxu0 0.0
        %3512 = vmatprep.subr.mxu0 0.0
        %3513 = vmatpush2.msra.mxu0 0.0
        %3514 = vmatprep.subr.mxu0 0.0
        %3515 = vmatpush2.msra.mxu0 0.0
        %3516 = vmatprep.subr.mxu0 0.0
        %3517 = vmatpush2.msra.mxu0 0.0
        %3518 = vmatprep.subr.mxu0 0.0
        %3519 = vmatpush2.msra.mxu0 0.0
        %3520 = vmatprep.subr.mxu0 0.0
        %3521 = vmatpush2.msra.mxu0 0.0
        %3522 = vmatprep.subr.mxu0 0.0
        %3523 = vmatpush2.msra.mxu0 0.0
        %3524 = vmatprep.subr.mxu0 0.0
        %3525 = vmatpush2.msra.mxu0 0.0
        %3526 = vmatprep.subr.mxu0 0.0
        %3527 = vmatpush2.msra.mxu0 0.0
        %3528 = vmatprep.mubr.f32.mxu0 0.0
        %3529 = vmatmul.mubr.f32.gmra.mxu0 %v3435
        %v3530 = vpop.f32.mrf.mxu0
        %v3531 = vadd.f32 %v3427, %v3530
        %v3532 = vpop.f32.mrf.mxu0
        %v3533 = vadd.f32 %v3427, %v3532
        %3534 = vmatprep.mubr.f32.mxu0 0.0
        %3535 = vmatmul.mubr.f32.gmra.mxu0 %v3438
        %v3536 = vpop.f32.mrf.mxu0
        %v3537 = vadd.f32 %v3432, %v3536
        %v3538 = vpop.f32.mrf.mxu0
        %v3539 = vadd.f32 %v3432, %v3538
        %3540 = vdwg.mxu0
        %3541 = vmatprep.subr.mxu0 0.0
        %3542 = vmatpush1.msra.mxu0 0.0
        %3543 = vmatprep.subr.mxu0 0.0
        %3544 = vmatpush1.msra.mxu0 0.0
        %3545 = vmatprep.subr.mxu0 0.0
        %3546 = vmatpush1.msra.mxu0 0.0
        %3547 = vmatprep.subr.mxu0 0.0
        %3548 = vmatpush1.msra.mxu0 0.0
        %3549 = vmatprep.subr.mxu0 0.0
        %3550 = vmatpush1.msra.mxu0 0.0
        %3551 = vmatprep.subr.mxu0 0.0
        %3552 = vmatpush1.msra.mxu0 0.0
        %3553 = vmatprep.subr.mxu0 0.0
        %3554 = vmatpush1.msra.mxu0 0.0
        %3555 = vmatprep.subr.mxu0 0.0
        %3556 = vmatpush1.msra.mxu0 0.0
        %3557 = vmatprep.subr.mxu0 0.0
        %3558 = vmatpush1.msra.mxu0 0.0
        %3559 = vmatprep.subr.mxu0 0.0
        %3560 = vmatpush1.msra.mxu0 0.0
        %3561 = vmatprep.subr.mxu0 0.0
        %3562 = vmatpush1.msra.mxu0 0.0
        %3563 = vmatprep.subr.mxu0 0.0
        %3564 = vmatpush1.msra.mxu0 0.0
        %3565 = vmatprep.subr.mxu0 0.0
        %3566 = vmatpush1.msra.mxu0 0.0
        %3567 = vmatprep.subr.mxu0 0.0
        %3568 = vmatpush1.msra.mxu0 0.0
        %3569 = vmatprep.subr.mxu0 %v3450
        %3570 = vmatpush1.msra.mxu0 %v3447
        %3571 = vmatprep.subr.mxu0 %v3348
        %3572 = vmatpush1.msra.mxu0 %v3347
        %3573 = vmatprep.subr.mxu0 0.0
        %3574 = vmatpush2.msra.mxu0 0.0
        %3575 = vmatprep.subr.mxu0 0.0
        %3576 = vmatpush2.msra.mxu0 0.0
        %3577 = vmatprep.subr.mxu0 0.0
        %3578 = vmatpush2.msra.mxu0 0.0
        %3579 = vmatprep.subr.mxu0 0.0
        %3580 = vmatpush2.msra.mxu0 0.0
        %3581 = vmatprep.subr.mxu0 0.0
        %3582 = vmatpush2.msra.mxu0 0.0
        %3583 = vmatprep.subr.mxu0 0.0
        %3584 = vmatpush2.msra.mxu0 0.0
        %3585 = vmatprep.subr.mxu0 0.0
        %3586 = vmatpush2.msra.mxu0 0.0
        %3587 = vmatprep.subr.mxu0 0.0
        %3588 = vmatpush2.msra.mxu0 0.0
        %3589 = vmatprep.subr.mxu0 0.0
        %3590 = vmatpush2.msra.mxu0 0.0
        %3591 = vmatprep.subr.mxu0 0.0
        %3592 = vmatpush2.msra.mxu0 0.0
        %3593 = vmatprep.subr.mxu0 0.0
        %3594 = vmatpush2.msra.mxu0 0.0
        %3595 = vmatprep.subr.mxu0 0.0
        %3596 = vmatpush2.msra.mxu0 0.0
        %3597 = vmatprep.subr.mxu0 0.0
        %3598 = vmatpush2.msra.mxu0 0.0
        %3599 = vmatprep.subr.mxu0 0.0
        %3600 = vmatpush2.msra.mxu0 0.0
        %3601 = vmatprep.subr.mxu0 0.0
        %3602 = vmatpush2.msra.mxu0 0.0
        %3603 = vmatprep.subr.mxu0 0.0
        %3604 = vmatpush2.msra.mxu0 0.0
        %3605 = vmatprep.mubr.f32.mxu0 0.0
        %3606 = vmatmul.mubr.f32.gmra.mxu0 %v3435
        %v3607 = vpop.f32.mrf.mxu0
        %v3608 = vadd.f32 %v3427, %v3607
        %v3609 = vpop.f32.mrf.mxu0
        %v3610 = vadd.f32 %v3427, %v3609
        %3611 = vmatprep.mubr.f32.mxu0 0.0
        %3612 = vmatmul.mubr.f32.gmra.mxu0 %v3438
        %v3613 = vpop.f32.mrf.mxu0
        %v3614 = vadd.f32 %v3432, %v3613
        %v3615 = vpop.f32.mrf.mxu0
        %v3616 = vadd.f32 %v3432, %v3615
        %3617 = vdwg.mxu0
        %3618 = vmatprep.subr.mxu0 0.0
        %3619 = vmatpush1.msra.mxu0 0.0
        %3620 = vmatprep.subr.mxu0 0.0
        %3621 = vmatpush1.msra.mxu0 0.0
        %3622 = vmatprep.subr.mxu0 0.0
        %3623 = vmatpush1.msra.mxu0 0.0
        %3624 = vmatprep.subr.mxu0 0.0
        %3625 = vmatpush1.msra.mxu0 0.0
        %3626 = vmatprep.subr.mxu0 0.0
        %3627 = vmatpush1.msra.mxu0 0.0
        %3628 = vmatprep.subr.mxu0 0.0
        %3629 = vmatpush1.msra.mxu0 0.0
        %3630 = vmatprep.subr.mxu0 0.0
        %3631 = vmatpush1.msra.mxu0 0.0
        %3632 = vmatprep.subr.mxu0 0.0
        %3633 = vmatpush1.msra.mxu0 0.0
        %3634 = vmatprep.subr.mxu0 0.0
        %3635 = vmatpush1.msra.mxu0 0.0
        %3636 = vmatprep.subr.mxu0 0.0
        %3637 = vmatpush1.msra.mxu0 0.0
        %3638 = vmatprep.subr.mxu0 0.0
        %3639 = vmatpush1.msra.mxu0 0.0
        %3640 = vmatprep.subr.mxu0 0.0
        %3641 = vmatpush1.msra.mxu0 0.0
        %3642 = vmatprep.subr.mxu0 0.0
        %3643 = vmatpush1.msra.mxu0 0.0
        %3644 = vmatprep.subr.mxu0 0.0
        %3645 = vmatpush1.msra.mxu0 0.0
        %3646 = vmatprep.subr.mxu0 %v3456
        %3647 = vmatpush1.msra.mxu0 %v3453
        %3648 = vmatprep.subr.mxu0 %v3350
        %3649 = vmatpush1.msra.mxu0 %v3349
        %3650 = vmatprep.subr.mxu0 0.0
        %3651 = vmatpush2.msra.mxu0 0.0
        %3652 = vmatprep.subr.mxu0 0.0
        %3653 = vmatpush2.msra.mxu0 0.0
        %3654 = vmatprep.subr.mxu0 0.0
        %3655 = vmatpush2.msra.mxu0 0.0
        %3656 = vmatprep.subr.mxu0 0.0
        %3657 = vmatpush2.msra.mxu0 0.0
        %3658 = vmatprep.subr.mxu0 0.0
        %3659 = vmatpush2.msra.mxu0 0.0
        %3660 = vmatprep.subr.mxu0 0.0
        %3661 = vmatpush2.msra.mxu0 0.0
        %3662 = vmatprep.subr.mxu0 0.0
        %3663 = vmatpush2.msra.mxu0 0.0
        %3664 = vmatprep.subr.mxu0 0.0
        %3665 = vmatpush2.msra.mxu0 0.0
        %3666 = vmatprep.subr.mxu0 0.0
        %3667 = vmatpush2.msra.mxu0 0.0
        %3668 = vmatprep.subr.mxu0 0.0
        %3669 = vmatpush2.msra.mxu0 0.0
        %3670 = vmatprep.subr.mxu0 0.0
        %3671 = vmatpush2.msra.mxu0 0.0
        %3672 = vmatprep.subr.mxu0 0.0
        %3673 = vmatpush2.msra.mxu0 0.0
        %3674 = vmatprep.subr.mxu0 0.0
        %3675 = vmatpush2.msra.mxu0 0.0
        %3676 = vmatprep.subr.mxu0 0.0
        %3677 = vmatpush2.msra.mxu0 0.0
        %3678 = vmatprep.subr.mxu0 0.0
        %3679 = vmatpush2.msra.mxu0 0.0
        %3680 = vmatprep.subr.mxu0 0.0
        %3681 = vmatpush2.msra.mxu0 0.0
        %3682 = vmatprep.mubr.f32.mxu0 0.0
        %3683 = vmatmul.mubr.f32.gmra.mxu0 %v3435
        %v3684 = vpop.f32.mrf.mxu0
        %v3685 = vadd.f32 %v3427, %v3684
        %v3686 = vpop.f32.mrf.mxu0
        %v3687 = vadd.f32 %v3427, %v3686
        %3688 = vmatprep.mubr.f32.mxu0 0.0
        %3689 = vmatmul.mubr.f32.gmra.mxu0 %v3438
        %v3690 = vpop.f32.mrf.mxu0
        %v3691 = vadd.f32 %v3432, %v3690
        %v3692 = vpop.f32.mrf.mxu0
        %v3693 = vadd.f32 %v3432, %v3692
        %3694 = vdwg.mxu0
        %3695 = vmatprep.subr.mxu0 0.0
        %3696 = vmatpush1.msra.mxu0 0.0
        %3697 = vmatprep.subr.mxu0 0.0
        %3698 = vmatpush1.msra.mxu0 0.0
        %3699 = vmatprep.subr.mxu0 0.0
        %3700 = vmatpush1.msra.mxu0 0.0
        %3701 = vmatprep.subr.mxu0 0.0
        %3702 = vmatpush1.msra.mxu0 0.0
        %3703 = vmatprep.subr.mxu0 0.0
        %3704 = vmatpush1.msra.mxu0 0.0
        %3705 = vmatprep.subr.mxu0 0.0
        %3706 = vmatpush1.msra.mxu0 0.0
        %3707 = vmatprep.subr.mxu0 0.0
        %3708 = vmatpush1.msra.mxu0 0.0
        %3709 = vmatprep.subr.mxu0 0.0
        %3710 = vmatpush1.msra.mxu0 0.0
        %3711 = vmatprep.subr.mxu0 0.0
        %3712 = vmatpush1.msra.mxu0 0.0
        %3713 = vmatprep.subr.mxu0 0.0
        %3714 = vmatpush1.msra.mxu0 0.0
        %3715 = vmatprep.subr.mxu0 0.0
        %3716 = vmatpush1.msra.mxu0 0.0
        %3717 = vmatprep.subr.mxu0 0.0
        %3718 = vmatpush1.msra.mxu0 0.0
        %3719 = vmatprep.subr.mxu0 0.0
        %3720 = vmatpush1.msra.mxu0 0.0
        %3721 = vmatprep.subr.mxu0 0.0
        %3722 = vmatpush1.msra.mxu0 0.0
        %3723 = vmatprep.subr.mxu0 %v3462
        %3724 = vmatpush1.msra.mxu0 %v3459
        %3725 = vmatprep.subr.mxu0 %v3352
        %3726 = vmatpush1.msra.mxu0 %v3351
        %3727 = vmatprep.subr.mxu0 0.0
        %3728 = vmatpush2.msra.mxu0 0.0
        %3729 = vmatprep.subr.mxu0 0.0
        %3730 = vmatpush2.msra.mxu0 0.0
        %3731 = vmatprep.subr.mxu0 0.0
        %3732 = vmatpush2.msra.mxu0 0.0
        %3733 = vmatprep.subr.mxu0 0.0
        %3734 = vmatpush2.msra.mxu0 0.0
        %3735 = vmatprep.subr.mxu0 0.0
        %3736 = vmatpush2.msra.mxu0 0.0
        %3737 = vmatprep.subr.mxu0 0.0
        %3738 = vmatpush2.msra.mxu0 0.0
        %3739 = vmatprep.subr.mxu0 0.0
        %3740 = vmatpush2.msra.mxu0 0.0
        %3741 = vmatprep.subr.mxu0 0.0
        %3742 = vmatpush2.msra.mxu0 0.0
        %3743 = vmatprep.subr.mxu0 0.0
        %3744 = vmatpush2.msra.mxu0 0.0
        %3745 = vmatprep.subr.mxu0 0.0
        %3746 = vmatpush2.msra.mxu0 0.0
        %3747 = vmatprep.subr.mxu0 0.0
        %3748 = vmatpush2.msra.mxu0 0.0
        %3749 = vmatprep.subr.mxu0 0.0
        %3750 = vmatpush2.msra.mxu0 0.0
        %3751 = vmatprep.subr.mxu0 0.0
        %3752 = vmatpush2.msra.mxu0 0.0
        %3753 = vmatprep.subr.mxu0 0.0
        %3754 = vmatpush2.msra.mxu0 0.0
        %3755 = vmatprep.subr.mxu0 0.0
        %3756 = vmatpush2.msra.mxu0 0.0
        %3757 = vmatprep.subr.mxu0 0.0
        %3758 = vmatpush2.msra.mxu0 0.0
        %3759 = vmatprep.mubr.f32.mxu0 0.0
        %3760 = vmatmul.mubr.f32.gmra.mxu0 %v3435
        %v3761 = vpop.f32.mrf.mxu0
        %v3762 = vadd.f32 %v3427, %v3761
        %v3763 = vpop.f32.mrf.mxu0
        %v3764 = vadd.f32 %v3427, %v3763
        %3765 = vmatprep.mubr.f32.mxu0 0.0
        %3766 = vmatmul.mubr.f32.gmra.mxu0 %v3438
        %v3767 = vpop.f32.mrf.mxu0
        %v3768 = vadd.f32 %v3432, %v3767
        %v3769 = vpop.f32.mrf.mxu0
        %v3770 = vadd.f32 %v3432, %v3769
        %3771 = vdwg.mxu0
        %v3772 = vpack.c.bf16 %v3537, %v3531
        %v3773 = vpack.c.bf16 %v3539, %v3533
        %v3774 = vpack.c.bf16 %v3614, %v3608
        %v3775 = vpack.c.bf16 %v3616, %v3610
        %v3776 = vpack.c.bf16 %v3691, %v3685
        %v3777 = vpack.c.bf16 %v3693, %v3687
        %v3778 = vpack.c.bf16 %v3768, %v3762
        %v3779 = vpack.c.bf16 %v3770, %v3764
        %v3788 = vunpack.c.l.b16 %v3772
        %v3789 = vunpack.c.l.b16 %v3773
        %v3790 = vunpack.c.l.b16 %v3774
        %v3791 = vunpack.c.l.b16 %v3775
        %v3792 = vunpack.c.l.b16 %v3776
        %v3793 = vunpack.c.l.b16 %v3777
        %v3794 = vunpack.c.l.b16 %v3778
        %v3795 = vunpack.c.l.b16 %v3779
        %v3796 = vunpack.c.h.b16 %v3772
        %v3797 = vunpack.c.h.b16 %v3773
        %v3798 = vunpack.c.h.b16 %v3774
        %v3799 = vunpack.c.h.b16 %v3775
        %v3800 = vunpack.c.h.b16 %v3776
        %v3801 = vunpack.c.h.b16 %v3777
        %v3802 = vunpack.c.h.b16 %v3778
        %v3803 = vunpack.c.h.b16 %v3779
        %v3804 = vpack.c.b16 %v3789, %v3788
        %v3805 = vpack.c.b16 %v3791, %v3790
        %v3806 = vpack.c.b16 %v3793, %v3792
        %v3807 = vpack.c.b16 %v3795, %v3794
        %v3808 = vpack.c.b16 %v3797, %v3796
        %v3809 = vpack.c.b16 %v3799, %v3798
        %v3810 = vpack.c.b16 %v3801, %v3800
        %v3811 = vpack.c.b16 %v3803, %v3802
        %s3820 = scalar_lea.vmem %s278, 448 [#allocation5]
        %3821 = vst [vmem:[%s3820] sm:$0xff] %v3804
        %3822 = vst [vmem:[%s3820 + $0x8] sm:$0xff] %v3805
        %3823 = vst [vmem:[%s3820 + $0x10] sm:$0xff] %v3806
        %3824 = vst [vmem:[%s3820 + $0x18] sm:$0xff] %v3807
        %3825 = vst [vmem:[%s3820 + $0x20] sm:$0x11] %v3808
        %3826 = vst [vmem:[%s3820 + $0x28] sm:$0x11] %v3809
        %3827 = vst [vmem:[%s3820 + $0x30] sm:$0x11] %v3810
        %3828 = vst [vmem:[%s3820 + $0x38] sm:$0x11] %v3811
        %v3829 = vtanh.pop %v3531
        %v3830 = vtanh.pop %v3533
        %v3831 = vtanh.pop %v3608
        %v3832 = vtanh.pop %v3610
        %v3833 = vtanh.pop %v3685
        %v3834 = vtanh.pop %v3687
        %v3835 = vtanh.pop %v3762
        %v3836 = vtanh.pop %v3764
        %v3837 = vtanh.pop %v3537
        %v3838 = vtanh.pop %v3539
        %v3839 = vtanh.pop %v3614
        %v3840 = vtanh.pop %v3616
        %v3841 = vtanh.pop %v3691
        %v3842 = vtanh.pop %v3693
        %v3843 = vtanh.pop %v3768
        %v3844 = vtanh.pop %v3770
        %v3845 = vpack.c.bf16 %v3837, %v3829
        %v3846 = vpack.c.bf16 %v3838, %v3830
        %v3847 = vpack.c.bf16 %v3839, %v3831
        %v3848 = vpack.c.bf16 %v3840, %v3832
        %v3849 = vpack.c.bf16 %v3841, %v3833
        %v3850 = vpack.c.bf16 %v3842, %v3834
        %v3851 = vpack.c.bf16 %v3843, %v3835
        %v3852 = vpack.c.bf16 %v3844, %v3836
        %v3861 = vunpack.c.l.b16 %v3845
        %v3862 = vunpack.c.l.b16 %v3846
        %v3863 = vunpack.c.l.b16 %v3847
        %v3864 = vunpack.c.l.b16 %v3848
        %v3865 = vunpack.c.l.b16 %v3849
        %v3866 = vunpack.c.l.b16 %v3850
        %v3867 = vunpack.c.l.b16 %v3851
        %v3868 = vunpack.c.l.b16 %v3852
        %v3869 = vunpack.c.h.b16 %v3845
        %v3870 = vunpack.c.h.b16 %v3846
        %v3871 = vunpack.c.h.b16 %v3847
        %v3872 = vunpack.c.h.b16 %v3848
        %v3873 = vunpack.c.h.b16 %v3849
        %v3874 = vunpack.c.h.b16 %v3850
        %v3875 = vunpack.c.h.b16 %v3851
        %v3876 = vunpack.c.h.b16 %v3852
        %v3877 = vpack.c.b16 %v3862, %v3861
        %v3878 = vpack.c.b16 %v3864, %v3863
        %v3879 = vpack.c.b16 %v3866, %v3865
        %v3880 = vpack.c.b16 %v3868, %v3867
        %v3881 = vpack.c.b16 %v3870, %v3869
        %v3882 = vpack.c.b16 %v3872, %v3871
        %v3883 = vpack.c.b16 %v3874, %v3873
        %v3884 = vpack.c.b16 %v3876, %v3875
        %s3893 = scalar_lea.vmem %s278, 960 [#allocation5]
        %3894 = vst [vmem:[%s3893] sm:$0xff] %v3877
        %3895 = vst [vmem:[%s3893 + $0x8] sm:$0xff] %v3878
        %3896 = vst [vmem:[%s3893 + $0x10] sm:$0xff] %v3879
        %3897 = vst [vmem:[%s3893 + $0x18] sm:$0xff] %v3880
        %3898 = vst [vmem:[%s3893 + $0x20] sm:$0x11] %v3881
        %3899 = vst [vmem:[%s3893 + $0x28] sm:$0x11] %v3882
        %3900 = vst [vmem:[%s3893 + $0x30] sm:$0x11] %v3883
        %3901 = vst [vmem:[%s3893 + $0x38] sm:$0x11] %v3884
        %v3902 = vld [vmem:[%s4] sm:$0xff]
        %v3903 = vld [vmem:[%s4 + $0x8] sm:$0x3]
        %3905 = vset.pattern.permute.xlu0 0
        %3906 = vperm.xlu0 %3905, %v3902
        %v3907 = vpop.permute.xlu0 %3906
        %3910 = vset.pattern.permute.xlu0 0
        %3911 = vperm.xlu0 %3910, %v3903
        %v3912 = vpop.permute.xlu0 %3911
        %v3914 = vmul.f32 %v3907, %v3829
        %v3915 = vmul.f32 %v3907, %v3830
        %v3916 = vmul.f32 %v3907, %v3831
        %v3917 = vmul.f32 %v3907, %v3832
        %v3918 = vmul.f32 %v3907, %v3833
        %v3919 = vmul.f32 %v3907, %v3834
        %v3920 = vmul.f32 %v3907, %v3835
        %v3921 = vmul.f32 %v3907, %v3836
        %v3922 = vmul.f32 %v3912, %v3837
        %v3923 = vmul.f32 %v3912, %v3838
        %v3924 = vmul.f32 %v3912, %v3839
        %v3925 = vmul.f32 %v3912, %v3840
        %v3926 = vmul.f32 %v3912, %v3841
        %v3927 = vmul.f32 %v3912, %v3842
        %v3928 = vmul.f32 %v3912, %v3843
        %v3929 = vmul.f32 %v3912, %v3844
        %v3930 = vsel %vm535, %v3922, 0.0
        %v3931 = vadd.f32 %v3914, %v3930
        %v3932 = vrot.slane %v3931, 4
        %v3933 = vadd.f32 %v3931, %v3932
        %v3934 = vrot.slane %v3933, 2
        %v3935 = vadd.f32 %v3933, %v3934
        %v3936 = vrot.slane %v3935, 1
        %v3937 = vadd.f32 %v3935, %v3936
        %v3938 = vsel %vm535, %v3923, 0.0
        %v3939 = vadd.f32 %v3915, %v3938
        %v3940 = vrot.slane %v3939, 4
        %v3941 = vadd.f32 %v3939, %v3940
        %v3942 = vrot.slane %v3941, 2
        %v3943 = vadd.f32 %v3941, %v3942
        %v3944 = vrot.slane %v3943, 1
        %v3945 = vadd.f32 %v3943, %v3944
        %v3946 = vsel %vm535, %v3924, 0.0
        %v3947 = vadd.f32 %v3916, %v3946
        %v3948 = vrot.slane %v3947, 4
        %v3949 = vadd.f32 %v3947, %v3948
        %v3950 = vrot.slane %v3949, 2
        %v3951 = vadd.f32 %v3949, %v3950
        %v3952 = vrot.slane %v3951, 1
        %v3953 = vadd.f32 %v3951, %v3952
        %v3954 = vsel %vm535, %v3925, 0.0
        %v3955 = vadd.f32 %v3917, %v3954
        %v3956 = vrot.slane %v3955, 4
        %v3957 = vadd.f32 %v3955, %v3956
        %v3958 = vrot.slane %v3957, 2
        %v3959 = vadd.f32 %v3957, %v3958
        %v3960 = vrot.slane %v3959, 1
        %v3961 = vadd.f32 %v3959, %v3960
        %v3962 = vsel %vm535, %v3926, 0.0
        %v3963 = vadd.f32 %v3918, %v3962
        %v3964 = vrot.slane %v3963, 4
        %v3965 = vadd.f32 %v3963, %v3964
        %v3966 = vrot.slane %v3965, 2
        %v3967 = vadd.f32 %v3965, %v3966
        %v3968 = vrot.slane %v3967, 1
        %v3969 = vadd.f32 %v3967, %v3968
        %v3970 = vsel %vm535, %v3927, 0.0
        %v3971 = vadd.f32 %v3919, %v3970
        %v3972 = vrot.slane %v3971, 4
        %v3973 = vadd.f32 %v3971, %v3972
        %v3974 = vrot.slane %v3973, 2
        %v3975 = vadd.f32 %v3973, %v3974
        %v3976 = vrot.slane %v3975, 1
        %v3977 = vadd.f32 %v3975, %v3976
        %v3978 = vsel %vm535, %v3928, 0.0
        %v3979 = vadd.f32 %v3920, %v3978
        %v3980 = vrot.slane %v3979, 4
        %v3981 = vadd.f32 %v3979, %v3980
        %v3982 = vrot.slane %v3981, 2
        %v3983 = vadd.f32 %v3981, %v3982
        %v3984 = vrot.slane %v3983, 1
        %v3985 = vadd.f32 %v3983, %v3984
        %v3986 = vsel %vm535, %v3929, 0.0
        %v3987 = vadd.f32 %v3921, %v3986
        %v3988 = vrot.slane %v3987, 4
        %v3989 = vadd.f32 %v3987, %v3988
        %v3990 = vrot.slane %v3989, 2
        %v3991 = vadd.f32 %v3989, %v3990
        %v3992 = vrot.slane %v3991, 1
        %v3993 = vadd.f32 %v3991, %v3992
        %s3994 = sld [smem:[#allocation2]]
        %v3995 = vstv %s3994
        %v3996 = vadd.f32 %v3937, %v3995
        %v3997 = vadd.f32 %v3945, %v3995
        %v3998 = vadd.f32 %v3953, %v3995
        %v3999 = vadd.f32 %v3961, %v3995
        %v4000 = vadd.f32 %v3969, %v3995
        %v4001 = vadd.f32 %v3977, %v3995
        %v4002 = vadd.f32 %v3985, %v3995
        %v4003 = vadd.f32 %v3993, %v3995
        %v4012 = vcombine.low %v3996, %v3997
        %v4013 = vcombine.low %v3998, %v3999
        %v4014 = vcombine.low %v4000, %v4001
        %v4015 = vcombine.low %v4002, %v4003
        %v4017 = vunpack.c.l.s4 1966171168
        %v4018 = vunpack.c.0.s8 %v4017
        %v4019 = vlaneseq
        %v4020 = vshrl.u32 %v4019, 7
        %v4021 = vsub.s32 %v4018, %v4020
        %v4022 = vrot.slane %v4012, %v4021
        %v4024 = vunpack.c.l.s4 1966171168
        %v4025 = vunpack.c.0.s8 %v4024
        %v4026 = vlaneseq
        %v4027 = vshrl.u32 %v4026, 7
        %v4028 = vsub.s32 %v4025, %v4027
        %v4029 = vrot.slane %v4013, %v4028
        %v4031 = vunpack.c.l.s4 1966171168
        %v4032 = vunpack.c.0.s8 %v4031
        %v4033 = vlaneseq
        %v4034 = vshrl.u32 %v4033, 7
        %v4035 = vsub.s32 %v4032, %v4034
        %v4036 = vrot.slane %v4014, %v4035
        %v4038 = vunpack.c.l.s4 1966171168
        %v4039 = vunpack.c.0.s8 %v4038
        %v4040 = vlaneseq
        %v4041 = vshrl.u32 %v4040, 7
        %v4042 = vsub.s32 %v4039, %v4041
        %v4043 = vrot.slane %v4015, %v4042
        %v4044 = vcombine.low %v4022, %v4029
        %v4045 = vcombine.low %v4036, %v4043
        %v4047 = vunpack.c.l.s4 1966171168
        %v4048 = vunpack.c.0.s8 %v4047
        %v4049 = vlaneseq
        %v4050 = vshrl.u32 %v4049, 7
        %v4051 = vsub.s32 %v4048, %v4050
        %v4052 = vrot.slane %v4044, %v4051
        %v4054 = vunpack.c.l.s4 1966171168
        %v4055 = vunpack.c.0.s8 %v4054
        %v4056 = vlaneseq
        %v4057 = vshrl.u32 %v4056, 7
        %v4058 = vsub.s32 %v4055, %v4057
        %v4059 = vrot.slane %v4045, %v4058
        %v4060 = vcombine.low %v4052, %v4059
        %4062 = vst [vmem:[%s272] sm:$0xff] %v4060
        %s4063 = sand.u32 %s162, 1
        %s4064 = scalar_lea.sflag [#allocation4], %s4063
        %s4065 = sand.u32 %s162, 1
        %s4066 = smul.addr %s4065, 8
        %s4067 = scalar_lea.vmem [#allocation3], %s4066
        %s4068 = sand.u32 %s188, 1
        %s4069 = sand.u32 %s188, 1
        %s4070 = smul.addr %s4069, 1024
        %s4071 = scalar_lea.vmem [#allocation5], %s4070
        // Predicated region
        $region45: #{tpu_custom_call.1} parent=43 // pred_check
          %p4072 = pneg %p172
        $region46: #{tpu_custom_call.1} parent=43 // pred_check_branch
          %4074 = sbr.rel (%p4072) target = $region48
        $region47: #{tpu_custom_call.1} parent=43 // pred_region
          %s4075 = smul.u32 8, %s23
          %s4077 = ssub.s32 128, 128
          %4078 = vsyncadd %s4064, %s4077
          %s4079 = smul.addr %s4075, 16
          %s4080 = scalar_lea.hbm %s6, %s4079
          %s4082 = sshll.u32 %s4067, 4
          %s4083 = int_to_ptr.vmem [resolvable:$true] %s4082
          %4085 = dma.vmem_to_hbm [thread:$0]  %s4083, 128, %s4080, %s4064
        $region48: #{tpu_custom_call.1} parent=43 // pred_fallthru
          _
        // Predicated region
        $region49: #{tpu_custom_call.1} parent=43 // pred_check
          %p4086 = pneg %p198
        $region50: #{tpu_custom_call.1} parent=43 // pred_check_branch
          %4088 = sbr.rel (%p4086) target = $region52
        $region51: #{tpu_custom_call.1} parent=43 // pred_region
          %s4089 = smul.u32 8, %s23
          %s4090 = smul.addr %s4089, 4
          %s4091 = scalar_lea.vmem %s7, %s4090
          // Predicated region
          $region53: #{tpu_custom_call.1} parent=51 // pred_check
            _
          $region54: #{tpu_custom_call.1} parent=51 // pred_check_branch
            %4093 = sbr.rel (0) target = $region56
          $region55: #{tpu_custom_call.1} parent=51 // pred_region
            // Predicated region
            $region57: #{tpu_custom_call.1} parent=55 // pred_check
              _
            $region58: #{tpu_custom_call.1} parent=55 // pred_check_branch
              %4095 = sbr.rel (0) target = $region60
            $region59: #{tpu_custom_call.1} parent=55 // pred_region
              loop: start=0, step=1, limit=1
              $region61: #{tpu_custom_call.1} parent=59 // loop_pre_header
                _
              $region62: #{tpu_custom_call.1} parent=59 // loop_header
                %s4097 = sphi 0, %s4101
                %p4098 = scmp.ge.s32.totalorder %s4097, 1
                %s4102 = sphi %s4071, %s4071
                %s4103 = sphi %s4091, %s4091
              $region63: #{tpu_custom_call.1} parent=59 // loop_header_branch
                %4100 = sbr.rel (%p4098) target = $region67
              $region64: #{tpu_custom_call.1} parent=59 // loop_body
                %v4104 = vld [vmem:[%s4102] sm:$0xff]
                %4105 = vst [vmem:[%s4103] sm:$0xff] %v4104
                %v4106 = vld [vmem:[%s4102 + $0x8] sm:$0xff]
                %4107 = vst [vmem:[%s4103 + $0x8] sm:$0xff] %v4106
                %v4108 = vld [vmem:[%s4102 + $0x10] sm:$0xff]
                %4109 = vst [vmem:[%s4103 + $0x10] sm:$0xff] %v4108
                %v4110 = vld [vmem:[%s4102 + $0x18] sm:$0xff]
                %4111 = vst [vmem:[%s4103 + $0x18] sm:$0xff] %v4110
                %v4112 = vld [vmem:[%s4102 + $0x20] sm:$0xff]
                %4113 = vst [vmem:[%s4103 + $0x40] sm:$0xff] %v4112
                %v4114 = vld [vmem:[%s4102 + $0x28] sm:$0xff]
                %4115 = vst [vmem:[%s4103 + $0x48] sm:$0xff] %v4114
                %v4116 = vld [vmem:[%s4102 + $0x30] sm:$0xff]
                %4117 = vst [vmem:[%s4103 + $0x50] sm:$0xff] %v4116
                %v4118 = vld [vmem:[%s4102 + $0x38] sm:$0xff]
                %4119 = vst [vmem:[%s4103 + $0x58] sm:$0xff] %v4118
                %v4120 = vld [vmem:[%s4102 + $0x40] sm:$0xff]
                %4121 = vst [vmem:[%s4103 + $0x80] sm:$0xff] %v4120
                %v4122 = vld [vmem:[%s4102 + $0x48] sm:$0xff]
                %4123 = vst [vmem:[%s4103 + $0x88] sm:$0xff] %v4122
                %v4124 = vld [vmem:[%s4102 + $0x50] sm:$0xff]
                %4125 = vst [vmem:[%s4103 + $0x90] sm:$0xff] %v4124
                %v4126 = vld [vmem:[%s4102 + $0x58] sm:$0xff]
                %4127 = vst [vmem:[%s4103 + $0x98] sm:$0xff] %v4126
                %v4128 = vld [vmem:[%s4102 + $0x60] sm:$0xff]
                %4129 = vst [vmem:[%s4103 + $0xc0] sm:$0xff] %v4128
                %v4130 = vld [vmem:[%s4102 + $0x68] sm:$0xff]
                %4131 = vst [vmem:[%s4103 + $0xc8] sm:$0xff] %v4130
                %v4132 = vld [vmem:[%s4102 + $0x70] sm:$0xff]
                %4133 = vst [vmem:[%s4103 + $0xd0] sm:$0xff] %v4132
                %v4134 = vld [vmem:[%s4102 + $0x78] sm:$0xff]
                %4135 = vst [vmem:[%s4103 + $0xd8] sm:$0xff] %v4134
                %v4136 = vld [vmem:[%s4102 + $0x80] sm:$0xff]
                %4137 = vst [vmem:[%s4103 + $0x100] sm:$0xff] %v4136
                %v4138 = vld [vmem:[%s4102 + $0x88] sm:$0xff]
                %4139 = vst [vmem:[%s4103 + $0x108] sm:$0xff] %v4138
                %v4140 = vld [vmem:[%s4102 + $0x90] sm:$0xff]
                %4141 = vst [vmem:[%s4103 + $0x110] sm:$0xff] %v4140
                %v4142 = vld [vmem:[%s4102 + $0x98] sm:$0xff]
                %4143 = vst [vmem:[%s4103 + $0x118] sm:$0xff] %v4142
                %v4144 = vld [vmem:[%s4102 + $0xa0] sm:$0xff]
                %4145 = vst [vmem:[%s4103 + $0x140] sm:$0xff] %v4144
                %v4146 = vld [vmem:[%s4102 + $0xa8] sm:$0xff]
                %4147 = vst [vmem:[%s4103 + $0x148] sm:$0xff] %v4146
                %v4148 = vld [vmem:[%s4102 + $0xb0] sm:$0xff]
                %4149 = vst [vmem:[%s4103 + $0x150] sm:$0xff] %v4148
                %v4150 = vld [vmem:[%s4102 + $0xb8] sm:$0xff]
                %4151 = vst [vmem:[%s4103 + $0x158] sm:$0xff] %v4150
                %v4152 = vld [vmem:[%s4102 + $0xc0] sm:$0xff]
                %4153 = vst [vmem:[%s4103 + $0x180] sm:$0xff] %v4152
                %v4154 = vld [vmem:[%s4102 + $0xc8] sm:$0xff]
                %4155 = vst [vmem:[%s4103 + $0x188] sm:$0xff] %v4154
                %v4156 = vld [vmem:[%s4102 + $0xd0] sm:$0xff]
                %4157 = vst [vmem:[%s4103 + $0x190] sm:$0xff] %v4156
                %v4158 = vld [vmem:[%s4102 + $0xd8] sm:$0xff]
                %4159 = vst [vmem:[%s4103 + $0x198] sm:$0xff] %v4158
                %v4160 = vld [vmem:[%s4102 + $0xe0] sm:$0xff]
                %4161 = vst [vmem:[%s4103 + $0x1c0] sm:$0xff] %v4160
                %v4162 = vld [vmem:[%s4102 + $0xe8] sm:$0xff]
                %4163 = vst [vmem:[%s4103 + $0x1c8] sm:$0xff] %v4162
                %v4164 = vld [vmem:[%s4102 + $0xf0] sm:$0xff]
                %4165 = vst [vmem:[%s4103 + $0x1d0] sm:$0xff] %v4164
                %v4166 = vld [vmem:[%s4102 + $0xf8] sm:$0xff]
                %4167 = vst [vmem:[%s4103 + $0x1d8] sm:$0xff] %v4166
                %v4168 = vld [vmem:[%s4102 + $0x100] sm:$0xff]
                %4169 = vst [vmem:[%s4103 + $0x200] sm:$0xff] %v4168
                %v4170 = vld [vmem:[%s4102 + $0x108] sm:$0xff]
                %4171 = vst [vmem:[%s4103 + $0x208] sm:$0xff] %v4170
                %v4172 = vld [vmem:[%s4102 + $0x110] sm:$0xff]
                %4173 = vst [vmem:[%s4103 + $0x210] sm:$0xff] %v4172
                %v4174 = vld [vmem:[%s4102 + $0x118] sm:$0xff]
                %4175 = vst [vmem:[%s4103 + $0x218] sm:$0xff] %v4174
                %v4176 = vld [vmem:[%s4102 + $0x120] sm:$0xff]
                %4177 = vst [vmem:[%s4103 + $0x240] sm:$0xff] %v4176
                %v4178 = vld [vmem:[%s4102 + $0x128] sm:$0xff]
                %4179 = vst [vmem:[%s4103 + $0x248] sm:$0xff] %v4178
                %v4180 = vld [vmem:[%s4102 + $0x130] sm:$0xff]
                %4181 = vst [vmem:[%s4103 + $0x250] sm:$0xff] %v4180
                %v4182 = vld [vmem:[%s4102 + $0x138] sm:$0xff]
                %4183 = vst [vmem:[%s4103 + $0x258] sm:$0xff] %v4182
                %v4184 = vld [vmem:[%s4102 + $0x140] sm:$0xff]
                %4185 = vst [vmem:[%s4103 + $0x280] sm:$0xff] %v4184
                %v4186 = vld [vmem:[%s4102 + $0x148] sm:$0xff]
                %4187 = vst [vmem:[%s4103 + $0x288] sm:$0xff] %v4186
                %v4188 = vld [vmem:[%s4102 + $0x150] sm:$0xff]
                %4189 = vst [vmem:[%s4103 + $0x290] sm:$0xff] %v4188
                %v4190 = vld [vmem:[%s4102 + $0x158] sm:$0xff]
                %4191 = vst [vmem:[%s4103 + $0x298] sm:$0xff] %v4190
                %v4192 = vld [vmem:[%s4102 + $0x160] sm:$0xff]
                %4193 = vst [vmem:[%s4103 + $0x2c0] sm:$0xff] %v4192
                %v4194 = vld [vmem:[%s4102 + $0x168] sm:$0xff]
                %4195 = vst [vmem:[%s4103 + $0x2c8] sm:$0xff] %v4194
                %v4196 = vld [vmem:[%s4102 + $0x170] sm:$0xff]
                %4197 = vst [vmem:[%s4103 + $0x2d0] sm:$0xff] %v4196
                %v4198 = vld [vmem:[%s4102 + $0x178] sm:$0xff]
                %4199 = vst [vmem:[%s4103 + $0x2d8] sm:$0xff] %v4198
                %v4200 = vld [vmem:[%s4102 + $0x180] sm:$0xff]
                %4201 = vst [vmem:[%s4103 + $0x300] sm:$0xff] %v4200
                %v4202 = vld [vmem:[%s4102 + $0x188] sm:$0xff]
                %4203 = vst [vmem:[%s4103 + $0x308] sm:$0xff] %v4202
                %v4204 = vld [vmem:[%s4102 + $0x190] sm:$0xff]
                %4205 = vst [vmem:[%s4103 + $0x310] sm:$0xff] %v4204
                %v4206 = vld [vmem:[%s4102 + $0x198] sm:$0xff]
                %4207 = vst [vmem:[%s4103 + $0x318] sm:$0xff] %v4206
                %v4208 = vld [vmem:[%s4102 + $0x1a0] sm:$0xff]
                %4209 = vst [vmem:[%s4103 + $0x340] sm:$0xff] %v4208
                %v4210 = vld [vmem:[%s4102 + $0x1a8] sm:$0xff]
                %4211 = vst [vmem:[%s4103 + $0x348] sm:$0xff] %v4210
                %v4212 = vld [vmem:[%s4102 + $0x1b0] sm:$0xff]
                %4213 = vst [vmem:[%s4103 + $0x350] sm:$0xff] %v4212
                %v4214 = vld [vmem:[%s4102 + $0x1b8] sm:$0xff]
                %4215 = vst [vmem:[%s4103 + $0x358] sm:$0xff] %v4214
                %v4216 = vld [vmem:[%s4102 + $0x1c0] sm:$0xff]
                %4217 = vst [vmem:[%s4103 + $0x380] sm:$0xff] %v4216
                %v4218 = vld [vmem:[%s4102 + $0x1c8] sm:$0xff]
                %4219 = vst [vmem:[%s4103 + $0x388] sm:$0xff] %v4218
                %v4220 = vld [vmem:[%s4102 + $0x1d0] sm:$0xff]
                %4221 = vst [vmem:[%s4103 + $0x390] sm:$0xff] %v4220
                %v4222 = vld [vmem:[%s4102 + $0x1d8] sm:$0xff]
                %4223 = vst [vmem:[%s4103 + $0x398] sm:$0xff] %v4222
                %v4224 = vld [vmem:[%s4102 + $0x1e0] sm:$0xff]
                %4225 = vst [vmem:[%s4103 + $0x3c0] sm:$0xff] %v4224
                %v4226 = vld [vmem:[%s4102 + $0x1e8] sm:$0xff]
                %4227 = vst [vmem:[%s4103 + $0x3c8] sm:$0xff] %v4226
                %v4228 = vld [vmem:[%s4102 + $0x1f0] sm:$0xff]
                %4229 = vst [vmem:[%s4103 + $0x3d0] sm:$0xff] %v4228
                %v4230 = vld [vmem:[%s4102 + $0x1f8] sm:$0xff]
                %4231 = vst [vmem:[%s4103 + $0x3d8] sm:$0xff] %v4230
                %v4232 = vld [vmem:[%s4102 + $0x200] sm:$0xff]
                %4233 = vst [vmem:[%s4103 + $0x400] sm:$0xff] %v4232
                %v4234 = vld [vmem:[%s4102 + $0x208] sm:$0xff]
                %4235 = vst [vmem:[%s4103 + $0x408] sm:$0xff] %v4234
                %v4236 = vld [vmem:[%s4102 + $0x210] sm:$0xff]
                %4237 = vst [vmem:[%s4103 + $0x410] sm:$0xff] %v4236
                %v4238 = vld [vmem:[%s4102 + $0x218] sm:$0xff]
                %4239 = vst [vmem:[%s4103 + $0x418] sm:$0xff] %v4238
                %v4240 = vld [vmem:[%s4102 + $0x220] sm:$0xff]
                %4241 = vst [vmem:[%s4103 + $0x440] sm:$0xff] %v4240
                %v4242 = vld [vmem:[%s4102 + $0x228] sm:$0xff]
                %4243 = vst [vmem:[%s4103 + $0x448] sm:$0xff] %v4242
                %v4244 = vld [vmem:[%s4102 + $0x230] sm:$0xff]
                %4245 = vst [vmem:[%s4103 + $0x450] sm:$0xff] %v4244
                %v4246 = vld [vmem:[%s4102 + $0x238] sm:$0xff]
                %4247 = vst [vmem:[%s4103 + $0x458] sm:$0xff] %v4246
                %v4248 = vld [vmem:[%s4102 + $0x240] sm:$0xff]
                %4249 = vst [vmem:[%s4103 + $0x480] sm:$0xff] %v4248
                %v4250 = vld [vmem:[%s4102 + $0x248] sm:$0xff]
                %4251 = vst [vmem:[%s4103 + $0x488] sm:$0xff] %v4250
                %v4252 = vld [vmem:[%s4102 + $0x250] sm:$0xff]
                %4253 = vst [vmem:[%s4103 + $0x490] sm:$0xff] %v4252
                %v4254 = vld [vmem:[%s4102 + $0x258] sm:$0xff]
                %4255 = vst [vmem:[%s4103 + $0x498] sm:$0xff] %v4254
                %v4256 = vld [vmem:[%s4102 + $0x260] sm:$0xff]
                %4257 = vst [vmem:[%s4103 + $0x4c0] sm:$0xff] %v4256
                %v4258 = vld [vmem:[%s4102 + $0x268] sm:$0xff]
                %4259 = vst [vmem:[%s4103 + $0x4c8] sm:$0xff] %v4258
                %v4260 = vld [vmem:[%s4102 + $0x270] sm:$0xff]
                %4261 = vst [vmem:[%s4103 + $0x4d0] sm:$0xff] %v4260
                %v4262 = vld [vmem:[%s4102 + $0x278] sm:$0xff]
                %4263 = vst [vmem:[%s4103 + $0x4d8] sm:$0xff] %v4262
                %v4264 = vld [vmem:[%s4102 + $0x280] sm:$0xff]
                %4265 = vst [vmem:[%s4103 + $0x500] sm:$0xff] %v4264
                %v4266 = vld [vmem:[%s4102 + $0x288] sm:$0xff]
                %4267 = vst [vmem:[%s4103 + $0x508] sm:$0xff] %v4266
                %v4268 = vld [vmem:[%s4102 + $0x290] sm:$0xff]
                %4269 = vst [vmem:[%s4103 + $0x510] sm:$0xff] %v4268
                %v4270 = vld [vmem:[%s4102 + $0x298] sm:$0xff]
                %4271 = vst [vmem:[%s4103 + $0x518] sm:$0xff] %v4270
                %v4272 = vld [vmem:[%s4102 + $0x2a0] sm:$0xff]
                %4273 = vst [vmem:[%s4103 + $0x540] sm:$0xff] %v4272
                %v4274 = vld [vmem:[%s4102 + $0x2a8] sm:$0xff]
                %4275 = vst [vmem:[%s4103 + $0x548] sm:$0xff] %v4274
                %v4276 = vld [vmem:[%s4102 + $0x2b0] sm:$0xff]
                %4277 = vst [vmem:[%s4103 + $0x550] sm:$0xff] %v4276
                %v4278 = vld [vmem:[%s4102 + $0x2b8] sm:$0xff]
                %4279 = vst [vmem:[%s4103 + $0x558] sm:$0xff] %v4278
                %v4280 = vld [vmem:[%s4102 + $0x2c0] sm:$0xff]
                %4281 = vst [vmem:[%s4103 + $0x580] sm:$0xff] %v4280
                %v4282 = vld [vmem:[%s4102 + $0x2c8] sm:$0xff]
                %4283 = vst [vmem:[%s4103 + $0x588] sm:$0xff] %v4282
                %v4284 = vld [vmem:[%s4102 + $0x2d0] sm:$0xff]
                %4285 = vst [vmem:[%s4103 + $0x590] sm:$0xff] %v4284
                %v4286 = vld [vmem:[%s4102 + $0x2d8] sm:$0xff]
                %4287 = vst [vmem:[%s4103 + $0x598] sm:$0xff] %v4286
                %v4288 = vld [vmem:[%s4102 + $0x2e0] sm:$0xff]
                %4289 = vst [vmem:[%s4103 + $0x5c0] sm:$0xff] %v4288
                %v4290 = vld [vmem:[%s4102 + $0x2e8] sm:$0xff]
                %4291 = vst [vmem:[%s4103 + $0x5c8] sm:$0xff] %v4290
                %v4292 = vld [vmem:[%s4102 + $0x2f0] sm:$0xff]
                %4293 = vst [vmem:[%s4103 + $0x5d0] sm:$0xff] %v4292
                %v4294 = vld [vmem:[%s4102 + $0x2f8] sm:$0xff]
                %4295 = vst [vmem:[%s4103 + $0x5d8] sm:$0xff] %v4294
                %v4296 = vld [vmem:[%s4102 + $0x300] sm:$0xff]
                %4297 = vst [vmem:[%s4103 + $0x600] sm:$0xff] %v4296
                %v4298 = vld [vmem:[%s4102 + $0x308] sm:$0xff]
                %4299 = vst [vmem:[%s4103 + $0x608] sm:$0xff] %v4298
                %v4300 = vld [vmem:[%s4102 + $0x310] sm:$0xff]
                %4301 = vst [vmem:[%s4103 + $0x610] sm:$0xff] %v4300
                %v4302 = vld [vmem:[%s4102 + $0x318] sm:$0xff]
                %4303 = vst [vmem:[%s4103 + $0x618] sm:$0xff] %v4302
                %v4304 = vld [vmem:[%s4102 + $0x320] sm:$0xff]
                %4305 = vst [vmem:[%s4103 + $0x640] sm:$0xff] %v4304
                %v4306 = vld [vmem:[%s4102 + $0x328] sm:$0xff]
                %4307 = vst [vmem:[%s4103 + $0x648] sm:$0xff] %v4306
                %v4308 = vld [vmem:[%s4102 + $0x330] sm:$0xff]
                %4309 = vst [vmem:[%s4103 + $0x650] sm:$0xff] %v4308
                %v4310 = vld [vmem:[%s4102 + $0x338] sm:$0xff]
                %4311 = vst [vmem:[%s4103 + $0x658] sm:$0xff] %v4310
                %v4312 = vld [vmem:[%s4102 + $0x340] sm:$0xff]
                %4313 = vst [vmem:[%s4103 + $0x680] sm:$0xff] %v4312
                %v4314 = vld [vmem:[%s4102 + $0x348] sm:$0xff]
                %4315 = vst [vmem:[%s4103 + $0x688] sm:$0xff] %v4314
                %v4316 = vld [vmem:[%s4102 + $0x350] sm:$0xff]
                %4317 = vst [vmem:[%s4103 + $0x690] sm:$0xff] %v4316
                %v4318 = vld [vmem:[%s4102 + $0x358] sm:$0xff]
                %4319 = vst [vmem:[%s4103 + $0x698] sm:$0xff] %v4318
                %v4320 = vld [vmem:[%s4102 + $0x360] sm:$0xff]
                %4321 = vst [vmem:[%s4103 + $0x6c0] sm:$0xff] %v4320
                %v4322 = vld [vmem:[%s4102 + $0x368] sm:$0xff]
                %4323 = vst [vmem:[%s4103 + $0x6c8] sm:$0xff] %v4322
                %v4324 = vld [vmem:[%s4102 + $0x370] sm:$0xff]
                %4325 = vst [vmem:[%s4103 + $0x6d0] sm:$0xff] %v4324
                %v4326 = vld [vmem:[%s4102 + $0x378] sm:$0xff]
                %4327 = vst [vmem:[%s4103 + $0x6d8] sm:$0xff] %v4326
                %v4328 = vld [vmem:[%s4102 + $0x380] sm:$0xff]
                %4329 = vst [vmem:[%s4103 + $0x700] sm:$0xff] %v4328
                %v4330 = vld [vmem:[%s4102 + $0x388] sm:$0xff]
                %4331 = vst [vmem:[%s4103 + $0x708] sm:$0xff] %v4330
                %v4332 = vld [vmem:[%s4102 + $0x390] sm:$0xff]
                %4333 = vst [vmem:[%s4103 + $0x710] sm:$0xff] %v4332
                %v4334 = vld [vmem:[%s4102 + $0x398] sm:$0xff]
                %4335 = vst [vmem:[%s4103 + $0x718] sm:$0xff] %v4334
                %v4336 = vld [vmem:[%s4102 + $0x3a0] sm:$0xff]
                %4337 = vst [vmem:[%s4103 + $0x740] sm:$0xff] %v4336
                %v4338 = vld [vmem:[%s4102 + $0x3a8] sm:$0xff]
                %4339 = vst [vmem:[%s4103 + $0x748] sm:$0xff] %v4338
                %v4340 = vld [vmem:[%s4102 + $0x3b0] sm:$0xff]
                %4341 = vst [vmem:[%s4103 + $0x750] sm:$0xff] %v4340
                %v4342 = vld [vmem:[%s4102 + $0x3b8] sm:$0xff]
                %4343 = vst [vmem:[%s4103 + $0x758] sm:$0xff] %v4342
                %v4344 = vld [vmem:[%s4102 + $0x3c0] sm:$0xff]
                %4345 = vst [vmem:[%s4103 + $0x780] sm:$0xff] %v4344
                %v4346 = vld [vmem:[%s4102 + $0x3c8] sm:$0xff]
                %4347 = vst [vmem:[%s4103 + $0x788] sm:$0xff] %v4346
                %v4348 = vld [vmem:[%s4102 + $0x3d0] sm:$0xff]
                %4349 = vst [vmem:[%s4103 + $0x790] sm:$0xff] %v4348
                %v4350 = vld [vmem:[%s4102 + $0x3d8] sm:$0xff]
                %4351 = vst [vmem:[%s4103 + $0x798] sm:$0xff] %v4350
                %v4352 = vld [vmem:[%s4102 + $0x3e0] sm:$0xff]
                %4353 = vst [vmem:[%s4103 + $0x7c0] sm:$0xff] %v4352
                %v4354 = vld [vmem:[%s4102 + $0x3e8] sm:$0xff]
                %4355 = vst [vmem:[%s4103 + $0x7c8] sm:$0xff] %v4354
                %v4356 = vld [vmem:[%s4102 + $0x3f0] sm:$0xff]
                %4357 = vst [vmem:[%s4103 + $0x7d0] sm:$0xff] %v4356
                %v4358 = vld [vmem:[%s4102 + $0x3f8] sm:$0xff]
                %4359 = vst [vmem:[%s4103 + $0x7d8] sm:$0xff] %v4358
              $region65: #{tpu_custom_call.1} parent=59 // loop_footer
                %s4101 = sadd.s32 1, %s4097
              $region66: #{tpu_custom_call.1} parent=59 // loop_footer_branch
                %4096 = sbr.rel target = $region62
              $region67: #{tpu_custom_call.1} parent=59 // loop_exit
                _
            $region60: #{tpu_custom_call.1} parent=55 // pred_fallthru
              _
            // Predicated region
            $region68: #{tpu_custom_call.1} parent=55 // pred_check
              _
            $region69: #{tpu_custom_call.1} parent=55 // pred_check_branch
              %4361 = sbr.rel target = $region71
            $region70: #{tpu_custom_call.1} parent=55 // pred_region
              _
            $region71: #{tpu_custom_call.1} parent=55 // pred_fallthru
              _
          $region56: #{tpu_custom_call.1} parent=51 // pred_fallthru
            _
          %4362 = vnop
        $region52: #{tpu_custom_call.1} parent=43 // pred_fallthru
          _
      $region44: #{tpu_custom_call.1} parent=5 // pred_fallthru
        _
      %p4363 = scmp.le.s32.totalorder 2, %s18
      // Predicated region
      $region72: #{tpu_custom_call.1} parent=5 // pred_check
        %p4364 = pneg %p4363
      $region73: #{tpu_custom_call.1} parent=5 // pred_check_branch
        %4366 = sbr.rel (%p4364) target = $region75
      $region74: #{tpu_custom_call.1} parent=5 // pred_region
        %s4367 = ssub.s32 %s18, 2
        // Predicated region
        $region76: #{tpu_custom_call.1} parent=74 // pred_check
          %p4368 = pneg %p178
        $region77: #{tpu_custom_call.1} parent=74 // pred_check_branch
          %4370 = sbr.rel (%p4368) target = $region79
        $region78: #{tpu_custom_call.1} parent=74 // pred_region
          %s4371 = sand.u32 %s163, 1
          %s4372 = scalar_lea.sflag [#allocation4], %s4371
          %s4373 = sand.u32 %s163, 1
          %s4374 = smul.addr %s4373, 8
          %s4375 = scalar_lea.vmem [#allocation3], %s4374
          %4376 = dma.done %s4372, 128
        $region79: #{tpu_custom_call.1} parent=74 // pred_fallthru
          _
        // Predicated region
        $region80: #{tpu_custom_call.1} parent=74 // pred_check
          %p4377 = pneg %p204
        $region81: #{tpu_custom_call.1} parent=74 // pred_check_branch
          %4379 = sbr.rel (%p4377) target = $region83
        $region82: #{tpu_custom_call.1} parent=74 // pred_region
          %s4380 = sand.u32 %s189, 1
          %s4381 = sand.u32 %s189, 1
          %s4382 = smul.addr %s4381, 1024
          %s4383 = scalar_lea.vmem [#allocation5], %s4382
        $region83: #{tpu_custom_call.1} parent=74 // pred_fallthru
          _
      $region75: #{tpu_custom_call.1} parent=5 // pred_fallthru
        _
    $region6: #{tpu_custom_call.1} parent=1 // loop_footer
      %s22 = sadd.s32 1, %s18
    $region7: #{tpu_custom_call.1} parent=1 // loop_footer_branch
      %17 = sbr.rel target = $region3
    $region8: #{tpu_custom_call.1} parent=1 // loop_exit
      _
    %4384 = vsyncpa [#allocation4], 1
    %s4385 = scalar_lea.sflag [#allocation4], 1
    %4386 = vsyncpa %s4385, 1

</llo_original>
